<compile_context>
chip_gen: v6e
topology: v6e:2x2x1
jax: 0.10.0
libtpu: 0.0.40
codegen_flags: <defaults>
</compile_context>

<pallas_src>
import functools
import math

import jax
import jax.numpy as jnp
from jax.experimental import pallas as pl
from jax.experimental.pallas import tpu as pltpu


def _round_up(x, m):
    return ((x + m - 1) // m) * m


# ---------------------------------------------------------------------------
# Fused kernel: multi-layer LSTM recurrence (grid step 0 only, hiddens kept in
# VMEM scratch) + vocab-tiled output projection (every grid step).
# ---------------------------------------------------------------------------
def make_decoder_kernel(num_layers, L, H_pad):
    """Ref order: x_ref, [w_ih_l, w_hh_l, b_l]*num_layers, w_out_ref, b_out_ref,
    out_ref, hid_scratch."""

    def kernel(x_ref, *refs):
        layer_refs = refs[: 3 * num_layers]
        w_out_ref = refs[3 * num_layers]
        b_out_ref = refs[3 * num_layers + 1]
        out_ref = refs[3 * num_layers + 2]
        hid_ref = refs[3 * num_layers + 3]  # VMEM scratch (L, H_pad) f32

        # ---- recurrence: only once, on the first vocab tile ----
        @pl.when(pl.program_id(0) == 0)
        def _run_recurrence():
            inp_all = x_ref[...]  # (L, in_0) f32, layer-0 input

            for l in range(num_layers):
                w_ih = layer_refs[3 * l][...]      # (in_l, 4*H_pad)
                w_hh = layer_refs[3 * l + 1][...]  # (H_pad, 4*H_pad)
                b = layer_refs[3 * l + 2][...]     # (1, 4*H_pad)

                # Input projection + bias hoisted out of the time loop:
                # ONE (L, in) @ (in, 4*H_pad) MXU matmul per layer.
                gates_in = (
                    jnp.dot(inp_all, w_ih, preferred_element_type=jnp.float32) + b
                )  # (L, 4*H_pad)

                # Register-carried recurrent state; time loop unrolled (L static, small).
                h = jnp.zeros((1, H_pad), jnp.float32)
                c = jnp.zeros((1, H_pad), jnp.float32)
                for t in range(L):
                    gates = gates_in[t:t + 1, :] + jnp.dot(
                        h, w_hh, preferred_element_type=jnp.float32
                    )  # (1, 4*H_pad)

                    # H_pad % 128 == 0 -> every gate slice is whole vregs, aligned
                    # with h/c (no lane rotates); only the needed EUP lanes issued.
                    i_g = jax.nn.sigmoid(gates[:, 0 * H_pad:1 * H_pad])
                    f_g = jax.nn.sigmoid(gates[:, 1 * H_pad:2 * H_pad])
                    g_g = jnp.tanh(gates[:, 2 * H_pad:3 * H_pad])
                    o_g = jax.nn.sigmoid(gates[:, 3 * H_pad:4 * H_pad])

                    c = f_g * c + i_g * g_g
                    h = o_g * jnp.tanh(c)

                    # Off-critical-path row store; keeps vreg pressure O(1) in L.
                    hid_ref[pl.ds(t, 1), :] = h

                inp_all = hid_ref[...]  # dense (L, H_pad) slab feeds the next layer

        # ---- vocab projection for this tile (bf16 weight stream, f32 accumulate) ----
        hid = hid_ref[...].astype(jnp.bfloat16)  # (L, H_pad)
        out_ref[...] = (
            jnp.dot(hid, w_out_ref[...], preferred_element_type=jnp.float32)
            + b_out_ref[...]
        )

    return kernel


# ---------------------------------------------------------------------------
# One-time TPU layout transform of the PyTorch-shaped parameters.
# ---------------------------------------------------------------------------
def prepare_params(params, tile_v_cap=2048):
    """Pad H to a multiple of 128 (lane-aligned gates), pad V to a multiple of the
    vocab tile (lane-dense stores), cast the projection weight to bf16."""
    embed_w = params["embed"]                    # (V, E)
    V, E = embed_w.shape
    H = params["lstm"][0]["w_hh"].shape[0]
    H_pad = _round_up(H, 128)
    tile_v = min(tile_v_cap, _round_up(V, 128))
    V_pad = _round_up(V, tile_v)

    def pad_gates(w, rows_pad):
        # (rows, 4*H) -> (rows_pad, 4*H_pad); gate chunk g placed at column g*H_pad.
        rows = w.shape[0]
        out = jnp.zeros((rows_pad, 4 * H_pad), jnp.float32)
        for g in range(4):
            out = out.at[:rows, g * H_pad: g * H_pad + H].set(
                w[:, g * H:(g + 1) * H]
            )
        return out

    lstm = []
    for l, lp in enumerate(params["lstm"]):
        in_pad = E if l == 0 else H_pad
        lstm.append({
            "w_ih": pad_gates(lp["w_ih"], in_pad),
            "w_hh": pad_gates(lp["w_hh"], H_pad),
            "b": pad_gates(lp["b"], 1),
        })

    w_out = jnp.zeros((H_pad, V_pad), jnp.float32).at[:H, :V].set(params["w_out"])
    b_out = jnp.zeros((1, V_pad), jnp.float32).at[:, :V].set(params["b_out"])

    return {
        "embed": embed_w,
        "lstm": lstm,
        "w_out": w_out.astype(jnp.bfloat16),   # bf16 halves streamed projection bytes
        "b_out": b_out,
    }


# ---------------------------------------------------------------------------
# JAX wrapper (jitted): embedding gather + sequence assembly, fused Pallas kernel.
# ---------------------------------------------------------------------------
@functools.partial(jax.jit, static_argnames=("length",))
def decoder_rnn_forward(features, captions, length, params):
    assert isinstance(length, int), "length must be a static Python int"

    embed_w = params["embed"]                 # (V, E)
    V, E = embed_w.shape
    w_out = params["w_out"]                   # (H_pad, V_pad) bf16
    H_pad, V_pad = w_out.shape
    num_layers = len(params["lstm"])
    tile_v = min(2048, V_pad)
    assert V_pad % tile_v == 0
    n_tiles = V_pad // tile_v

    T = captions.shape[1]
    assert 1 <= length <= T + 1, "length must be <= caption length + 1"
    L = length

    # pack_padded_sequence with batch 1 degenerates to static truncation.
    emb = jnp.take(embed_w, captions, axis=0)                       # (1, T, E)
    seq = jnp.concatenate([features[None, None, :], emb], axis=1)   # (1, T+1, E)
    x = seq[0, :L, :].astype(jnp.float32)                           # (L, E)

    # ---- argument / BlockSpec assembly ----
    args = [x]
    specs = [pl.BlockSpec((L, E), lambda j: (0, 0))]                # resident
    for lp in params["lstm"]:
        args += [lp["w_ih"], lp["w_hh"], lp["b"]]
        specs += [
            pl.BlockSpec(lp["w_ih"].shape, lambda j: (0, 0)),       # resident
            pl.BlockSpec(lp["w_hh"].shape, lambda j: (0, 0)),       # resident
            pl.BlockSpec(lp["b"].shape, lambda j: (0, 0)),          # resident
        ]
    args += [params["w_out"], params["b_out"]]
    specs += [
        pl.BlockSpec((H_pad, tile_v), lambda j: (0, j)),            # weight tile streams
        pl.BlockSpec((1, tile_v), lambda j: (0, j)),                # bias tile streams
    ]

    # VMEM budget (resident LSTM state/weights + double-buffered projection tiles).
    resident = 4 * (L * E + L * H_pad)
    for lp in params["lstm"]:
        resident += 4 * (lp["w_ih"].size + lp["w_hh"].size + lp["b"].size)
    streamed = 2 * (2 * H_pad * tile_v + 4 * tile_v + 4 * L * tile_v)
    vmem_limit = int(min(max(2 * (resident + streamed), 32 << 20), 64 << 20))

    out_pad = pl.pallas_call(
        make_decoder_kernel(num_layers, L, H_pad),
        out_shape=jax.ShapeDtypeStruct((L, V_pad), jnp.float32),
        grid=(n_tiles,),
        in_specs=specs,
        out_specs=pl.BlockSpec((L, tile_v), lambda j: (0, j)),
        scratch_shapes=[pltpu.VMEM((L, H_pad), jnp.float32)],
        compiler_params=pltpu.CompilerParams(
            dimension_semantics=("arbitrary",),   # recurrence at step 0, shared scratch
            vmem_limit_bytes=vmem_limit,
        ),
    )(*args)

    return out_pad[:, :V]                          # drop vocab padding


# ---------------------------------------------------------------------------
# Parameter init matching the PyTorch module's shapes / init scheme.
# ---------------------------------------------------------------------------
def init_params(key, embed_size, hidden_size, vocab_size, num_layers):
    keys = jax.random.split(key, 2 + 4 * num_layers)
    params = {}
    # nn.Embedding(vocab, embed).weight.uniform_(-0.1, 0.1)
    params["embed"] = jax.random.uniform(
        keys[0], (vocab_size, embed_size), jnp.float32, -0.1, 0.1
    )
    # nn.LSTM default init: U(-1/sqrt(H), 1/sqrt(H)); stored transposed [in, 4H].
    k = 1.0 / math.sqrt(hidden_size)
    lstm = []
    for l in range(num_layers):
        in_sz = embed_size if l == 0 else hidden_size
        kw = keys[2 + 4 * l: 2 + 4 * (l + 1)]
        w_ih = jax.random.uniform(kw[0], (in_sz, 4 * hidden_size), jnp.float32, -k, k)
        w_hh = jax.random.uniform(kw[1], (hidden_size, 4 * hidden_size), jnp.float32, -k, k)
        b_ih = jax.random.uniform(kw[2], (1, 4 * hidden_size), jnp.float32, -k, k)
        b_hh = jax.random.uniform(kw[3], (1, 4 * hidden_size), jnp.float32, -k, k)
        lstm.append({"w_ih": w_ih, "w_hh": w_hh, "b": b_ih + b_hh})
    params["lstm"] = lstm
    # nn.Linear(H, V): weight uniform(-0.1, 0.1) (stored transposed [H, V]), bias = 0.
    params["w_out"] = jax.random.uniform(
        keys[1], (hidden_size, vocab_size), jnp.float32, -0.1, 0.1
    )
    params["b_out"] = jnp.zeros((1, vocab_size), jnp.float32)
    return params


if __name__ == "__main__":
    EMBED, HIDDEN, VOCAB, NUM_LAYERS = 32, 32, 128, 2
    T = 8           # caption length
    LENGTH = 8      # lengths[0]  (<= T + 1), static Python int

    root = jax.random.PRNGKey(0)
    k_params, k_feat, k_cap = jax.random.split(root, 3)

    raw_params = init_params(k_params, EMBED, HIDDEN, VOCAB, NUM_LAYERS)
    params = prepare_params(raw_params)                      # one-time TPU layout
    features = jax.random.normal(k_feat, (EMBED,), jnp.float32)
    captions = jax.random.randint(k_cap, (1, T), 0, VOCAB, jnp.int32)
    # lengths = [LENGTH]  (batch of 1; pack_padded_sequence degenerates to truncation)

    out = decoder_rnn_forward(features, captions, LENGTH, params)
    out = jax.block_until_ready(out)

    assert out.shape == (LENGTH, VOCAB), out.shape
    assert bool(jnp.all(jnp.isfinite(out)))
    print("KERNEL_OK")
</pallas_src>

<mosaic_0001>
module attributes {stable_mosaic.version = 11 : i64} {
  func.func @kernel(%arg0: i32, %arg1: memref<8x32xf32, #tpu.memory_space<vmem>>, %arg2: memref<32x512xf32, #tpu.memory_space<vmem>>, %arg3: memref<128x512xf32, #tpu.memory_space<vmem>>, %arg4: memref<1x512xf32, #tpu.memory_space<vmem>>, %arg5: memref<128x512xf32, #tpu.memory_space<vmem>>, %arg6: memref<128x512xf32, #tpu.memory_space<vmem>>, %arg7: memref<1x512xf32, #tpu.memory_space<vmem>>, %arg8: memref<128x128xbf16, #tpu.memory_space<vmem>>, %arg9: memref<1x128xf32, #tpu.memory_space<vmem>>, %arg10: memref<8x128xf32, #tpu.memory_space<vmem>>, %arg11: memref<8x128xf32, #tpu.memory_space<vmem>>) attributes {dimension_semantics = [#tpu.dimension_semantics<arbitrary>], iteration_bounds = array<i64: 1>, scalar_prefetch = 0 : i64, scratch_operands = 1 : i64, tpu.core_type = #tpu.core_type<tc>, window_params = [{pipeline_mode = #tpu.pipeline_mode<synchronous>, transform_indices = @transform_0, window_bounds = array<i64: 8, 32>}, {pipeline_mode = #tpu.pipeline_mode<synchronous>, transform_indices = @transform_1, window_bounds = array<i64: 32, 512>}, {pipeline_mode = #tpu.pipeline_mode<synchronous>, transform_indices = @transform_2, window_bounds = array<i64: 128, 512>}, {pipeline_mode = #tpu.pipeline_mode<synchronous>, transform_indices = @transform_3, window_bounds = array<i64: 1, 512>}, {pipeline_mode = #tpu.pipeline_mode<synchronous>, transform_indices = @transform_4, window_bounds = array<i64: 128, 512>}, {pipeline_mode = #tpu.pipeline_mode<synchronous>, transform_indices = @transform_5, window_bounds = array<i64: 128, 512>}, {pipeline_mode = #tpu.pipeline_mode<synchronous>, transform_indices = @transform_6, window_bounds = array<i64: 1, 512>}, {transform_indices = @transform_7, window_bounds = array<i64: 128, 128>}, {transform_indices = @transform_8, window_bounds = array<i64: 1, 128>}, {transform_indices = @transform_9, window_bounds = array<i64: 8, 128>}]} {
    %c0_i32 = arith.constant 0 : i32
    %0 = arith.cmpi eq, %arg0, %c0_i32 : i32
    %1 = arith.extui %0 : i1 to i32
    %c0_i32_0 = arith.constant 0 : i32
    %2 = arith.cmpi ne, %1, %c0_i32_0 : i32
    scf.if %2 {
      %c0_8 = arith.constant 0 : index
      %c0_9 = arith.constant 0 : index
      %11 = vector.load %arg1[%c0_8, %c0_9] : memref<8x32xf32, #tpu.memory_space<vmem>>, vector<8x32xf32>
      %c0_10 = arith.constant 0 : index
      %c0_11 = arith.constant 0 : index
      %12 = vector.load %arg2[%c0_10, %c0_11] : memref<32x512xf32, #tpu.memory_space<vmem>>, vector<32x512xf32>
      %c0_12 = arith.constant 0 : index
      %c0_13 = arith.constant 0 : index
      %13 = vector.load %arg3[%c0_12, %c0_13] : memref<128x512xf32, #tpu.memory_space<vmem>>, vector<128x512xf32>
      %c0_14 = arith.constant 0 : index
      %c0_15 = arith.constant 0 : index
      %14 = vector.load %arg4[%c0_14, %c0_15] : memref<1x512xf32, #tpu.memory_space<vmem>>, vector<1x512xf32>
      %cst_16 = arith.constant dense<0.000000e+00> : vector<8x512xf32>
      %15 = tpu.matmul %11, %12, %cst_16 {dimension_numbers = #tpu.dot_dimension_numbers<[1], [0], [0], [1], [0, 0, 1, 1], [], []>} : vector<8x32xf32>, vector<32x512xf32>, vector<8x512xf32> -> vector<8x512xf32>
      %16 = vector.broadcast %14 : vector<1x512xf32> to vector<8x512xf32>
      %17 = arith.addf %15, %16 : vector<8x512xf32>
      %cst_17 = arith.constant 0.000000e+00 : f32
      %18 = vector.broadcast %cst_17 : f32 to vector<1x128xf32>
      %cst_18 = arith.constant 0.000000e+00 : f32
      %19 = vector.broadcast %cst_18 : f32 to vector<1x128xf32>
      %20 = vector.extract_strided_slice %17 {offsets = [0, 0], sizes = [1, 512], strides = [1, 1]} : vector<8x512xf32> to vector<1x512xf32>
      %cst_19 = arith.constant dense<0.000000e+00> : vector<1x512xf32>
      %21 = tpu.matmul %18, %13, %cst_19 {dimension_numbers = #tpu.dot_dimension_numbers<[1], [0], [0], [1], [0, 0, 1, 1], [], []>} : vector<1x128xf32>, vector<128x512xf32>, vector<1x512xf32> -> vector<1x512xf32>
      %22 = arith.addf %20, %21 : vector<1x512xf32>
      %23 = vector.extract_strided_slice %22 {offsets = [0, 0], sizes = [1, 128], strides = [1, 1]} : vector<1x512xf32> to vector<1x128xf32>
      %24 = arith.negf %23 : vector<1x128xf32>
      %25 = math.exp %24 : vector<1x128xf32>
      %cst_20 = arith.constant 1.000000e+00 : f32
      %26 = vector.broadcast %cst_20 : f32 to vector<1x128xf32>
      %27 = arith.addf %26, %25 : vector<1x128xf32>
      %28 = arith.divf %26, %27 : vector<1x128xf32>
      %29 = vector.extract_strided_slice %22 {offsets = [0, 128], sizes = [1, 128], strides = [1, 1]} : vector<1x512xf32> to vector<1x128xf32>
      %30 = arith.negf %29 : vector<1x128xf32>
      %31 = math.exp %30 : vector<1x128xf32>
      %cst_21 = arith.constant 1.000000e+00 : f32
      %32 = vector.broadcast %cst_21 : f32 to vector<1x128xf32>
      %33 = arith.addf %32, %31 : vector<1x128xf32>
      %34 = arith.divf %32, %33 : vector<1x128xf32>
      %35 = vector.extract_strided_slice %22 {offsets = [0, 256], sizes = [1, 128], strides = [1, 1]} : vector<1x512xf32> to vector<1x128xf32>
      %36 = math.tanh %35 : vector<1x128xf32>
      %37 = vector.extract_strided_slice %22 {offsets = [0, 384], sizes = [1, 128], strides = [1, 1]} : vector<1x512xf32> to vector<1x128xf32>
      %38 = arith.negf %37 : vector<1x128xf32>
      %39 = math.exp %38 : vector<1x128xf32>
      %cst_22 = arith.constant 1.000000e+00 : f32
      %40 = vector.broadcast %cst_22 : f32 to vector<1x128xf32>
      %41 = arith.addf %40, %39 : vector<1x128xf32>
      %42 = arith.divf %40, %41 : vector<1x128xf32>
      %43 = arith.mulf %34, %19 : vector<1x128xf32>
      %44 = arith.mulf %28, %36 : vector<1x128xf32>
      %45 = arith.addf %43, %44 : vector<1x128xf32>
      %46 = math.tanh %45 : vector<1x128xf32>
      %47 = arith.mulf %42, %46 : vector<1x128xf32>
      %c0_23 = arith.constant 0 : index
      %c0_24 = arith.constant 0 : index
      %48 = vector.load %arg11[%c0_23, %c0_24] : memref<8x128xf32, #tpu.memory_space<vmem>>, vector<1x128xf32>
      tpu.vector_store %arg11[%c0_23, %c0_24], %47 {strides = array<i32>} : memref<8x128xf32, #tpu.memory_space<vmem>>, vector<1x128xf32>,
      %49 = vector.extract_strided_slice %17 {offsets = [1, 0], sizes = [1, 512], strides = [1, 1]} : vector<8x512xf32> to vector<1x512xf32>
      %cst_25 = arith.constant dense<0.000000e+00> : vector<1x512xf32>
      %50 = tpu.matmul %47, %13, %cst_25 {dimension_numbers = #tpu.dot_dimension_numbers<[1], [0], [0], [1], [0, 0, 1, 1], [], []>} : vector<1x128xf32>, vector<128x512xf32>, vector<1x512xf32> -> vector<1x512xf32>
      %51 = arith.addf %49, %50 : vector<1x512xf32>
      %52 = vector.extract_strided_slice %51 {offsets = [0, 0], sizes = [1, 128], strides = [1, 1]} : vector<1x512xf32> to vector<1x128xf32>
      %53 = arith.negf %52 : vector<1x128xf32>
      %54 = math.exp %53 : vector<1x128xf32>
      %cst_26 = arith.constant 1.000000e+00 : f32
      %55 = vector.broadcast %cst_26 : f32 to vector<1x128xf32>
      %56 = arith.addf %55, %54 : vector<1x128xf32>
      %57 = arith.divf %55, %56 : vector<1x128xf32>
      %58 = vector.extract_strided_slice %51 {offsets = [0, 128], sizes = [1, 128], strides = [1, 1]} : vector<1x512xf32> to vector<1x128xf32>
      %59 = arith.negf %58 : vector<1x128xf32>
      %60 = math.exp %59 : vector<1x128xf32>
      %cst_27 = arith.constant 1.000000e+00 : f32
      %61 = vector.broadcast %cst_27 : f32 to vector<1x128xf32>
      %62 = arith.addf %61, %60 : vector<1x128xf32>
      %63 = arith.divf %61, %62 : vector<1x128xf32>
      %64 = vector.extract_strided_slice %51 {offsets = [0, 256], sizes = [1, 128], strides = [1, 1]} : vector<1x512xf32> to vector<1x128xf32>
      %65 = math.tanh %64 : vector<1x128xf32>
      %66 = vector.extract_strided_slice %51 {offsets = [0, 384], sizes = [1, 128], strides = [1, 1]} : vector<1x512xf32> to vector<1x128xf32>
      %67 = arith.negf %66 : vector<1x128xf32>
      %68 = math.exp %67 : vector<1x128xf32>
      %cst_28 = arith.constant 1.000000e+00 : f32
      %69 = vector.broadcast %cst_28 : f32 to vector<1x128xf32>
      %70 = arith.addf %69, %68 : vector<1x128xf32>
      %71 = arith.divf %69, %70 : vector<1x128xf32>
      %72 = arith.mulf %63, %45 : vector<1x128xf32>
      %73 = arith.mulf %57, %65 : vector<1x128xf32>
      %74 = arith.addf %72, %73 : vector<1x128xf32>
      %75 = math.tanh %74 : vector<1x128xf32>
      %76 = arith.mulf %71, %75 : vector<1x128xf32>
      %c1 = arith.constant 1 : index
      %c0_29 = arith.constant 0 : index
      %77 = vector.load %arg11[%c1, %c0_29] : memref<8x128xf32, #tpu.memory_space<vmem>>, vector<1x128xf32>
      tpu.vector_store %arg11[%c1, %c0_29], %76 {strides = array<i32>} : memref<8x128xf32, #tpu.memory_space<vmem>>, vector<1x128xf32>,
      %78 = vector.extract_strided_slice %17 {offsets = [2, 0], sizes = [1, 512], strides = [1, 1]} : vector<8x512xf32> to vector<1x512xf32>
      %cst_30 = arith.constant dense<0.000000e+00> : vector<1x512xf32>
      %79 = tpu.matmul %76, %13, %cst_30 {dimension_numbers = #tpu.dot_dimension_numbers<[1], [0], [0], [1], [0, 0, 1, 1], [], []>} : vector<1x128xf32>, vector<128x512xf32>, vector<1x512xf32> -> vector<1x512xf32>
      %80 = arith.addf %78, %79 : vector<1x512xf32>
      %81 = vector.extract_strided_slice %80 {offsets = [0, 0], sizes = [1, 128], strides = [1, 1]} : vector<1x512xf32> to vector<1x128xf32>
      %82 = arith.negf %81 : vector<1x128xf32>
      %83 = math.exp %82 : vector<1x128xf32>
      %cst_31 = arith.constant 1.000000e+00 : f32
      %84 = vector.broadcast %cst_31 : f32 to vector<1x128xf32>
      %85 = arith.addf %84, %83 : vector<1x128xf32>
      %86 = arith.divf %84, %85 : vector<1x128xf32>
      %87 = vector.extract_strided_slice %80 {offsets = [0, 128], sizes = [1, 128], strides = [1, 1]} : vector<1x512xf32> to vector<1x128xf32>
      %88 = arith.negf %87 : vector<1x128xf32>
      %89 = math.exp %88 : vector<1x128xf32>
      %cst_32 = arith.constant 1.000000e+00 : f32
      %90 = vector.broadcast %cst_32 : f32 to vector<1x128xf32>
      %91 = arith.addf %90, %89 : vector<1x128xf32>
      %92 = arith.divf %90, %91 : vector<1x128xf32>
      %93 = vector.extract_strided_slice %80 {offsets = [0, 256], sizes = [1, 128], strides = [1, 1]} : vector<1x512xf32> to vector<1x128xf32>
      %94 = math.tanh %93 : vector<1x128xf32>
      %95 = vector.extract_strided_slice %80 {offsets = [0, 384], sizes = [1, 128], strides = [1, 1]} : vector<1x512xf32> to vector<1x128xf32>
      %96 = arith.negf %95 : vector<1x128xf32>
      %97 = math.exp %96 : vector<1x128xf32>
      %cst_33 = arith.constant 1.000000e+00 : f32
      %98 = vector.broadcast %cst_33 : f32 to vector<1x128xf32>
      %99 = arith.addf %98, %97 : vector<1x128xf32>
      %100 = arith.divf %98, %99 : vector<1x128xf32>
      %101 = arith.mulf %92, %74 : vector<1x128xf32>
      %102 = arith.mulf %86, %94 : vector<1x128xf32>
      %103 = arith.addf %101, %102 : vector<1x128xf32>
      %104 = math.tanh %103 : vector<1x128xf32>
      %105 = arith.mulf %100, %104 : vector<1x128xf32>
      %c2 = arith.constant 2 : index
      %c0_34 = arith.constant 0 : index
      %106 = vector.load %arg11[%c2, %c0_34] : memref<8x128xf32, #tpu.memory_space<vmem>>, vector<1x128xf32>
      tpu.vector_store %arg11[%c2, %c0_34], %105 {strides = array<i32>} : memref<8x128xf32, #tpu.memory_space<vmem>>, vector<1x128xf32>,
      %107 = vector.extract_strided_slice %17 {offsets = [3, 0], sizes = [1, 512], strides = [1, 1]} : vector<8x512xf32> to vector<1x512xf32>
      %cst_35 = arith.constant dense<0.000000e+00> : vector<1x512xf32>
      %108 = tpu.matmul %105, %13, %cst_35 {dimension_numbers = #tpu.dot_dimension_numbers<[1], [0], [0], [1], [0, 0, 1, 1], [], []>} : vector<1x128xf32>, vector<128x512xf32>, vector<1x512xf32> -> vector<1x512xf32>
      %109 = arith.addf %107, %108 : vector<1x512xf32>
      %110 = vector.extract_strided_slice %109 {offsets = [0, 0], sizes = [1, 128], strides = [1, 1]} : vector<1x512xf32> to vector<1x128xf32>
      %111 = arith.negf %110 : vector<1x128xf32>
      %112 = math.exp %111 : vector<1x128xf32>
      %cst_36 = arith.constant 1.000000e+00 : f32
      %113 = vector.broadcast %cst_36 : f32 to vector<1x128xf32>
      %114 = arith.addf %113, %112 : vector<1x128xf32>
      %115 = arith.divf %113, %114 : vector<1x128xf32>
      %116 = vector.extract_strided_slice %109 {offsets = [0, 128], sizes = [1, 128], strides = [1, 1]} : vector<1x512xf32> to vector<1x128xf32>
      %117 = arith.negf %116 : vector<1x128xf32>
      %118 = math.exp %117 : vector<1x128xf32>
      %cst_37 = arith.constant 1.000000e+00 : f32
      %119 = vector.broadcast %cst_37 : f32 to vector<1x128xf32>
      %120 = arith.addf %119, %118 : vector<1x128xf32>
      %121 = arith.divf %119, %120 : vector<1x128xf32>
      %122 = vector.extract_strided_slice %109 {offsets = [0, 256], sizes = [1, 128], strides = [1, 1]} : vector<1x512xf32> to vector<1x128xf32>
      %123 = math.tanh %122 : vector<1x128xf32>
      %124 = vector.extract_strided_slice %109 {offsets = [0, 384], sizes = [1, 128], strides = [1, 1]} : vector<1x512xf32> to vector<1x128xf32>
      %125 = arith.negf %124 : vector<1x128xf32>
      %126 = math.exp %125 : vector<1x128xf32>
      %cst_38 = arith.constant 1.000000e+00 : f32
      %127 = vector.broadcast %cst_38 : f32 to vector<1x128xf32>
      %128 = arith.addf %127, %126 : vector<1x128xf32>
      %129 = arith.divf %127, %128 : vector<1x128xf32>
      %130 = arith.mulf %121, %103 : vector<1x128xf32>
      %131 = arith.mulf %115, %123 : vector<1x128xf32>
      %132 = arith.addf %130, %131 : vector<1x128xf32>
      %133 = math.tanh %132 : vector<1x128xf32>
      %134 = arith.mulf %129, %133 : vector<1x128xf32>
      %c3 = arith.constant 3 : index
      %c0_39 = arith.constant 0 : index
      %135 = vector.load %arg11[%c3, %c0_39] : memref<8x128xf32, #tpu.memory_space<vmem>>, vector<1x128xf32>
      tpu.vector_store %arg11[%c3, %c0_39], %134 {strides = array<i32>} : memref<8x128xf32, #tpu.memory_space<vmem>>, vector<1x128xf32>,
      %136 = vector.extract_strided_slice %17 {offsets = [4, 0], sizes = [1, 512], strides = [1, 1]} : vector<8x512xf32> to vector<1x512xf32>
      %cst_40 = arith.constant dense<0.000000e+00> : vector<1x512xf32>
      %137 = tpu.matmul %134, %13, %cst_40 {dimension_numbers = #tpu.dot_dimension_numbers<[1], [0], [0], [1], [0, 0, 1, 1], [], []>} : vector<1x128xf32>, vector<128x512xf32>, vector<1x512xf32> -> vector<1x512xf32>
      %138 = arith.addf %136, %137 : vector<1x512xf32>
      %139 = vector.extract_strided_slice %138 {offsets = [0, 0], sizes = [1, 128], strides = [1, 1]} : vector<1x512xf32> to vector<1x128xf32>
      %140 = arith.negf %139 : vector<1x128xf32>
      %141 = math.exp %140 : vector<1x128xf32>
      %cst_41 = arith.constant 1.000000e+00 : f32
      %142 = vector.broadcast %cst_41 : f32 to vector<1x128xf32>
      %143 = arith.addf %142, %141 : vector<1x128xf32>
      %144 = arith.divf %142, %143 : vector<1x128xf32>
      %145 = vector.extract_strided_slice %138 {offsets = [0, 128], sizes = [1, 128], strides = [1, 1]} : vector<1x512xf32> to vector<1x128xf32>
      %146 = arith.negf %145 : vector<1x128xf32>
      %147 = math.exp %146 : vector<1x128xf32>
      %cst_42 = arith.constant 1.000000e+00 : f32
      %148 = vector.broadcast %cst_42 : f32 to vector<1x128xf32>
      %149 = arith.addf %148, %147 : vector<1x128xf32>
      %150 = arith.divf %148, %149 : vector<1x128xf32>
      %151 = vector.extract_strided_slice %138 {offsets = [0, 256], sizes = [1, 128], strides = [1, 1]} : vector<1x512xf32> to vector<1x128xf32>
      %152 = math.tanh %151 : vector<1x128xf32>
      %153 = vector.extract_strided_slice %138 {offsets = [0, 384], sizes = [1, 128], strides = [1, 1]} : vector<1x512xf32> to vector<1x128xf32>
      %154 = arith.negf %153 : vector<1x128xf32>
      %155 = math.exp %154 : vector<1x128xf32>
      %cst_43 = arith.constant 1.000000e+00 : f32
      %156 = vector.broadcast %cst_43 : f32 to vector<1x128xf32>
      %157 = arith.addf %156, %155 : vector<1x128xf32>
      %158 = arith.divf %156, %157 : vector<1x128xf32>
      %159 = arith.mulf %150, %132 : vector<1x128xf32>
      %160 = arith.mulf %144, %152 : vector<1x128xf32>
      %161 = arith.addf %159, %160 : vector<1x128xf32>
      %162 = math.tanh %161 : vector<1x128xf32>
      %163 = arith.mulf %158, %162 : vector<1x128xf32>
      %c4 = arith.constant 4 : index
      %c0_44 = arith.constant 0 : index
      %164 = vector.load %arg11[%c4, %c0_44] : memref<8x128xf32, #tpu.memory_space<vmem>>, vector<1x128xf32>
      tpu.vector_store %arg11[%c4, %c0_44], %163 {strides = array<i32>} : memref<8x128xf32, #tpu.memory_space<vmem>>, vector<1x128xf32>,
      %165 = vector.extract_strided_slice %17 {offsets = [5, 0], sizes = [1, 512], strides = [1, 1]} : vector<8x512xf32> to vector<1x512xf32>
      %cst_45 = arith.constant dense<0.000000e+00> : vector<1x512xf32>
      %166 = tpu.matmul %163, %13, %cst_45 {dimension_numbers = #tpu.dot_dimension_numbers<[1], [0], [0], [1], [0, 0, 1, 1], [], []>} : vector<1x128xf32>, vector<128x512xf32>, vector<1x512xf32> -> vector<1x512xf32>
      %167 = arith.addf %165, %166 : vector<1x512xf32>
      %168 = vector.extract_strided_slice %167 {offsets = [0, 0], sizes = [1, 128], strides = [1, 1]} : vector<1x512xf32> to vector<1x128xf32>
      %169 = arith.negf %168 : vector<1x128xf32>
      %170 = math.exp %169 : vector<1x128xf32>
      %cst_46 = arith.constant 1.000000e+00 : f32
      %171 = vector.broadcast %cst_46 : f32 to vector<1x128xf32>
      %172 = arith.addf %171, %170 : vector<1x128xf32>
      %173 = arith.divf %171, %172 : vector<1x128xf32>
      %174 = vector.extract_strided_slice %167 {offsets = [0, 128], sizes = [1, 128], strides = [1, 1]} : vector<1x512xf32> to vector<1x128xf32>
      %175 = arith.negf %174 : vector<1x128xf32>
      %176 = math.exp %175 : vector<1x128xf32>
      %cst_47 = arith.constant 1.000000e+00 : f32
      %177 = vector.broadcast %cst_47 : f32 to vector<1x128xf32>
      %178 = arith.addf %177, %176 : vector<1x128xf32>
      %179 = arith.divf %177, %178 : vector<1x128xf32>
      %180 = vector.extract_strided_slice %167 {offsets = [0, 256], sizes = [1, 128], strides = [1, 1]} : vector<1x512xf32> to vector<1x128xf32>
      %181 = math.tanh %180 : vector<1x128xf32>
      %182 = vector.extract_strided_slice %167 {offsets = [0, 384], sizes = [1, 128], strides = [1, 1]} : vector<1x512xf32> to vector<1x128xf32>
      %183 = arith.negf %182 : vector<1x128xf32>
      %184 = math.exp %183 : vector<1x128xf32>
      %cst_48 = arith.constant 1.000000e+00 : f32
      %185 = vector.broadcast %cst_48 : f32 to vector<1x128xf32>
      %186 = arith.addf %185, %184 : vector<1x128xf32>
      %187 = arith.divf %185, %186 : vector<1x128xf32>
      %188 = arith.mulf %179, %161 : vector<1x128xf32>
      %189 = arith.mulf %173, %181 : vector<1x128xf32>
      %190 = arith.addf %188, %189 : vector<1x128xf32>
      %191 = math.tanh %190 : vector<1x128xf32>
      %192 = arith.mulf %187, %191 : vector<1x128xf32>
      %c5 = arith.constant 5 : index
      %c0_49 = arith.constant 0 : index
      %193 = vector.load %arg11[%c5, %c0_49] : memref<8x128xf32, #tpu.memory_space<vmem>>, vector<1x128xf32>
      tpu.vector_store %arg11[%c5, %c0_49], %192 {strides = array<i32>} : memref<8x128xf32, #tpu.memory_space<vmem>>, vector<1x128xf32>,
      %194 = vector.extract_strided_slice %17 {offsets = [6, 0], sizes = [1, 512], strides = [1, 1]} : vector<8x512xf32> to vector<1x512xf32>
      %cst_50 = arith.constant dense<0.000000e+00> : vector<1x512xf32>
      %195 = tpu.matmul %192, %13, %cst_50 {dimension_numbers = #tpu.dot_dimension_numbers<[1], [0], [0], [1], [0, 0, 1, 1], [], []>} : vector<1x128xf32>, vector<128x512xf32>, vector<1x512xf32> -> vector<1x512xf32>
      %196 = arith.addf %194, %195 : vector<1x512xf32>
      %197 = vector.extract_strided_slice %196 {offsets = [0, 0], sizes = [1, 128], strides = [1, 1]} : vector<1x512xf32> to vector<1x128xf32>
      %198 = arith.negf %197 : vector<1x128xf32>
      %199 = math.exp %198 : vector<1x128xf32>
      %cst_51 = arith.constant 1.000000e+00 : f32
      %200 = vector.broadcast %cst_51 : f32 to vector<1x128xf32>
      %201 = arith.addf %200, %199 : vector<1x128xf32>
      %202 = arith.divf %200, %201 : vector<1x128xf32>
      %203 = vector.extract_strided_slice %196 {offsets = [0, 128], sizes = [1, 128], strides = [1, 1]} : vector<1x512xf32> to vector<1x128xf32>
      %204 = arith.negf %203 : vector<1x128xf32>
      %205 = math.exp %204 : vector<1x128xf32>
      %cst_52 = arith.constant 1.000000e+00 : f32
      %206 = vector.broadcast %cst_52 : f32 to vector<1x128xf32>
      %207 = arith.addf %206, %205 : vector<1x128xf32>
      %208 = arith.divf %206, %207 : vector<1x128xf32>
      %209 = vector.extract_strided_slice %196 {offsets = [0, 256], sizes = [1, 128], strides = [1, 1]} : vector<1x512xf32> to vector<1x128xf32>
      %210 = math.tanh %209 : vector<1x128xf32>
      %211 = vector.extract_strided_slice %196 {offsets = [0, 384], sizes = [1, 128], strides = [1, 1]} : vector<1x512xf32> to vector<1x128xf32>
      %212 = arith.negf %211 : vector<1x128xf32>
      %213 = math.exp %212 : vector<1x128xf32>
      %cst_53 = arith.constant 1.000000e+00 : f32
      %214 = vector.broadcast %cst_53 : f32 to vector<1x128xf32>
      %215 = arith.addf %214, %213 : vector<1x128xf32>
      %216 = arith.divf %214, %215 : vector<1x128xf32>
      %217 = arith.mulf %208, %190 : vector<1x128xf32>
      %218 = arith.mulf %202, %210 : vector<1x128xf32>
      %219 = arith.addf %217, %218 : vector<1x128xf32>
      %220 = math.tanh %219 : vector<1x128xf32>
      %221 = arith.mulf %216, %220 : vector<1x128xf32>
      %c6 = arith.constant 6 : index
      %c0_54 = arith.constant 0 : index
      %222 = vector.load %arg11[%c6, %c0_54] : memref<8x128xf32, #tpu.memory_space<vmem>>, vector<1x128xf32>
      tpu.vector_store %arg11[%c6, %c0_54], %221 {strides = array<i32>} : memref<8x128xf32, #tpu.memory_space<vmem>>, vector<1x128xf32>,
      %223 = vector.extract_strided_slice %17 {offsets = [7, 0], sizes = [1, 512], strides = [1, 1]} : vector<8x512xf32> to vector<1x512xf32>
      %cst_55 = arith.constant dense<0.000000e+00> : vector<1x512xf32>
      %224 = tpu.matmul %221, %13, %cst_55 {dimension_numbers = #tpu.dot_dimension_numbers<[1], [0], [0], [1], [0, 0, 1, 1], [], []>} : vector<1x128xf32>, vector<128x512xf32>, vector<1x512xf32> -> vector<1x512xf32>
      %225 = arith.addf %223, %224 : vector<1x512xf32>
      %226 = vector.extract_strided_slice %225 {offsets = [0, 0], sizes = [1, 128], strides = [1, 1]} : vector<1x512xf32> to vector<1x128xf32>
      %227 = arith.negf %226 : vector<1x128xf32>
      %228 = math.exp %227 : vector<1x128xf32>
      %cst_56 = arith.constant 1.000000e+00 : f32
      %229 = vector.broadcast %cst_56 : f32 to vector<1x128xf32>
      %230 = arith.addf %229, %228 : vector<1x128xf32>
      %231 = arith.divf %229, %230 : vector<1x128xf32>
      %232 = vector.extract_strided_slice %225 {offsets = [0, 128], sizes = [1, 128], strides = [1, 1]} : vector<1x512xf32> to vector<1x128xf32>
      %233 = arith.negf %232 : vector<1x128xf32>
      %234 = math.exp %233 : vector<1x128xf32>
      %cst_57 = arith.constant 1.000000e+00 : f32
      %235 = vector.broadcast %cst_57 : f32 to vector<1x128xf32>
      %236 = arith.addf %235, %234 : vector<1x128xf32>
      %237 = arith.divf %235, %236 : vector<1x128xf32>
      %238 = vector.extract_strided_slice %225 {offsets = [0, 256], sizes = [1, 128], strides = [1, 1]} : vector<1x512xf32> to vector<1x128xf32>
      %239 = math.tanh %238 : vector<1x128xf32>
      %240 = vector.extract_strided_slice %225 {offsets = [0, 384], sizes = [1, 128], strides = [1, 1]} : vector<1x512xf32> to vector<1x128xf32>
      %241 = arith.negf %240 : vector<1x128xf32>
      %242 = math.exp %241 : vector<1x128xf32>
      %cst_58 = arith.constant 1.000000e+00 : f32
      %243 = vector.broadcast %cst_58 : f32 to vector<1x128xf32>
      %244 = arith.addf %243, %242 : vector<1x128xf32>
      %245 = arith.divf %243, %244 : vector<1x128xf32>
      %246 = arith.mulf %237, %219 : vector<1x128xf32>
      %247 = arith.mulf %231, %239 : vector<1x128xf32>
      %248 = arith.addf %246, %247 : vector<1x128xf32>
      %249 = math.tanh %248 : vector<1x128xf32>
      %250 = arith.mulf %245, %249 : vector<1x128xf32>
      %c7 = arith.constant 7 : index
      %c0_59 = arith.constant 0 : index
      %251 = vector.load %arg11[%c7, %c0_59] : memref<8x128xf32, #tpu.memory_space<vmem>>, vector<1x128xf32>
      tpu.vector_store %arg11[%c7, %c0_59], %250 {strides = array<i32>} : memref<8x128xf32, #tpu.memory_space<vmem>>, vector<1x128xf32>,
      %c0_60 = arith.constant 0 : index
      %c0_61 = arith.constant 0 : index
      %252 = vector.load %arg11[%c0_60, %c0_61] : memref<8x128xf32, #tpu.memory_space<vmem>>, vector<8x128xf32>
      %c0_62 = arith.constant 0 : index
      %c0_63 = arith.constant 0 : index
      %253 = vector.load %arg5[%c0_62, %c0_63] : memref<128x512xf32, #tpu.memory_space<vmem>>, vector<128x512xf32>
      %c0_64 = arith.constant 0 : index
      %c0_65 = arith.constant 0 : index
      %254 = vector.load %arg6[%c0_64, %c0_65] : memref<128x512xf32, #tpu.memory_space<vmem>>, vector<128x512xf32>
      %c0_66 = arith.constant 0 : index
      %c0_67 = arith.constant 0 : index
      %255 = vector.load %arg7[%c0_66, %c0_67] : memref<1x512xf32, #tpu.memory_space<vmem>>, vector<1x512xf32>
      %cst_68 = arith.constant dense<0.000000e+00> : vector<8x512xf32>
      %256 = tpu.matmul %252, %253, %cst_68 {dimension_numbers = #tpu.dot_dimension_numbers<[1], [0], [0], [1], [0, 0, 1, 1], [], []>} : vector<8x128xf32>, vector<128x512xf32>, vector<8x512xf32> -> vector<8x512xf32>
      %257 = vector.broadcast %255 : vector<1x512xf32> to vector<8x512xf32>
      %258 = arith.addf %256, %257 : vector<8x512xf32>
      %cst_69 = arith.constant 0.000000e+00 : f32
      %259 = vector.broadcast %cst_69 : f32 to vector<1x128xf32>
      %cst_70 = arith.constant 0.000000e+00 : f32
      %260 = vector.broadcast %cst_70 : f32 to vector<1x128xf32>
      %261 = vector.extract_strided_slice %258 {offsets = [0, 0], sizes = [1, 512], strides = [1, 1]} : vector<8x512xf32> to vector<1x512xf32>
      %cst_71 = arith.constant dense<0.000000e+00> : vector<1x512xf32>
      %262 = tpu.matmul %259, %254, %cst_71 {dimension_numbers = #tpu.dot_dimension_numbers<[1], [0], [0], [1], [0, 0, 1, 1], [], []>} : vector<1x128xf32>, vector<128x512xf32>, vector<1x512xf32> -> vector<1x512xf32>
      %263 = arith.addf %261, %262 : vector<1x512xf32>
      %264 = vector.extract_strided_slice %263 {offsets = [0, 0], sizes = [1, 128], strides = [1, 1]} : vector<1x512xf32> to vector<1x128xf32>
      %265 = arith.negf %264 : vector<1x128xf32>
      %266 = math.exp %265 : vector<1x128xf32>
      %cst_72 = arith.constant 1.000000e+00 : f32
      %267 = vector.broadcast %cst_72 : f32 to vector<1x128xf32>
      %268 = arith.addf %267, %266 : vector<1x128xf32>
      %269 = arith.divf %267, %268 : vector<1x128xf32>
      %270 = vector.extract_strided_slice %263 {offsets = [0, 128], sizes = [1, 128], strides = [1, 1]} : vector<1x512xf32> to vector<1x128xf32>
      %271 = arith.negf %270 : vector<1x128xf32>
      %272 = math.exp %271 : vector<1x128xf32>
      %cst_73 = arith.constant 1.000000e+00 : f32
      %273 = vector.broadcast %cst_73 : f32 to vector<1x128xf32>
      %274 = arith.addf %273, %272 : vector<1x128xf32>
      %275 = arith.divf %273, %274 : vector<1x128xf32>
      %276 = vector.extract_strided_slice %263 {offsets = [0, 256], sizes = [1, 128], strides = [1, 1]} : vector<1x512xf32> to vector<1x128xf32>
      %277 = math.tanh %276 : vector<1x128xf32>
      %278 = vector.extract_strided_slice %263 {offsets = [0, 384], sizes = [1, 128], strides = [1, 1]} : vector<1x512xf32> to vector<1x128xf32>
      %279 = arith.negf %278 : vector<1x128xf32>
      %280 = math.exp %279 : vector<1x128xf32>
      %cst_74 = arith.constant 1.000000e+00 : f32
      %281 = vector.broadcast %cst_74 : f32 to vector<1x128xf32>
      %282 = arith.addf %281, %280 : vector<1x128xf32>
      %283 = arith.divf %281, %282 : vector<1x128xf32>
      %284 = arith.mulf %275, %260 : vector<1x128xf32>
      %285 = arith.mulf %269, %277 : vector<1x128xf32>
      %286 = arith.addf %284, %285 : vector<1x128xf32>
      %287 = math.tanh %286 : vector<1x128xf32>
      %288 = arith.mulf %283, %287 : vector<1x128xf32>
      %c0_75 = arith.constant 0 : index
      %c0_76 = arith.constant 0 : index
      %289 = vector.load %arg11[%c0_75, %c0_76] : memref<8x128xf32, #tpu.memory_space<vmem>>, vector<1x128xf32>
      tpu.vector_store %arg11[%c0_75, %c0_76], %288 {strides = array<i32>} : memref<8x128xf32, #tpu.memory_space<vmem>>, vector<1x128xf32>,
      %290 = vector.extract_strided_slice %258 {offsets = [1, 0], sizes = [1, 512], strides = [1, 1]} : vector<8x512xf32> to vector<1x512xf32>
      %cst_77 = arith.constant dense<0.000000e+00> : vector<1x512xf32>
      %291 = tpu.matmul %288, %254, %cst_77 {dimension_numbers = #tpu.dot_dimension_numbers<[1], [0], [0], [1], [0, 0, 1, 1], [], []>} : vector<1x128xf32>, vector<128x512xf32>, vector<1x512xf32> -> vector<1x512xf32>
      %292 = arith.addf %290, %291 : vector<1x512xf32>
      %293 = vector.extract_strided_slice %292 {offsets = [0, 0], sizes = [1, 128], strides = [1, 1]} : vector<1x512xf32> to vector<1x128xf32>
      %294 = arith.negf %293 : vector<1x128xf32>
      %295 = math.exp %294 : vector<1x128xf32>
      %cst_78 = arith.constant 1.000000e+00 : f32
      %296 = vector.broadcast %cst_78 : f32 to vector<1x128xf32>
      %297 = arith.addf %296, %295 : vector<1x128xf32>
      %298 = arith.divf %296, %297 : vector<1x128xf32>
      %299 = vector.extract_strided_slice %292 {offsets = [0, 128], sizes = [1, 128], strides = [1, 1]} : vector<1x512xf32> to vector<1x128xf32>
      %300 = arith.negf %299 : vector<1x128xf32>
      %301 = math.exp %300 : vector<1x128xf32>
      %cst_79 = arith.constant 1.000000e+00 : f32
      %302 = vector.broadcast %cst_79 : f32 to vector<1x128xf32>
      %303 = arith.addf %302, %301 : vector<1x128xf32>
      %304 = arith.divf %302, %303 : vector<1x128xf32>
      %305 = vector.extract_strided_slice %292 {offsets = [0, 256], sizes = [1, 128], strides = [1, 1]} : vector<1x512xf32> to vector<1x128xf32>
      %306 = math.tanh %305 : vector<1x128xf32>
      %307 = vector.extract_strided_slice %292 {offsets = [0, 384], sizes = [1, 128], strides = [1, 1]} : vector<1x512xf32> to vector<1x128xf32>
      %308 = arith.negf %307 : vector<1x128xf32>
      %309 = math.exp %308 : vector<1x128xf32>
      %cst_80 = arith.constant 1.000000e+00 : f32
      %310 = vector.broadcast %cst_80 : f32 to vector<1x128xf32>
      %311 = arith.addf %310, %309 : vector<1x128xf32>
      %312 = arith.divf %310, %311 : vector<1x128xf32>
      %313 = arith.mulf %304, %286 : vector<1x128xf32>
      %314 = arith.mulf %298, %306 : vector<1x128xf32>
      %315 = arith.addf %313, %314 : vector<1x128xf32>
      %316 = math.tanh %315 : vector<1x128xf32>
      %317 = arith.mulf %312, %316 : vector<1x128xf32>
      %c1_81 = arith.constant 1 : index
      %c0_82 = arith.constant 0 : index
      %318 = vector.load %arg11[%c1_81, %c0_82] : memref<8x128xf32, #tpu.memory_space<vmem>>, vector<1x128xf32>
      tpu.vector_store %arg11[%c1_81, %c0_82], %317 {strides = array<i32>} : memref<8x128xf32, #tpu.memory_space<vmem>>, vector<1x128xf32>,
      %319 = vector.extract_strided_slice %258 {offsets = [2, 0], sizes = [1, 512], strides = [1, 1]} : vector<8x512xf32> to vector<1x512xf32>
      %cst_83 = arith.constant dense<0.000000e+00> : vector<1x512xf32>
      %320 = tpu.matmul %317, %254, %cst_83 {dimension_numbers = #tpu.dot_dimension_numbers<[1], [0], [0], [1], [0, 0, 1, 1], [], []>} : vector<1x128xf32>, vector<128x512xf32>, vector<1x512xf32> -> vector<1x512xf32>
      %321 = arith.addf %319, %320 : vector<1x512xf32>
      %322 = vector.extract_strided_slice %321 {offsets = [0, 0], sizes = [1, 128], strides = [1, 1]} : vector<1x512xf32> to vector<1x128xf32>
      %323 = arith.negf %322 : vector<1x128xf32>
      %324 = math.exp %323 : vector<1x128xf32>
      %cst_84 = arith.constant 1.000000e+00 : f32
      %325 = vector.broadcast %cst_84 : f32 to vector<1x128xf32>
      %326 = arith.addf %325, %324 : vector<1x128xf32>
      %327 = arith.divf %325, %326 : vector<1x128xf32>
      %328 = vector.extract_strided_slice %321 {offsets = [0, 128], sizes = [1, 128], strides = [1, 1]} : vector<1x512xf32> to vector<1x128xf32>
      %329 = arith.negf %328 : vector<1x128xf32>
      %330 = math.exp %329 : vector<1x128xf32>
      %cst_85 = arith.constant 1.000000e+00 : f32
      %331 = vector.broadcast %cst_85 : f32 to vector<1x128xf32>
      %332 = arith.addf %331, %330 : vector<1x128xf32>
      %333 = arith.divf %331, %332 : vector<1x128xf32>
      %334 = vector.extract_strided_slice %321 {offsets = [0, 256], sizes = [1, 128], strides = [1, 1]} : vector<1x512xf32> to vector<1x128xf32>
      %335 = math.tanh %334 : vector<1x128xf32>
      %336 = vector.extract_strided_slice %321 {offsets = [0, 384], sizes = [1, 128], strides = [1, 1]} : vector<1x512xf32> to vector<1x128xf32>
      %337 = arith.negf %336 : vector<1x128xf32>
      %338 = math.exp %337 : vector<1x128xf32>
      %cst_86 = arith.constant 1.000000e+00 : f32
      %339 = vector.broadcast %cst_86 : f32 to vector<1x128xf32>
      %340 = arith.addf %339, %338 : vector<1x128xf32>
      %341 = arith.divf %339, %340 : vector<1x128xf32>
      %342 = arith.mulf %333, %315 : vector<1x128xf32>
      %343 = arith.mulf %327, %335 : vector<1x128xf32>
      %344 = arith.addf %342, %343 : vector<1x128xf32>
      %345 = math.tanh %344 : vector<1x128xf32>
      %346 = arith.mulf %341, %345 : vector<1x128xf32>
      %c2_87 = arith.constant 2 : index
      %c0_88 = arith.constant 0 : index
      %347 = vector.load %arg11[%c2_87, %c0_88] : memref<8x128xf32, #tpu.memory_space<vmem>>, vector<1x128xf32>
      tpu.vector_store %arg11[%c2_87, %c0_88], %346 {strides = array<i32>} : memref<8x128xf32, #tpu.memory_space<vmem>>, vector<1x128xf32>,
      %348 = vector.extract_strided_slice %258 {offsets = [3, 0], sizes = [1, 512], strides = [1, 1]} : vector<8x512xf32> to vector<1x512xf32>
      %cst_89 = arith.constant dense<0.000000e+00> : vector<1x512xf32>
      %349 = tpu.matmul %346, %254, %cst_89 {dimension_numbers = #tpu.dot_dimension_numbers<[1], [0], [0], [1], [0, 0, 1, 1], [], []>} : vector<1x128xf32>, vector<128x512xf32>, vector<1x512xf32> -> vector<1x512xf32>
      %350 = arith.addf %348, %349 : vector<1x512xf32>
      %351 = vector.extract_strided_slice %350 {offsets = [0, 0], sizes = [1, 128], strides = [1, 1]} : vector<1x512xf32> to vector<1x128xf32>
      %352 = arith.negf %351 : vector<1x128xf32>
      %353 = math.exp %352 : vector<1x128xf32>
      %cst_90 = arith.constant 1.000000e+00 : f32
      %354 = vector.broadcast %cst_90 : f32 to vector<1x128xf32>
      %355 = arith.addf %354, %353 : vector<1x128xf32>
      %356 = arith.divf %354, %355 : vector<1x128xf32>
      %357 = vector.extract_strided_slice %350 {offsets = [0, 128], sizes = [1, 128], strides = [1, 1]} : vector<1x512xf32> to vector<1x128xf32>
      %358 = arith.negf %357 : vector<1x128xf32>
      %359 = math.exp %358 : vector<1x128xf32>
      %cst_91 = arith.constant 1.000000e+00 : f32
      %360 = vector.broadcast %cst_91 : f32 to vector<1x128xf32>
      %361 = arith.addf %360, %359 : vector<1x128xf32>
      %362 = arith.divf %360, %361 : vector<1x128xf32>
      %363 = vector.extract_strided_slice %350 {offsets = [0, 256], sizes = [1, 128], strides = [1, 1]} : vector<1x512xf32> to vector<1x128xf32>
      %364 = math.tanh %363 : vector<1x128xf32>
      %365 = vector.extract_strided_slice %350 {offsets = [0, 384], sizes = [1, 128], strides = [1, 1]} : vector<1x512xf32> to vector<1x128xf32>
      %366 = arith.negf %365 : vector<1x128xf32>
      %367 = math.exp %366 : vector<1x128xf32>
      %cst_92 = arith.constant 1.000000e+00 : f32
      %368 = vector.broadcast %cst_92 : f32 to vector<1x128xf32>
      %369 = arith.addf %368, %367 : vector<1x128xf32>
      %370 = arith.divf %368, %369 : vector<1x128xf32>
      %371 = arith.mulf %362, %344 : vector<1x128xf32>
      %372 = arith.mulf %356, %364 : vector<1x128xf32>
      %373 = arith.addf %371, %372 : vector<1x128xf32>
      %374 = math.tanh %373 : vector<1x128xf32>
      %375 = arith.mulf %370, %374 : vector<1x128xf32>
      %c3_93 = arith.constant 3 : index
      %c0_94 = arith.constant 0 : index
      %376 = vector.load %arg11[%c3_93, %c0_94] : memref<8x128xf32, #tpu.memory_space<vmem>>, vector<1x128xf32>
      tpu.vector_store %arg11[%c3_93, %c0_94], %375 {strides = array<i32>} : memref<8x128xf32, #tpu.memory_space<vmem>>, vector<1x128xf32>,
      %377 = vector.extract_strided_slice %258 {offsets = [4, 0], sizes = [1, 512], strides = [1, 1]} : vector<8x512xf32> to vector<1x512xf32>
      %cst_95 = arith.constant dense<0.000000e+00> : vector<1x512xf32>
      %378 = tpu.matmul %375, %254, %cst_95 {dimension_numbers = #tpu.dot_dimension_numbers<[1], [0], [0], [1], [0, 0, 1, 1], [], []>} : vector<1x128xf32>, vector<128x512xf32>, vector<1x512xf32> -> vector<1x512xf32>
      %379 = arith.addf %377, %378 : vector<1x512xf32>
      %380 = vector.extract_strided_slice %379 {offsets = [0, 0], sizes = [1, 128], strides = [1, 1]} : vector<1x512xf32> to vector<1x128xf32>
      %381 = arith.negf %380 : vector<1x128xf32>
      %382 = math.exp %381 : vector<1x128xf32>
      %cst_96 = arith.constant 1.000000e+00 : f32
      %383 = vector.broadcast %cst_96 : f32 to vector<1x128xf32>
      %384 = arith.addf %383, %382 : vector<1x128xf32>
      %385 = arith.divf %383, %384 : vector<1x128xf32>
      %386 = vector.extract_strided_slice %379 {offsets = [0, 128], sizes = [1, 128], strides = [1, 1]} : vector<1x512xf32> to vector<1x128xf32>
      %387 = arith.negf %386 : vector<1x128xf32>
      %388 = math.exp %387 : vector<1x128xf32>
      %cst_97 = arith.constant 1.000000e+00 : f32
      %389 = vector.broadcast %cst_97 : f32 to vector<1x128xf32>
      %390 = arith.addf %389, %388 : vector<1x128xf32>
      %391 = arith.divf %389, %390 : vector<1x128xf32>
      %392 = vector.extract_strided_slice %379 {offsets = [0, 256], sizes = [1, 128], strides = [1, 1]} : vector<1x512xf32> to vector<1x128xf32>
      %393 = math.tanh %392 : vector<1x128xf32>
      %394 = vector.extract_strided_slice %379 {offsets = [0, 384], sizes = [1, 128], strides = [1, 1]} : vector<1x512xf32> to vector<1x128xf32>
      %395 = arith.negf %394 : vector<1x128xf32>
      %396 = math.exp %395 : vector<1x128xf32>
      %cst_98 = arith.constant 1.000000e+00 : f32
      %397 = vector.broadcast %cst_98 : f32 to vector<1x128xf32>
      %398 = arith.addf %397, %396 : vector<1x128xf32>
      %399 = arith.divf %397, %398 : vector<1x128xf32>
      %400 = arith.mulf %391, %373 : vector<1x128xf32>
      %401 = arith.mulf %385, %393 : vector<1x128xf32>
      %402 = arith.addf %400, %401 : vector<1x128xf32>
      %403 = math.tanh %402 : vector<1x128xf32>
      %404 = arith.mulf %399, %403 : vector<1x128xf32>
      %c4_99 = arith.constant 4 : index
      %c0_100 = arith.constant 0 : index
      %405 = vector.load %arg11[%c4_99, %c0_100] : memref<8x128xf32, #tpu.memory_space<vmem>>, vector<1x128xf32>
      tpu.vector_store %arg11[%c4_99, %c0_100], %404 {strides = array<i32>} : memref<8x128xf32, #tpu.memory_space<vmem>>, vector<1x128xf32>,
      %406 = vector.extract_strided_slice %258 {offsets = [5, 0], sizes = [1, 512], strides = [1, 1]} : vector<8x512xf32> to vector<1x512xf32>
      %cst_101 = arith.constant dense<0.000000e+00> : vector<1x512xf32>
      %407 = tpu.matmul %404, %254, %cst_101 {dimension_numbers = #tpu.dot_dimension_numbers<[1], [0], [0], [1], [0, 0, 1, 1], [], []>} : vector<1x128xf32>, vector<128x512xf32>, vector<1x512xf32> -> vector<1x512xf32>
      %408 = arith.addf %406, %407 : vector<1x512xf32>
      %409 = vector.extract_strided_slice %408 {offsets = [0, 0], sizes = [1, 128], strides = [1, 1]} : vector<1x512xf32> to vector<1x128xf32>
      %410 = arith.negf %409 : vector<1x128xf32>
      %411 = math.exp %410 : vector<1x128xf32>
      %cst_102 = arith.constant 1.000000e+00 : f32
      %412 = vector.broadcast %cst_102 : f32 to vector<1x128xf32>
      %413 = arith.addf %412, %411 : vector<1x128xf32>
      %414 = arith.divf %412, %413 : vector<1x128xf32>
      %415 = vector.extract_strided_slice %408 {offsets = [0, 128], sizes = [1, 128], strides = [1, 1]} : vector<1x512xf32> to vector<1x128xf32>
      %416 = arith.negf %415 : vector<1x128xf32>
      %417 = math.exp %416 : vector<1x128xf32>
      %cst_103 = arith.constant 1.000000e+00 : f32
      %418 = vector.broadcast %cst_103 : f32 to vector<1x128xf32>
      %419 = arith.addf %418, %417 : vector<1x128xf32>
      %420 = arith.divf %418, %419 : vector<1x128xf32>
      %421 = vector.extract_strided_slice %408 {offsets = [0, 256], sizes = [1, 128], strides = [1, 1]} : vector<1x512xf32> to vector<1x128xf32>
      %422 = math.tanh %421 : vector<1x128xf32>
      %423 = vector.extract_strided_slice %408 {offsets = [0, 384], sizes = [1, 128], strides = [1, 1]} : vector<1x512xf32> to vector<1x128xf32>
      %424 = arith.negf %423 : vector<1x128xf32>
      %425 = math.exp %424 : vector<1x128xf32>
      %cst_104 = arith.constant 1.000000e+00 : f32
      %426 = vector.broadcast %cst_104 : f32 to vector<1x128xf32>
      %427 = arith.addf %426, %425 : vector<1x128xf32>
      %428 = arith.divf %426, %427 : vector<1x128xf32>
      %429 = arith.mulf %420, %402 : vector<1x128xf32>
      %430 = arith.mulf %414, %422 : vector<1x128xf32>
      %431 = arith.addf %429, %430 : vector<1x128xf32>
      %432 = math.tanh %431 : vector<1x128xf32>
      %433 = arith.mulf %428, %432 : vector<1x128xf32>
      %c5_105 = arith.constant 5 : index
      %c0_106 = arith.constant 0 : index
      %434 = vector.load %arg11[%c5_105, %c0_106] : memref<8x128xf32, #tpu.memory_space<vmem>>, vector<1x128xf32>
      tpu.vector_store %arg11[%c5_105, %c0_106], %433 {strides = array<i32>} : memref<8x128xf32, #tpu.memory_space<vmem>>, vector<1x128xf32>,
      %435 = vector.extract_strided_slice %258 {offsets = [6, 0], sizes = [1, 512], strides = [1, 1]} : vector<8x512xf32> to vector<1x512xf32>
      %cst_107 = arith.constant dense<0.000000e+00> : vector<1x512xf32>
      %436 = tpu.matmul %433, %254, %cst_107 {dimension_numbers = #tpu.dot_dimension_numbers<[1], [0], [0], [1], [0, 0, 1, 1], [], []>} : vector<1x128xf32>, vector<128x512xf32>, vector<1x512xf32> -> vector<1x512xf32>
      %437 = arith.addf %435, %436 : vector<1x512xf32>
      %438 = vector.extract_strided_slice %437 {offsets = [0, 0], sizes = [1, 128], strides = [1, 1]} : vector<1x512xf32> to vector<1x128xf32>
      %439 = arith.negf %438 : vector<1x128xf32>
      %440 = math.exp %439 : vector<1x128xf32>
      %cst_108 = arith.constant 1.000000e+00 : f32
      %441 = vector.broadcast %cst_108 : f32 to vector<1x128xf32>
      %442 = arith.addf %441, %440 : vector<1x128xf32>
      %443 = arith.divf %441, %442 : vector<1x128xf32>
      %444 = vector.extract_strided_slice %437 {offsets = [0, 128], sizes = [1, 128], strides = [1, 1]} : vector<1x512xf32> to vector<1x128xf32>
      %445 = arith.negf %444 : vector<1x128xf32>
      %446 = math.exp %445 : vector<1x128xf32>
      %cst_109 = arith.constant 1.000000e+00 : f32
      %447 = vector.broadcast %cst_109 : f32 to vector<1x128xf32>
      %448 = arith.addf %447, %446 : vector<1x128xf32>
      %449 = arith.divf %447, %448 : vector<1x128xf32>
      %450 = vector.extract_strided_slice %437 {offsets = [0, 256], sizes = [1, 128], strides = [1, 1]} : vector<1x512xf32> to vector<1x128xf32>
      %451 = math.tanh %450 : vector<1x128xf32>
      %452 = vector.extract_strided_slice %437 {offsets = [0, 384], sizes = [1, 128], strides = [1, 1]} : vector<1x512xf32> to vector<1x128xf32>
      %453 = arith.negf %452 : vector<1x128xf32>
      %454 = math.exp %453 : vector<1x128xf32>
      %cst_110 = arith.constant 1.000000e+00 : f32
      %455 = vector.broadcast %cst_110 : f32 to vector<1x128xf32>
      %456 = arith.addf %455, %454 : vector<1x128xf32>
      %457 = arith.divf %455, %456 : vector<1x128xf32>
      %458 = arith.mulf %449, %431 : vector<1x128xf32>
      %459 = arith.mulf %443, %451 : vector<1x128xf32>
      %460 = arith.addf %458, %459 : vector<1x128xf32>
      %461 = math.tanh %460 : vector<1x128xf32>
      %462 = arith.mulf %457, %461 : vector<1x128xf32>
      %c6_111 = arith.constant 6 : index
      %c0_112 = arith.constant 0 : index
      %463 = vector.load %arg11[%c6_111, %c0_112] : memref<8x128xf32, #tpu.memory_space<vmem>>, vector<1x128xf32>
      tpu.vector_store %arg11[%c6_111, %c0_112], %462 {strides = array<i32>} : memref<8x128xf32, #tpu.memory_space<vmem>>, vector<1x128xf32>,
      %464 = vector.extract_strided_slice %258 {offsets = [7, 0], sizes = [1, 512], strides = [1, 1]} : vector<8x512xf32> to vector<1x512xf32>
      %cst_113 = arith.constant dense<0.000000e+00> : vector<1x512xf32>
      %465 = tpu.matmul %462, %254, %cst_113 {dimension_numbers = #tpu.dot_dimension_numbers<[1], [0], [0], [1], [0, 0, 1, 1], [], []>} : vector<1x128xf32>, vector<128x512xf32>, vector<1x512xf32> -> vector<1x512xf32>
      %466 = arith.addf %464, %465 : vector<1x512xf32>
      %467 = vector.extract_strided_slice %466 {offsets = [0, 0], sizes = [1, 128], strides = [1, 1]} : vector<1x512xf32> to vector<1x128xf32>
      %468 = arith.negf %467 : vector<1x128xf32>
      %469 = math.exp %468 : vector<1x128xf32>
      %cst_114 = arith.constant 1.000000e+00 : f32
      %470 = vector.broadcast %cst_114 : f32 to vector<1x128xf32>
      %471 = arith.addf %470, %469 : vector<1x128xf32>
      %472 = arith.divf %470, %471 : vector<1x128xf32>
      %473 = vector.extract_strided_slice %466 {offsets = [0, 128], sizes = [1, 128], strides = [1, 1]} : vector<1x512xf32> to vector<1x128xf32>
      %474 = arith.negf %473 : vector<1x128xf32>
      %475 = math.exp %474 : vector<1x128xf32>
      %cst_115 = arith.constant 1.000000e+00 : f32
      %476 = vector.broadcast %cst_115 : f32 to vector<1x128xf32>
      %477 = arith.addf %476, %475 : vector<1x128xf32>
      %478 = arith.divf %476, %477 : vector<1x128xf32>
      %479 = vector.extract_strided_slice %466 {offsets = [0, 256], sizes = [1, 128], strides = [1, 1]} : vector<1x512xf32> to vector<1x128xf32>
      %480 = math.tanh %479 : vector<1x128xf32>
      %481 = vector.extract_strided_slice %466 {offsets = [0, 384], sizes = [1, 128], strides = [1, 1]} : vector<1x512xf32> to vector<1x128xf32>
      %482 = arith.negf %481 : vector<1x128xf32>
      %483 = math.exp %482 : vector<1x128xf32>
      %cst_116 = arith.constant 1.000000e+00 : f32
      %484 = vector.broadcast %cst_116 : f32 to vector<1x128xf32>
      %485 = arith.addf %484, %483 : vector<1x128xf32>
      %486 = arith.divf %484, %485 : vector<1x128xf32>
      %487 = arith.mulf %478, %460 : vector<1x128xf32>
      %488 = arith.mulf %472, %480 : vector<1x128xf32>
      %489 = arith.addf %487, %488 : vector<1x128xf32>
      %490 = math.tanh %489 : vector<1x128xf32>
      %491 = arith.mulf %486, %490 : vector<1x128xf32>
      %c7_117 = arith.constant 7 : index
      %c0_118 = arith.constant 0 : index
      %492 = vector.load %arg11[%c7_117, %c0_118] : memref<8x128xf32, #tpu.memory_space<vmem>>, vector<1x128xf32>
      tpu.vector_store %arg11[%c7_117, %c0_118], %491 {strides = array<i32>} : memref<8x128xf32, #tpu.memory_space<vmem>>, vector<1x128xf32>,
    } else {
    }
    %c0 = arith.constant 0 : index
    %c0_1 = arith.constant 0 : index
    %3 = vector.load %arg11[%c0, %c0_1] : memref<8x128xf32, #tpu.memory_space<vmem>>, vector<8x128xf32>
    %4 = arith.truncf %3 : vector<8x128xf32> to vector<8x128xbf16>
    %c0_2 = arith.constant 0 : index
    %c0_3 = arith.constant 0 : index
    %5 = vector.load %arg8[%c0_2, %c0_3] : memref<128x128xbf16, #tpu.memory_space<vmem>>, vector<128x128xbf16>
    %cst = arith.constant dense<0.000000e+00> : vector<8x128xf32>
    %6 = tpu.matmul %4, %5, %cst {dimension_numbers = #tpu.dot_dimension_numbers<[1], [0], [0], [1], [0, 0, 1, 1], [], []>} : vector<8x128xbf16>, vector<128x128xbf16>, vector<8x128xf32> -> vector<8x128xf32>
    %c0_4 = arith.constant 0 : index
    %c0_5 = arith.constant 0 : index
    %7 = vector.load %arg9[%c0_4, %c0_5] : memref<1x128xf32, #tpu.memory_space<vmem>>, vector<1x128xf32>
    %8 = vector.broadcast %7 : vector<1x128xf32> to vector<8x128xf32>
    %9 = arith.addf %6, %8 : vector<8x128xf32>
    %c0_6 = arith.constant 0 : index
    %c0_7 = arith.constant 0 : index
    %10 = vector.load %arg10[%c0_6, %c0_7] : memref<8x128xf32, #tpu.memory_space<vmem>>, vector<8x128xf32>
    tpu.vector_store %arg10[%c0_6, %c0_7], %9 {strides = array<i32>} : memref<8x128xf32, #tpu.memory_space<vmem>>, vector<8x128xf32>,
    return
  }
  func.func @transform_0(%arg0: i32) -> (i32, i32) {
    %c0_i32 = arith.constant 0 : i32
    %c0_i32_0 = arith.constant 0 : i32
    %c0_i32_1 = arith.constant 0 : i32
    return %c0_i32, %c0_i32_0 : i32, i32
  }
  func.func @transform_1(%arg0: i32) -> (i32, i32) {
    %c0_i32 = arith.constant 0 : i32
    %c0_i32_0 = arith.constant 0 : i32
    %c0_i32_1 = arith.constant 0 : i32
    return %c0_i32, %c0_i32_0 : i32, i32
  }
  func.func @transform_2(%arg0: i32) -> (i32, i32) {
    %c0_i32 = arith.constant 0 : i32
    %c0_i32_0 = arith.constant 0 : i32
    %c0_i32_1 = arith.constant 0 : i32
    return %c0_i32, %c0_i32_0 : i32, i32
  }
  func.func @transform_3(%arg0: i32) -> (i32, i32) {
    %c0_i32 = arith.constant 0 : i32
    %c0_i32_0 = arith.constant 0 : i32
    %c0_i32_1 = arith.constant 0 : i32
    return %c0_i32, %c0_i32_0 : i32, i32
  }
  func.func @transform_4(%arg0: i32) -> (i32, i32) {
    %c0_i32 = arith.constant 0 : i32
    %c0_i32_0 = arith.constant 0 : i32
    %c0_i32_1 = arith.constant 0 : i32
    return %c0_i32, %c0_i32_0 : i32, i32
  }
  func.func @transform_5(%arg0: i32) -> (i32, i32) {
    %c0_i32 = arith.constant 0 : i32
    %c0_i32_0 = arith.constant 0 : i32
    %c0_i32_1 = arith.constant 0 : i32
    return %c0_i32, %c0_i32_0 : i32, i32
  }
  func.func @transform_6(%arg0: i32) -> (i32, i32) {
    %c0_i32 = arith.constant 0 : i32
    %c0_i32_0 = arith.constant 0 : i32
    %c0_i32_1 = arith.constant 0 : i32
    return %c0_i32, %c0_i32_0 : i32, i32
  }
  func.func @transform_7(%arg0: i32) -> (i32, i32) {
    %c0_i32 = arith.constant 0 : i32
    %c0_i32_0 = arith.constant 0 : i32
    return %c0_i32, %arg0 : i32, i32
  }
  func.func @transform_8(%arg0: i32) -> (i32, i32) {
    %c0_i32 = arith.constant 0 : i32
    %c0_i32_0 = arith.constant 0 : i32
    return %c0_i32, %arg0 : i32, i32
  }
  func.func @transform_9(%arg0: i32) -> (i32, i32) {
    %c0_i32 = arith.constant 0 : i32
    %c0_i32_0 = arith.constant 0 : i32
    return %c0_i32, %arg0 : i32, i32
  }
}

</mosaic_0001>

<llo_original>
// kernel: decoder_rnn_forward.1
$region0: #{decoder_rnn_forward.1}
  #allocation0 [shape = 'u32[]', space=smem, size = 0x4, offset = 0x4, fixed_abs, tag = 'smem constant byte address 0x4 - core index']
  #allocation1 [shape = 'u32[144,128]{1,0:T(1,128)}', space=vmem, size = 0x12000, scoped, tag = 'internal scratch']
  #allocation2 [shape = 'f32[8,128]{1,0:T(8,128)}', space=vmem, size = 0x1000, scoped, tag = 'scratch operand']
  %s0 = inlined_call_operand.vmem [shape: f32[8,32], index: 0, kind: input, shape index: {}]
  %s1 = inlined_call_operand.vmem [shape: f32[32,512], index: 1, kind: input, shape index: {}]
  %s2 = inlined_call_operand.hbm [shape: f32[128,512], index: 2, kind: input, shape index: {}]
  %s3 = inlined_call_operand.vmem [shape: f32[1,512], index: 3, kind: input, shape index: {}]
  %s4 = inlined_call_operand.hbm [shape: f32[128,512], index: 4, kind: input, shape index: {}]
  %s5 = inlined_call_operand.hbm [shape: f32[128,512], index: 5, kind: input, shape index: {}]
  %s6 = inlined_call_operand.vmem [shape: f32[1,512], index: 6, kind: input, shape index: {}]
  %s7 = inlined_call_operand.vmem [shape: bf16[128,128], index: 7, kind: input, shape index: {}]
  %s8 = inlined_call_operand.vmem [shape: f32[1,128], index: 8, kind: input, shape index: {}]
  %s9 = inlined_call_operand.hbm [shape: f32[8,128], index: 9, kind: output, shape index: {}]
  %s10 = sld [smem:[#allocation0]]
  $region62: #{decoder_rnn_forward.1} parent=0
    _
  %s12 = ssub.s32 1, %s10
  %s13 = scalar_select 0, %s12, %s10
  $region1: #{decoder_rnn_forward.1} parent=0
    #allocation3 [shape = 'u8[262144]{0}', space=vmem, size = 0x40000, scoped, tag = 'input window, operand 2, single buffered']
    #allocation4 [shape = 's32[1]{0}', space=sflag, size = 0x4, scoped, tag = 'scoped memory for decoder_rnn_forward.1']
    #allocation5 [shape = 's32[1]{0}', space=sflag, size = 0x4, scoped, tag = 'scoped memory for decoder_rnn_forward.1']
    #allocation6 [shape = 'u8[262144]{0}', space=vmem, size = 0x40000, scoped, tag = 'input window, operand 4, single buffered']
    #allocation7 [shape = 's32[1]{0}', space=sflag, size = 0x4, scoped, tag = 'scoped memory for decoder_rnn_forward.1']
    #allocation8 [shape = 'u8[262144]{0}', space=vmem, size = 0x40000, scoped, tag = 'input window, operand 5, single buffered']
    #allocation9 [shape = 'u8[4096]{0}', space=vmem, size = 0x1000, scoped, tag = 'output window, operand 0, single buffered']
    %14 = vsyncpa [#allocation4], 0
    %15 = vsyncpa [#allocation7], 0
    %16 = vsyncpa [#allocation5], 0
    // Predicated region
    $region2: #{decoder_rnn_forward.1} parent=1 // pred_check
      _
    $region3: #{decoder_rnn_forward.1} parent=1 // pred_check_branch
      %18 = sbr.rel (0) target = $region5
    $region4: #{decoder_rnn_forward.1} parent=1 // pred_region
      _
    $region5: #{decoder_rnn_forward.1} parent=1 // pred_fallthru
      _
    // Predicated region
    $region6: #{decoder_rnn_forward.1} parent=1 // pred_check
      _
    $region7: #{decoder_rnn_forward.1} parent=1 // pred_check_branch
      %20 = sbr.rel (0) target = $region9
    $region8: #{decoder_rnn_forward.1} parent=1 // pred_region
      _
    $region9: #{decoder_rnn_forward.1} parent=1 // pred_fallthru
      _
    // Predicated region
    $region10: #{decoder_rnn_forward.1} parent=1 // pred_check
      _
    $region11: #{decoder_rnn_forward.1} parent=1 // pred_check_branch
      %22 = sbr.rel (0) target = $region13
    $region12: #{decoder_rnn_forward.1} parent=1 // pred_region
      %s24 = ssub.s32 8192, 8192
      %25 = vsyncadd [#allocation4], %s24
      %s26 = sshll.u32 [#allocation3], 4
      %s27 = int_to_ptr.vmem [resolvable:$true] %s26
      %32 = dma.hbm_to_vmem [thread:$0]  %s2, 8192, %s27, [#allocation4], 512, 512, 32
    $region13: #{decoder_rnn_forward.1} parent=1 // pred_fallthru
      _
    // Predicated region
    $region14: #{decoder_rnn_forward.1} parent=1 // pred_check
      _
    $region15: #{decoder_rnn_forward.1} parent=1 // pred_check_branch
      %34 = sbr.rel (0) target = $region17
    $region16: #{decoder_rnn_forward.1} parent=1 // pred_region
      _
    $region17: #{decoder_rnn_forward.1} parent=1 // pred_fallthru
      _
    // Predicated region
    $region18: #{decoder_rnn_forward.1} parent=1 // pred_check
      _
    $region19: #{decoder_rnn_forward.1} parent=1 // pred_check_branch
      %36 = sbr.rel (0) target = $region21
    $region20: #{decoder_rnn_forward.1} parent=1 // pred_region
      %s38 = ssub.s32 8192, 8192
      %39 = vsyncadd [#allocation7], %s38
      %s40 = sshll.u32 [#allocation6], 4
      %s41 = int_to_ptr.vmem [resolvable:$true] %s40
      %46 = dma.hbm_to_vmem [thread:$0]  %s4, 8192, %s41, [#allocation7], 512, 512, 32
    $region21: #{decoder_rnn_forward.1} parent=1 // pred_fallthru
      _
    // Predicated region
    $region22: #{decoder_rnn_forward.1} parent=1 // pred_check
      _
    $region23: #{decoder_rnn_forward.1} parent=1 // pred_check_branch
      %48 = sbr.rel (0) target = $region25
    $region24: #{decoder_rnn_forward.1} parent=1 // pred_region
      %s50 = ssub.s32 8192, 8192
      %51 = vsyncadd [#allocation7], %s50
      %s52 = sshll.u32 [#allocation8], 4
      %s53 = int_to_ptr.vmem [resolvable:$true] %s52
      %58 = dma.hbm_to_vmem [thread:$0]  %s5, 8192, %s53, [#allocation7], 512, 512, 32
    $region25: #{decoder_rnn_forward.1} parent=1 // pred_fallthru
      _
    // Predicated region
    $region26: #{decoder_rnn_forward.1} parent=1 // pred_check
      _
    $region27: #{decoder_rnn_forward.1} parent=1 // pred_check_branch
      %60 = sbr.rel (0) target = $region29
    $region28: #{decoder_rnn_forward.1} parent=1 // pred_region
      _
    $region29: #{decoder_rnn_forward.1} parent=1 // pred_fallthru
      _
    // Predicated region
    $region30: #{decoder_rnn_forward.1} parent=1 // pred_check
      _
    $region31: #{decoder_rnn_forward.1} parent=1 // pred_check_branch
      %62 = sbr.rel (0) target = $region33
    $region32: #{decoder_rnn_forward.1} parent=1 // pred_region
      _
    $region33: #{decoder_rnn_forward.1} parent=1 // pred_fallthru
      _
    // Predicated region
    $region34: #{decoder_rnn_forward.1} parent=1 // pred_check
      _
    $region35: #{decoder_rnn_forward.1} parent=1 // pred_check_branch
      %64 = sbr.rel (0) target = $region37
    $region36: #{decoder_rnn_forward.1} parent=1 // pred_region
      _
    $region37: #{decoder_rnn_forward.1} parent=1 // pred_fallthru
      _
    // Predicated region
    $region38: #{decoder_rnn_forward.1} parent=1 // pred_check
      _
    $region39: #{decoder_rnn_forward.1} parent=1 // pred_check_branch
      %66 = sbr.rel (0) target = $region41
    $region40: #{decoder_rnn_forward.1} parent=1 // pred_region
      %67 = dma.done [#allocation4], 8192
    $region41: #{decoder_rnn_forward.1} parent=1 // pred_fallthru
      _
    // Predicated region
    $region42: #{decoder_rnn_forward.1} parent=1 // pred_check
      _
    $region43: #{decoder_rnn_forward.1} parent=1 // pred_check_branch
      %69 = sbr.rel (0) target = $region45
    $region44: #{decoder_rnn_forward.1} parent=1 // pred_region
      %70 = dma.done [#allocation7], 8192
    $region45: #{decoder_rnn_forward.1} parent=1 // pred_fallthru
      _
    // Predicated region
    $region46: #{decoder_rnn_forward.1} parent=1 // pred_check
      _
    $region47: #{decoder_rnn_forward.1} parent=1 // pred_check_branch
      %72 = sbr.rel (0) target = $region49
    $region48: #{decoder_rnn_forward.1} parent=1 // pred_region
      %73 = dma.done [#allocation7], 8192
    $region49: #{decoder_rnn_forward.1} parent=1 // pred_fallthru
      _
    %p75 = scmp.eq.s32.totalorder 0, 0
    // Predicated region
    $region50: #{decoder_rnn_forward.1} parent=1 // pred_check
      %p76 = pneg %p75
    $region51: #{decoder_rnn_forward.1} parent=1 // pred_check_branch
      %78 = sbr.rel (%p76) target = $region53
    $region52: #{decoder_rnn_forward.1} parent=1 // pred_region
      %v79 = vld [vmem:[%s0] sm:$0xff]
      %v80 = vld [vmem:[%s1] sm:$0xff]
      %v81 = vld [vmem:[%s1 + $0x8] sm:$0xff]
      %v82 = vld [vmem:[%s1 + $0x10] sm:$0xff]
      %v83 = vld [vmem:[%s1 + $0x18] sm:$0xff]
      %v84 = vld [vmem:[%s1 + $0x20] sm:$0xff]
      %v85 = vld [vmem:[%s1 + $0x28] sm:$0xff]
      %v86 = vld [vmem:[%s1 + $0x30] sm:$0xff]
      %v87 = vld [vmem:[%s1 + $0x38] sm:$0xff]
      %v88 = vld [vmem:[%s1 + $0x40] sm:$0xff]
      %v89 = vld [vmem:[%s1 + $0x48] sm:$0xff]
      %v90 = vld [vmem:[%s1 + $0x50] sm:$0xff]
      %v91 = vld [vmem:[%s1 + $0x58] sm:$0xff]
      %v92 = vld [vmem:[%s1 + $0x60] sm:$0xff]
      %v93 = vld [vmem:[%s1 + $0x68] sm:$0xff]
      %v94 = vld [vmem:[%s1 + $0x70] sm:$0xff]
      %v95 = vld [vmem:[%s1 + $0x78] sm:$0xff]
      %v96 = vld [vmem:[#allocation3] sm:$0xff]
      %v97 = vld [vmem:[#allocation3 + $0x8] sm:$0xff]
      %v98 = vld [vmem:[#allocation3 + $0x10] sm:$0xff]
      %v99 = vld [vmem:[#allocation3 + $0x18] sm:$0xff]
      %v100 = vld [vmem:[#allocation3 + $0x20] sm:$0xff]
      %v101 = vld [vmem:[#allocation3 + $0x28] sm:$0xff]
      %v102 = vld [vmem:[#allocation3 + $0x30] sm:$0xff]
      %v103 = vld [vmem:[#allocation3 + $0x38] sm:$0xff]
      %v104 = vld [vmem:[#allocation3 + $0x40] sm:$0xff]
      %v105 = vld [vmem:[#allocation3 + $0x48] sm:$0xff]
      %v106 = vld [vmem:[#allocation3 + $0x50] sm:$0xff]
      %v107 = vld [vmem:[#allocation3 + $0x58] sm:$0xff]
      %v108 = vld [vmem:[#allocation3 + $0x60] sm:$0xff]
      %v109 = vld [vmem:[#allocation3 + $0x68] sm:$0xff]
      %v110 = vld [vmem:[#allocation3 + $0x70] sm:$0xff]
      %v111 = vld [vmem:[#allocation3 + $0x78] sm:$0xff]
      %v112 = vld [vmem:[#allocation3 + $0x80] sm:$0xff]
      %v113 = vld [vmem:[#allocation3 + $0x88] sm:$0xff]
      %v114 = vld [vmem:[#allocation3 + $0x90] sm:$0xff]
      %v115 = vld [vmem:[#allocation3 + $0x98] sm:$0xff]
      %v116 = vld [vmem:[#allocation3 + $0xa0] sm:$0xff]
      %v117 = vld [vmem:[#allocation3 + $0xa8] sm:$0xff]
      %v118 = vld [vmem:[#allocation3 + $0xb0] sm:$0xff]
      %v119 = vld [vmem:[#allocation3 + $0xb8] sm:$0xff]
      %v120 = vld [vmem:[#allocation3 + $0xc0] sm:$0xff]
      %v121 = vld [vmem:[#allocation3 + $0xc8] sm:$0xff]
      %v122 = vld [vmem:[#allocation3 + $0xd0] sm:$0xff]
      %v123 = vld [vmem:[#allocation3 + $0xd8] sm:$0xff]
      %v124 = vld [vmem:[#allocation3 + $0xe0] sm:$0xff]
      %v125 = vld [vmem:[#allocation3 + $0xe8] sm:$0xff]
      %v126 = vld [vmem:[#allocation3 + $0xf0] sm:$0xff]
      %v127 = vld [vmem:[#allocation3 + $0xf8] sm:$0xff]
      %v128 = vld [vmem:[#allocation3 + $0x100] sm:$0xff]
      %v129 = vld [vmem:[#allocation3 + $0x108] sm:$0xff]
      %v130 = vld [vmem:[#allocation3 + $0x110] sm:$0xff]
      %v131 = vld [vmem:[#allocation3 + $0x118] sm:$0xff]
      %v132 = vld [vmem:[#allocation3 + $0x120] sm:$0xff]
      %v133 = vld [vmem:[#allocation3 + $0x128] sm:$0xff]
      %v134 = vld [vmem:[#allocation3 + $0x130] sm:$0xff]
      %v135 = vld [vmem:[#allocation3 + $0x138] sm:$0xff]
      %v136 = vld [vmem:[#allocation3 + $0x140] sm:$0xff]
      %v137 = vld [vmem:[#allocation3 + $0x148] sm:$0xff]
      %v138 = vld [vmem:[#allocation3 + $0x150] sm:$0xff]
      %v139 = vld [vmem:[#allocation3 + $0x158] sm:$0xff]
      %v140 = vld [vmem:[#allocation3 + $0x160] sm:$0xff]
      %v141 = vld [vmem:[#allocation3 + $0x168] sm:$0xff]
      %v142 = vld [vmem:[#allocation3 + $0x170] sm:$0xff]
      %v143 = vld [vmem:[#allocation3 + $0x178] sm:$0xff]
      %v144 = vld [vmem:[#allocation3 + $0x180] sm:$0xff]
      %v145 = vld [vmem:[#allocation3 + $0x188] sm:$0xff]
      %v146 = vld [vmem:[#allocation3 + $0x190] sm:$0xff]
      %v147 = vld [vmem:[#allocation3 + $0x198] sm:$0xff]
      %v148 = vld [vmem:[#allocation3 + $0x1a0] sm:$0xff]
      %v149 = vld [vmem:[#allocation3 + $0x1a8] sm:$0xff]
      %v150 = vld [vmem:[#allocation3 + $0x1b0] sm:$0xff]
      %v151 = vld [vmem:[#allocation3 + $0x1b8] sm:$0xff]
      %v152 = vld [vmem:[#allocation3 + $0x1c0] sm:$0xff]
      %v153 = vld [vmem:[#allocation3 + $0x1c8] sm:$0xff]
      %v154 = vld [vmem:[#allocation3 + $0x1d0] sm:$0xff]
      %v155 = vld [vmem:[#allocation3 + $0x1d8] sm:$0xff]
      %v156 = vld [vmem:[#allocation3 + $0x1e0] sm:$0xff]
      %v157 = vld [vmem:[#allocation3 + $0x1e8] sm:$0xff]
      %v158 = vld [vmem:[#allocation3 + $0x1f0] sm:$0xff]
      %v159 = vld [vmem:[#allocation3 + $0x1f8] sm:$0xff]
      %v160 = vld [vmem:[%s3] sm:$0xf]
      %v162 = vlaneseq
      %v163 = vshrl.u32 %v162, 7
      %v164 = vsub.s32 0, %v163
      %v165 = vrot.slane %v160, %v164
      %v166 = vlaneseq
      %v167 = vshrl.u32 %v166, 7
      %v168 = vsub.s32 1, %v167
      %v169 = vrot.slane %v160, %v168
      %v170 = vlaneseq
      %v171 = vshrl.u32 %v170, 7
      %v172 = vsub.s32 2, %v171
      %v173 = vrot.slane %v160, %v172
      %v174 = vlaneseq
      %v175 = vshrl.u32 %v174, 7
      %v176 = vsub.s32 3, %v175
      %v177 = vrot.slane %v160, %v176
      %vm182 = vcmask 261120
      %v184 = vsel %vm182, %v79, 0
      %186 = vmatprep.subr.mxu0 0.0
      %187 = vmatpush1.msra.mxu0 0.0
      %188 = vmatprep.subr.mxu0 0.0
      %189 = vmatpush1.msra.mxu0 0.0
      %190 = vmatprep.subr.mxu0 0.0
      %191 = vmatpush1.msra.mxu0 0.0
      %192 = vmatprep.subr.mxu0 0.0
      %193 = vmatpush1.msra.mxu0 0.0
      %194 = vmatprep.subr.mxu0 0.0
      %195 = vmatpush1.msra.mxu0 0.0
      %196 = vmatprep.subr.mxu0 0.0
      %197 = vmatpush1.msra.mxu0 0.0
      %198 = vmatprep.subr.mxu0 0.0
      %199 = vmatpush1.msra.mxu0 0.0
      %200 = vmatprep.subr.mxu0 0.0
      %201 = vmatpush1.msra.mxu0 0.0
      %202 = vmatprep.subr.mxu0 0.0
      %203 = vmatpush1.msra.mxu0 0.0
      %204 = vmatprep.subr.mxu0 0.0
      %205 = vmatpush1.msra.mxu0 0.0
      %206 = vmatprep.subr.mxu0 0.0
      %207 = vmatpush1.msra.mxu0 0.0
      %208 = vmatprep.subr.mxu0 0.0
      %209 = vmatpush1.msra.mxu0 0.0
      %210 = vmatprep.subr.mxu0 %v93
      %211 = vmatpush1.msra.mxu0 %v92
      %212 = vmatprep.subr.mxu0 %v89
      %213 = vmatpush1.msra.mxu0 %v88
      %214 = vmatprep.subr.mxu0 %v85
      %215 = vmatpush1.msra.mxu0 %v84
      %216 = vmatprep.subr.mxu0 %v81
      %217 = vmatpush1.msra.mxu0 %v80
      %218 = vmatprep.subr.mxu0 0.0
      %219 = vmatpush2.msra.mxu0 0.0
      %220 = vmatprep.subr.mxu0 0.0
      %221 = vmatpush2.msra.mxu0 0.0
      %222 = vmatprep.subr.mxu0 0.0
      %223 = vmatpush2.msra.mxu0 0.0
      %224 = vmatprep.subr.mxu0 0.0
      %225 = vmatpush2.msra.mxu0 0.0
      %226 = vmatprep.subr.mxu0 0.0
      %227 = vmatpush2.msra.mxu0 0.0
      %228 = vmatprep.subr.mxu0 0.0
      %229 = vmatpush2.msra.mxu0 0.0
      %230 = vmatprep.subr.mxu0 0.0
      %231 = vmatpush2.msra.mxu0 0.0
      %232 = vmatprep.subr.mxu0 0.0
      %233 = vmatpush2.msra.mxu0 0.0
      %234 = vmatprep.subr.mxu0 0.0
      %235 = vmatpush2.msra.mxu0 0.0
      %236 = vmatprep.subr.mxu0 0.0
      %237 = vmatpush2.msra.mxu0 0.0
      %238 = vmatprep.subr.mxu0 0.0
      %239 = vmatpush2.msra.mxu0 0.0
      %240 = vmatprep.subr.mxu0 0.0
      %241 = vmatpush2.msra.mxu0 0.0
      %242 = vmatprep.subr.mxu0 0.0
      %243 = vmatpush2.msra.mxu0 0.0
      %244 = vmatprep.subr.mxu0 0.0
      %245 = vmatpush2.msra.mxu0 0.0
      %246 = vmatprep.subr.mxu0 0.0
      %247 = vmatpush2.msra.mxu0 0.0
      %248 = vmatprep.subr.mxu0 0.0
      %249 = vmatpush2.msra.mxu0 0.0
      %250 = vmatprep.mubr.f32.mxu0 0.0
      %251 = vmatmul.mubr.f32.gmra.mxu0 %v184
      %v252 = vpop.f32.mrf.mxu0
      %v253 = vadd.f32 %v165, %v252
      %v254 = vpop.f32.mrf.mxu0
      %v255 = vadd.f32 %v169, %v254
      %256 = vdwg.mxu0
      %257 = vmatprep.subr.mxu0 0.0
      %258 = vmatpush1.msra.mxu0 0.0
      %259 = vmatprep.subr.mxu0 0.0
      %260 = vmatpush1.msra.mxu0 0.0
      %261 = vmatprep.subr.mxu0 0.0
      %262 = vmatpush1.msra.mxu0 0.0
      %263 = vmatprep.subr.mxu0 0.0
      %264 = vmatpush1.msra.mxu0 0.0
      %265 = vmatprep.subr.mxu0 0.0
      %266 = vmatpush1.msra.mxu0 0.0
      %267 = vmatprep.subr.mxu0 0.0
      %268 = vmatpush1.msra.mxu0 0.0
      %269 = vmatprep.subr.mxu0 0.0
      %270 = vmatpush1.msra.mxu0 0.0
      %271 = vmatprep.subr.mxu0 0.0
      %272 = vmatpush1.msra.mxu0 0.0
      %273 = vmatprep.subr.mxu0 0.0
      %274 = vmatpush1.msra.mxu0 0.0
      %275 = vmatprep.subr.mxu0 0.0
      %276 = vmatpush1.msra.mxu0 0.0
      %277 = vmatprep.subr.mxu0 0.0
      %278 = vmatpush1.msra.mxu0 0.0
      %279 = vmatprep.subr.mxu0 0.0
      %280 = vmatpush1.msra.mxu0 0.0
      %281 = vmatprep.subr.mxu0 %v95
      %282 = vmatpush1.msra.mxu0 %v94
      %283 = vmatprep.subr.mxu0 %v91
      %284 = vmatpush1.msra.mxu0 %v90
      %285 = vmatprep.subr.mxu0 %v87
      %286 = vmatpush1.msra.mxu0 %v86
      %287 = vmatprep.subr.mxu0 %v83
      %288 = vmatpush1.msra.mxu0 %v82
      %289 = vmatprep.subr.mxu0 0.0
      %290 = vmatpush2.msra.mxu0 0.0
      %291 = vmatprep.subr.mxu0 0.0
      %292 = vmatpush2.msra.mxu0 0.0
      %293 = vmatprep.subr.mxu0 0.0
      %294 = vmatpush2.msra.mxu0 0.0
      %295 = vmatprep.subr.mxu0 0.0
      %296 = vmatpush2.msra.mxu0 0.0
      %297 = vmatprep.subr.mxu0 0.0
      %298 = vmatpush2.msra.mxu0 0.0
      %299 = vmatprep.subr.mxu0 0.0
      %300 = vmatpush2.msra.mxu0 0.0
      %301 = vmatprep.subr.mxu0 0.0
      %302 = vmatpush2.msra.mxu0 0.0
      %303 = vmatprep.subr.mxu0 0.0
      %304 = vmatpush2.msra.mxu0 0.0
      %305 = vmatprep.subr.mxu0 0.0
      %306 = vmatpush2.msra.mxu0 0.0
      %307 = vmatprep.subr.mxu0 0.0
      %308 = vmatpush2.msra.mxu0 0.0
      %309 = vmatprep.subr.mxu0 0.0
      %310 = vmatpush2.msra.mxu0 0.0
      %311 = vmatprep.subr.mxu0 0.0
      %312 = vmatpush2.msra.mxu0 0.0
      %313 = vmatprep.subr.mxu0 0.0
      %314 = vmatpush2.msra.mxu0 0.0
      %315 = vmatprep.subr.mxu0 0.0
      %316 = vmatpush2.msra.mxu0 0.0
      %317 = vmatprep.subr.mxu0 0.0
      %318 = vmatpush2.msra.mxu0 0.0
      %319 = vmatprep.subr.mxu0 0.0
      %320 = vmatpush2.msra.mxu0 0.0
      %321 = vmatprep.mubr.f32.mxu0 0.0
      %322 = vmatmul.mubr.f32.gmra.mxu0 %v184
      %v323 = vpop.f32.mrf.mxu0
      %v324 = vadd.f32 %v173, %v323
      %v325 = vpop.f32.mrf.mxu0
      %v326 = vadd.f32 %v177, %v325
      %327 = vdwg.mxu0
      %328 = vmatprep.subr.mxu0 %v157
      %329 = vmatpush1.msra.mxu0 %v156
      %330 = vmatprep.subr.mxu0 %v153
      %331 = vmatpush1.msra.mxu0 %v152
      %332 = vmatprep.subr.mxu0 %v149
      %333 = vmatpush1.msra.mxu0 %v148
      %334 = vmatprep.subr.mxu0 %v145
      %335 = vmatpush1.msra.mxu0 %v144
      %336 = vmatprep.subr.mxu0 %v141
      %337 = vmatpush1.msra.mxu0 %v140
      %338 = vmatprep.subr.mxu0 %v137
      %339 = vmatpush1.msra.mxu0 %v136
      %340 = vmatprep.subr.mxu0 %v133
      %341 = vmatpush1.msra.mxu0 %v132
      %342 = vmatprep.subr.mxu0 %v129
      %343 = vmatpush1.msra.mxu0 %v128
      %344 = vmatprep.subr.mxu0 %v125
      %345 = vmatpush1.msra.mxu0 %v124
      %346 = vmatprep.subr.mxu0 %v121
      %347 = vmatpush1.msra.mxu0 %v120
      %348 = vmatprep.subr.mxu0 %v117
      %349 = vmatpush1.msra.mxu0 %v116
      %350 = vmatprep.subr.mxu0 %v113
      %351 = vmatpush1.msra.mxu0 %v112
      %352 = vmatprep.subr.mxu0 %v109
      %353 = vmatpush1.msra.mxu0 %v108
      %354 = vmatprep.subr.mxu0 %v105
      %355 = vmatpush1.msra.mxu0 %v104
      %356 = vmatprep.subr.mxu0 %v101
      %357 = vmatpush1.msra.mxu0 %v100
      %358 = vmatprep.subr.mxu0 %v97
      %359 = vmatpush1.msra.mxu0 %v96
      %360 = vmatprep.subr.mxu0 0.0
      %361 = vmatpush2.msra.mxu0 0.0
      %362 = vmatprep.subr.mxu0 0.0
      %363 = vmatpush2.msra.mxu0 0.0
      %364 = vmatprep.subr.mxu0 0.0
      %365 = vmatpush2.msra.mxu0 0.0
      %366 = vmatprep.subr.mxu0 0.0
      %367 = vmatpush2.msra.mxu0 0.0
      %368 = vmatprep.subr.mxu0 0.0
      %369 = vmatpush2.msra.mxu0 0.0
      %370 = vmatprep.subr.mxu0 0.0
      %371 = vmatpush2.msra.mxu0 0.0
      %372 = vmatprep.subr.mxu0 0.0
      %373 = vmatpush2.msra.mxu0 0.0
      %374 = vmatprep.subr.mxu0 0.0
      %375 = vmatpush2.msra.mxu0 0.0
      %376 = vmatprep.subr.mxu0 0.0
      %377 = vmatpush2.msra.mxu0 0.0
      %378 = vmatprep.subr.mxu0 0.0
      %379 = vmatpush2.msra.mxu0 0.0
      %380 = vmatprep.subr.mxu0 0.0
      %381 = vmatpush2.msra.mxu0 0.0
      %382 = vmatprep.subr.mxu0 0.0
      %383 = vmatpush2.msra.mxu0 0.0
      %384 = vmatprep.subr.mxu0 0.0
      %385 = vmatpush2.msra.mxu0 0.0
      %386 = vmatprep.subr.mxu0 0.0
      %387 = vmatpush2.msra.mxu0 0.0
      %388 = vmatprep.subr.mxu0 0.0
      %389 = vmatpush2.msra.mxu0 0.0
      %390 = vmatprep.subr.mxu0 0.0
      %391 = vmatpush2.msra.mxu0 0.0
      %392 = vmatprep.mubr.f32.mxu0 0.0
      %393 = vmatmul.mubr.f32.gmra.mxu0 0.0
      %v394 = vpop.f32.mrf.mxu0
      %v395 = vadd.f32 0.0, %v394
      %v396 = vpop.f32.mrf.mxu0
      %v397 = vadd.f32 0.0, %v396
      %398 = vdwg.mxu0
      %399 = vmatprep.subr.mxu0 %v159
      %400 = vmatpush1.msra.mxu0 %v158
      %401 = vmatprep.subr.mxu0 %v155
      %402 = vmatpush1.msra.mxu0 %v154
      %403 = vmatprep.subr.mxu0 %v151
      %404 = vmatpush1.msra.mxu0 %v150
      %405 = vmatprep.subr.mxu0 %v147
      %406 = vmatpush1.msra.mxu0 %v146
      %407 = vmatprep.subr.mxu0 %v143
      %408 = vmatpush1.msra.mxu0 %v142
      %409 = vmatprep.subr.mxu0 %v139
      %410 = vmatpush1.msra.mxu0 %v138
      %411 = vmatprep.subr.mxu0 %v135
      %412 = vmatpush1.msra.mxu0 %v134
      %413 = vmatprep.subr.mxu0 %v131
      %414 = vmatpush1.msra.mxu0 %v130
      %415 = vmatprep.subr.mxu0 %v127
      %416 = vmatpush1.msra.mxu0 %v126
      %417 = vmatprep.subr.mxu0 %v123
      %418 = vmatpush1.msra.mxu0 %v122
      %419 = vmatprep.subr.mxu0 %v119
      %420 = vmatpush1.msra.mxu0 %v118
      %421 = vmatprep.subr.mxu0 %v115
      %422 = vmatpush1.msra.mxu0 %v114
      %423 = vmatprep.subr.mxu0 %v111
      %424 = vmatpush1.msra.mxu0 %v110
      %425 = vmatprep.subr.mxu0 %v107
      %426 = vmatpush1.msra.mxu0 %v106
      %427 = vmatprep.subr.mxu0 %v103
      %428 = vmatpush1.msra.mxu0 %v102
      %429 = vmatprep.subr.mxu0 %v99
      %430 = vmatpush1.msra.mxu0 %v98
      %431 = vmatprep.subr.mxu0 0.0
      %432 = vmatpush2.msra.mxu0 0.0
      %433 = vmatprep.subr.mxu0 0.0
      %434 = vmatpush2.msra.mxu0 0.0
      %435 = vmatprep.subr.mxu0 0.0
      %436 = vmatpush2.msra.mxu0 0.0
      %437 = vmatprep.subr.mxu0 0.0
      %438 = vmatpush2.msra.mxu0 0.0
      %439 = vmatprep.subr.mxu0 0.0
      %440 = vmatpush2.msra.mxu0 0.0
      %441 = vmatprep.subr.mxu0 0.0
      %442 = vmatpush2.msra.mxu0 0.0
      %443 = vmatprep.subr.mxu0 0.0
      %444 = vmatpush2.msra.mxu0 0.0
      %445 = vmatprep.subr.mxu0 0.0
      %446 = vmatpush2.msra.mxu0 0.0
      %447 = vmatprep.subr.mxu0 0.0
      %448 = vmatpush2.msra.mxu0 0.0
      %449 = vmatprep.subr.mxu0 0.0
      %450 = vmatpush2.msra.mxu0 0.0
      %451 = vmatprep.subr.mxu0 0.0
      %452 = vmatpush2.msra.mxu0 0.0
      %453 = vmatprep.subr.mxu0 0.0
      %454 = vmatpush2.msra.mxu0 0.0
      %455 = vmatprep.subr.mxu0 0.0
      %456 = vmatpush2.msra.mxu0 0.0
      %457 = vmatprep.subr.mxu0 0.0
      %458 = vmatpush2.msra.mxu0 0.0
      %459 = vmatprep.subr.mxu0 0.0
      %460 = vmatpush2.msra.mxu0 0.0
      %461 = vmatprep.subr.mxu0 0.0
      %462 = vmatpush2.msra.mxu0 0.0
      %463 = vmatprep.mubr.f32.mxu0 0.0
      %464 = vmatmul.mubr.f32.gmra.mxu0 0.0
      %v465 = vpop.f32.mrf.mxu0
      %v466 = vadd.f32 0.0, %v465
      %v467 = vpop.f32.mrf.mxu0
      %v468 = vadd.f32 0.0, %v467
      %469 = vdwg.mxu0
      %v470 = vadd.f32 %v253, %v395
      %v471 = vadd.f32 %v255, %v397
      %v472 = vadd.f32 %v324, %v466
      %v473 = vadd.f32 %v326, %v468
      %v474 = vxor.u32 %v470, 2147483648
      %v475 = vmul.f32 %v474, 1.442695
      %v476 = vpow.pop %v475
      %v477 = vadd.f32 %v476, 1.0
      %v478 = vrcp.pop %v477
      %v479 = vmul.f32 1.0, %v478
      %v480 = vxor.u32 %v471, 2147483648
      %v481 = vmul.f32 %v480, 1.442695
      %v482 = vpow.pop %v481
      %v483 = vadd.f32 %v482, 1.0
      %v484 = vrcp.pop %v483
      %v485 = vmul.f32 1.0, %v484
      %v486 = vtanh.pop %v472
      %v487 = vxor.u32 %v473, 2147483648
      %v488 = vmul.f32 %v487, 1.442695
      %v489 = vpow.pop %v488
      %v490 = vadd.f32 %v489, 1.0
      %v491 = vrcp.pop %v490
      %v492 = vmul.f32 1.0, %v491
      %v493 = vmul.f32 %v485, 0.0
      %v494 = vmul.f32 %v479, %v486
      %v495 = vadd.f32 %v493, %v494
      %v496 = vtanh.pop %v495
      %v497 = vmul.f32 %v492, %v496
      %498 = vst [vmem:[#allocation2] sm:$0x1] %v497
      %499 = vmatprep.subr.mxu0 %v157
      %500 = vmatpush1.msra.mxu0 %v156
      %501 = vmatprep.subr.mxu0 %v153
      %502 = vmatpush1.msra.mxu0 %v152
      %503 = vmatprep.subr.mxu0 %v149
      %504 = vmatpush1.msra.mxu0 %v148
      %505 = vmatprep.subr.mxu0 %v145
      %506 = vmatpush1.msra.mxu0 %v144
      %507 = vmatprep.subr.mxu0 %v141
      %508 = vmatpush1.msra.mxu0 %v140
      %509 = vmatprep.subr.mxu0 %v137
      %510 = vmatpush1.msra.mxu0 %v136
      %511 = vmatprep.subr.mxu0 %v133
      %512 = vmatpush1.msra.mxu0 %v132
      %513 = vmatprep.subr.mxu0 %v129
      %514 = vmatpush1.msra.mxu0 %v128
      %515 = vmatprep.subr.mxu0 %v125
      %516 = vmatpush1.msra.mxu0 %v124
      %517 = vmatprep.subr.mxu0 %v121
      %518 = vmatpush1.msra.mxu0 %v120
      %519 = vmatprep.subr.mxu0 %v117
      %520 = vmatpush1.msra.mxu0 %v116
      %521 = vmatprep.subr.mxu0 %v113
      %522 = vmatpush1.msra.mxu0 %v112
      %523 = vmatprep.subr.mxu0 %v109
      %524 = vmatpush1.msra.mxu0 %v108
      %525 = vmatprep.subr.mxu0 %v105
      %526 = vmatpush1.msra.mxu0 %v104
      %527 = vmatprep.subr.mxu0 %v101
      %528 = vmatpush1.msra.mxu0 %v100
      %529 = vmatprep.subr.mxu0 %v97
      %530 = vmatpush1.msra.mxu0 %v96
      %531 = vmatprep.subr.mxu0 0.0
      %532 = vmatpush2.msra.mxu0 0.0
      %533 = vmatprep.subr.mxu0 0.0
      %534 = vmatpush2.msra.mxu0 0.0
      %535 = vmatprep.subr.mxu0 0.0
      %536 = vmatpush2.msra.mxu0 0.0
      %537 = vmatprep.subr.mxu0 0.0
      %538 = vmatpush2.msra.mxu0 0.0
      %539 = vmatprep.subr.mxu0 0.0
      %540 = vmatpush2.msra.mxu0 0.0
      %541 = vmatprep.subr.mxu0 0.0
      %542 = vmatpush2.msra.mxu0 0.0
      %543 = vmatprep.subr.mxu0 0.0
      %544 = vmatpush2.msra.mxu0 0.0
      %545 = vmatprep.subr.mxu0 0.0
      %546 = vmatpush2.msra.mxu0 0.0
      %547 = vmatprep.subr.mxu0 0.0
      %548 = vmatpush2.msra.mxu0 0.0
      %549 = vmatprep.subr.mxu0 0.0
      %550 = vmatpush2.msra.mxu0 0.0
      %551 = vmatprep.subr.mxu0 0.0
      %552 = vmatpush2.msra.mxu0 0.0
      %553 = vmatprep.subr.mxu0 0.0
      %554 = vmatpush2.msra.mxu0 0.0
      %555 = vmatprep.subr.mxu0 0.0
      %556 = vmatpush2.msra.mxu0 0.0
      %557 = vmatprep.subr.mxu0 0.0
      %558 = vmatpush2.msra.mxu0 0.0
      %559 = vmatprep.subr.mxu0 0.0
      %560 = vmatpush2.msra.mxu0 0.0
      %561 = vmatprep.subr.mxu0 0.0
      %562 = vmatpush2.msra.mxu0 0.0
      %563 = vmatprep.mubr.f32.mxu0 0.0
      %564 = vmatmul.mubr.f32.gmra.mxu0 %v497
      %v565 = vpop.f32.mrf.mxu0
      %v566 = vadd.f32 0.0, %v565
      %v567 = vpop.f32.mrf.mxu0
      %v568 = vadd.f32 0.0, %v567
      %569 = vdwg.mxu0
      %570 = vmatprep.subr.mxu0 %v159
      %571 = vmatpush1.msra.mxu0 %v158
      %572 = vmatprep.subr.mxu0 %v155
      %573 = vmatpush1.msra.mxu0 %v154
      %574 = vmatprep.subr.mxu0 %v151
      %575 = vmatpush1.msra.mxu0 %v150
      %576 = vmatprep.subr.mxu0 %v147
      %577 = vmatpush1.msra.mxu0 %v146
      %578 = vmatprep.subr.mxu0 %v143
      %579 = vmatpush1.msra.mxu0 %v142
      %580 = vmatprep.subr.mxu0 %v139
      %581 = vmatpush1.msra.mxu0 %v138
      %582 = vmatprep.subr.mxu0 %v135
      %583 = vmatpush1.msra.mxu0 %v134
      %584 = vmatprep.subr.mxu0 %v131
      %585 = vmatpush1.msra.mxu0 %v130
      %586 = vmatprep.subr.mxu0 %v127
      %587 = vmatpush1.msra.mxu0 %v126
      %588 = vmatprep.subr.mxu0 %v123
      %589 = vmatpush1.msra.mxu0 %v122
      %590 = vmatprep.subr.mxu0 %v119
      %591 = vmatpush1.msra.mxu0 %v118
      %592 = vmatprep.subr.mxu0 %v115
      %593 = vmatpush1.msra.mxu0 %v114
      %594 = vmatprep.subr.mxu0 %v111
      %595 = vmatpush1.msra.mxu0 %v110
      %596 = vmatprep.subr.mxu0 %v107
      %597 = vmatpush1.msra.mxu0 %v106
      %598 = vmatprep.subr.mxu0 %v103
      %599 = vmatpush1.msra.mxu0 %v102
      %600 = vmatprep.subr.mxu0 %v99
      %601 = vmatpush1.msra.mxu0 %v98
      %602 = vmatprep.subr.mxu0 0.0
      %603 = vmatpush2.msra.mxu0 0.0
      %604 = vmatprep.subr.mxu0 0.0
      %605 = vmatpush2.msra.mxu0 0.0
      %606 = vmatprep.subr.mxu0 0.0
      %607 = vmatpush2.msra.mxu0 0.0
      %608 = vmatprep.subr.mxu0 0.0
      %609 = vmatpush2.msra.mxu0 0.0
      %610 = vmatprep.subr.mxu0 0.0
      %611 = vmatpush2.msra.mxu0 0.0
      %612 = vmatprep.subr.mxu0 0.0
      %613 = vmatpush2.msra.mxu0 0.0
      %614 = vmatprep.subr.mxu0 0.0
      %615 = vmatpush2.msra.mxu0 0.0
      %616 = vmatprep.subr.mxu0 0.0
      %617 = vmatpush2.msra.mxu0 0.0
      %618 = vmatprep.subr.mxu0 0.0
      %619 = vmatpush2.msra.mxu0 0.0
      %620 = vmatprep.subr.mxu0 0.0
      %621 = vmatpush2.msra.mxu0 0.0
      %622 = vmatprep.subr.mxu0 0.0
      %623 = vmatpush2.msra.mxu0 0.0
      %624 = vmatprep.subr.mxu0 0.0
      %625 = vmatpush2.msra.mxu0 0.0
      %626 = vmatprep.subr.mxu0 0.0
      %627 = vmatpush2.msra.mxu0 0.0
      %628 = vmatprep.subr.mxu0 0.0
      %629 = vmatpush2.msra.mxu0 0.0
      %630 = vmatprep.subr.mxu0 0.0
      %631 = vmatpush2.msra.mxu0 0.0
      %632 = vmatprep.subr.mxu0 0.0
      %633 = vmatpush2.msra.mxu0 0.0
      %634 = vmatprep.mubr.f32.mxu0 0.0
      %635 = vmatmul.mubr.f32.gmra.mxu0 %v497
      %v636 = vpop.f32.mrf.mxu0
      %v637 = vadd.f32 0.0, %v636
      %v638 = vpop.f32.mrf.mxu0
      %v639 = vadd.f32 0.0, %v638
      %640 = vdwg.mxu0
      %v645 = vrot.slane %v566, 7
      %v646 = vrot.slane %v568, 7
      %v647 = vrot.slane %v637, 7
      %v648 = vrot.slane %v639, 7
      %v653 = vadd.f32 %v253, %v645
      %v654 = vadd.f32 %v255, %v646
      %v655 = vadd.f32 %v324, %v647
      %v656 = vadd.f32 %v326, %v648
      %v657 = vxor.u32 %v653, 2147483648
      %v658 = vmul.f32 %v657, 1.442695
      %v659 = vpow.pop %v658
      %v660 = vadd.f32 %v659, 1.0
      %v661 = vrcp.pop %v660
      %v662 = vmul.f32 1.0, %v661
      %v663 = vxor.u32 %v654, 2147483648
      %v664 = vmul.f32 %v663, 1.442695
      %v665 = vpow.pop %v664
      %v666 = vadd.f32 %v665, 1.0
      %v667 = vrcp.pop %v666
      %v668 = vmul.f32 1.0, %v667
      %v669 = vtanh.pop %v655
      %v670 = vxor.u32 %v656, 2147483648
      %v671 = vmul.f32 %v670, 1.442695
      %v672 = vpow.pop %v671
      %v673 = vadd.f32 %v672, 1.0
      %v674 = vrcp.pop %v673
      %v675 = vmul.f32 1.0, %v674
      %v677 = vrot.slane %v495, 7
      %v679 = vmul.f32 %v668, %v677
      %v680 = vmul.f32 %v662, %v669
      %v681 = vadd.f32 %v679, %v680
      %v682 = vtanh.pop %v681
      %v683 = vmul.f32 %v675, %v682
      %684 = vst [vmem:[#allocation2] sm:$0x2] %v683
      %v686 = vrot.slane %v683, 1
      %688 = vmatprep.subr.mxu0 %v157
      %689 = vmatpush1.msra.mxu0 %v156
      %690 = vmatprep.subr.mxu0 %v153
      %691 = vmatpush1.msra.mxu0 %v152
      %692 = vmatprep.subr.mxu0 %v149
      %693 = vmatpush1.msra.mxu0 %v148
      %694 = vmatprep.subr.mxu0 %v145
      %695 = vmatpush1.msra.mxu0 %v144
      %696 = vmatprep.subr.mxu0 %v141
      %697 = vmatpush1.msra.mxu0 %v140
      %698 = vmatprep.subr.mxu0 %v137
      %699 = vmatpush1.msra.mxu0 %v136
      %700 = vmatprep.subr.mxu0 %v133
      %701 = vmatpush1.msra.mxu0 %v132
      %702 = vmatprep.subr.mxu0 %v129
      %703 = vmatpush1.msra.mxu0 %v128
      %704 = vmatprep.subr.mxu0 %v125
      %705 = vmatpush1.msra.mxu0 %v124
      %706 = vmatprep.subr.mxu0 %v121
      %707 = vmatpush1.msra.mxu0 %v120
      %708 = vmatprep.subr.mxu0 %v117
      %709 = vmatpush1.msra.mxu0 %v116
      %710 = vmatprep.subr.mxu0 %v113
      %711 = vmatpush1.msra.mxu0 %v112
      %712 = vmatprep.subr.mxu0 %v109
      %713 = vmatpush1.msra.mxu0 %v108
      %714 = vmatprep.subr.mxu0 %v105
      %715 = vmatpush1.msra.mxu0 %v104
      %716 = vmatprep.subr.mxu0 %v101
      %717 = vmatpush1.msra.mxu0 %v100
      %718 = vmatprep.subr.mxu0 %v97
      %719 = vmatpush1.msra.mxu0 %v96
      %720 = vmatprep.subr.mxu0 0.0
      %721 = vmatpush2.msra.mxu0 0.0
      %722 = vmatprep.subr.mxu0 0.0
      %723 = vmatpush2.msra.mxu0 0.0
      %724 = vmatprep.subr.mxu0 0.0
      %725 = vmatpush2.msra.mxu0 0.0
      %726 = vmatprep.subr.mxu0 0.0
      %727 = vmatpush2.msra.mxu0 0.0
      %728 = vmatprep.subr.mxu0 0.0
      %729 = vmatpush2.msra.mxu0 0.0
      %730 = vmatprep.subr.mxu0 0.0
      %731 = vmatpush2.msra.mxu0 0.0
      %732 = vmatprep.subr.mxu0 0.0
      %733 = vmatpush2.msra.mxu0 0.0
      %734 = vmatprep.subr.mxu0 0.0
      %735 = vmatpush2.msra.mxu0 0.0
      %736 = vmatprep.subr.mxu0 0.0
      %737 = vmatpush2.msra.mxu0 0.0
      %738 = vmatprep.subr.mxu0 0.0
      %739 = vmatpush2.msra.mxu0 0.0
      %740 = vmatprep.subr.mxu0 0.0
      %741 = vmatpush2.msra.mxu0 0.0
      %742 = vmatprep.subr.mxu0 0.0
      %743 = vmatpush2.msra.mxu0 0.0
      %744 = vmatprep.subr.mxu0 0.0
      %745 = vmatpush2.msra.mxu0 0.0
      %746 = vmatprep.subr.mxu0 0.0
      %747 = vmatpush2.msra.mxu0 0.0
      %748 = vmatprep.subr.mxu0 0.0
      %749 = vmatpush2.msra.mxu0 0.0
      %750 = vmatprep.subr.mxu0 0.0
      %751 = vmatpush2.msra.mxu0 0.0
      %752 = vmatprep.mubr.f32.mxu0 0.0
      %753 = vmatmul.mubr.f32.gmra.mxu0 %v686
      %v754 = vpop.f32.mrf.mxu0
      %v755 = vadd.f32 0.0, %v754
      %v756 = vpop.f32.mrf.mxu0
      %v757 = vadd.f32 0.0, %v756
      %758 = vdwg.mxu0
      %759 = vmatprep.subr.mxu0 %v159
      %760 = vmatpush1.msra.mxu0 %v158
      %761 = vmatprep.subr.mxu0 %v155
      %762 = vmatpush1.msra.mxu0 %v154
      %763 = vmatprep.subr.mxu0 %v151
      %764 = vmatpush1.msra.mxu0 %v150
      %765 = vmatprep.subr.mxu0 %v147
      %766 = vmatpush1.msra.mxu0 %v146
      %767 = vmatprep.subr.mxu0 %v143
      %768 = vmatpush1.msra.mxu0 %v142
      %769 = vmatprep.subr.mxu0 %v139
      %770 = vmatpush1.msra.mxu0 %v138
      %771 = vmatprep.subr.mxu0 %v135
      %772 = vmatpush1.msra.mxu0 %v134
      %773 = vmatprep.subr.mxu0 %v131
      %774 = vmatpush1.msra.mxu0 %v130
      %775 = vmatprep.subr.mxu0 %v127
      %776 = vmatpush1.msra.mxu0 %v126
      %777 = vmatprep.subr.mxu0 %v123
      %778 = vmatpush1.msra.mxu0 %v122
      %779 = vmatprep.subr.mxu0 %v119
      %780 = vmatpush1.msra.mxu0 %v118
      %781 = vmatprep.subr.mxu0 %v115
      %782 = vmatpush1.msra.mxu0 %v114
      %783 = vmatprep.subr.mxu0 %v111
      %784 = vmatpush1.msra.mxu0 %v110
      %785 = vmatprep.subr.mxu0 %v107
      %786 = vmatpush1.msra.mxu0 %v106
      %787 = vmatprep.subr.mxu0 %v103
      %788 = vmatpush1.msra.mxu0 %v102
      %789 = vmatprep.subr.mxu0 %v99
      %790 = vmatpush1.msra.mxu0 %v98
      %791 = vmatprep.subr.mxu0 0.0
      %792 = vmatpush2.msra.mxu0 0.0
      %793 = vmatprep.subr.mxu0 0.0
      %794 = vmatpush2.msra.mxu0 0.0
      %795 = vmatprep.subr.mxu0 0.0
      %796 = vmatpush2.msra.mxu0 0.0
      %797 = vmatprep.subr.mxu0 0.0
      %798 = vmatpush2.msra.mxu0 0.0
      %799 = vmatprep.subr.mxu0 0.0
      %800 = vmatpush2.msra.mxu0 0.0
      %801 = vmatprep.subr.mxu0 0.0
      %802 = vmatpush2.msra.mxu0 0.0
      %803 = vmatprep.subr.mxu0 0.0
      %804 = vmatpush2.msra.mxu0 0.0
      %805 = vmatprep.subr.mxu0 0.0
      %806 = vmatpush2.msra.mxu0 0.0
      %807 = vmatprep.subr.mxu0 0.0
      %808 = vmatpush2.msra.mxu0 0.0
      %809 = vmatprep.subr.mxu0 0.0
      %810 = vmatpush2.msra.mxu0 0.0
      %811 = vmatprep.subr.mxu0 0.0
      %812 = vmatpush2.msra.mxu0 0.0
      %813 = vmatprep.subr.mxu0 0.0
      %814 = vmatpush2.msra.mxu0 0.0
      %815 = vmatprep.subr.mxu0 0.0
      %816 = vmatpush2.msra.mxu0 0.0
      %817 = vmatprep.subr.mxu0 0.0
      %818 = vmatpush2.msra.mxu0 0.0
      %819 = vmatprep.subr.mxu0 0.0
      %820 = vmatpush2.msra.mxu0 0.0
      %821 = vmatprep.subr.mxu0 0.0
      %822 = vmatpush2.msra.mxu0 0.0
      %823 = vmatprep.mubr.f32.mxu0 0.0
      %824 = vmatmul.mubr.f32.gmra.mxu0 %v686
      %v825 = vpop.f32.mrf.mxu0
      %v826 = vadd.f32 0.0, %v825
      %v827 = vpop.f32.mrf.mxu0
      %v828 = vadd.f32 0.0, %v827
      %829 = vdwg.mxu0
      %v834 = vrot.slane %v755, 6
      %v835 = vrot.slane %v757, 6
      %v836 = vrot.slane %v826, 6
      %v837 = vrot.slane %v828, 6
      %v842 = vadd.f32 %v253, %v834
      %v843 = vadd.f32 %v255, %v835
      %v844 = vadd.f32 %v324, %v836
      %v845 = vadd.f32 %v326, %v837
      %v846 = vxor.u32 %v842, 2147483648
      %v847 = vmul.f32 %v846, 1.442695
      %v848 = vpow.pop %v847
      %v849 = vadd.f32 %v848, 1.0
      %v850 = vrcp.pop %v849
      %v851 = vmul.f32 1.0, %v850
      %v852 = vxor.u32 %v843, 2147483648
      %v853 = vmul.f32 %v852, 1.442695
      %v854 = vpow.pop %v853
      %v855 = vadd.f32 %v854, 1.0
      %v856 = vrcp.pop %v855
      %v857 = vmul.f32 1.0, %v856
      %v858 = vtanh.pop %v844
      %v859 = vxor.u32 %v845, 2147483648
      %v860 = vmul.f32 %v859, 1.442695
      %v861 = vpow.pop %v860
      %v862 = vadd.f32 %v861, 1.0
      %v863 = vrcp.pop %v862
      %v864 = vmul.f32 1.0, %v863
      %v866 = vrot.slane %v681, 7
      %v868 = vmul.f32 %v857, %v866
      %v869 = vmul.f32 %v851, %v858
      %v870 = vadd.f32 %v868, %v869
      %v871 = vtanh.pop %v870
      %v872 = vmul.f32 %v864, %v871
      %873 = vst [vmem:[#allocation2] sm:$0x4] %v872
      %v875 = vrot.slane %v872, 2
      %877 = vmatprep.subr.mxu0 %v157
      %878 = vmatpush1.msra.mxu0 %v156
      %879 = vmatprep.subr.mxu0 %v153
      %880 = vmatpush1.msra.mxu0 %v152
      %881 = vmatprep.subr.mxu0 %v149
      %882 = vmatpush1.msra.mxu0 %v148
      %883 = vmatprep.subr.mxu0 %v145
      %884 = vmatpush1.msra.mxu0 %v144
      %885 = vmatprep.subr.mxu0 %v141
      %886 = vmatpush1.msra.mxu0 %v140
      %887 = vmatprep.subr.mxu0 %v137
      %888 = vmatpush1.msra.mxu0 %v136
      %889 = vmatprep.subr.mxu0 %v133
      %890 = vmatpush1.msra.mxu0 %v132
      %891 = vmatprep.subr.mxu0 %v129
      %892 = vmatpush1.msra.mxu0 %v128
      %893 = vmatprep.subr.mxu0 %v125
      %894 = vmatpush1.msra.mxu0 %v124
      %895 = vmatprep.subr.mxu0 %v121
      %896 = vmatpush1.msra.mxu0 %v120
      %897 = vmatprep.subr.mxu0 %v117
      %898 = vmatpush1.msra.mxu0 %v116
      %899 = vmatprep.subr.mxu0 %v113
      %900 = vmatpush1.msra.mxu0 %v112
      %901 = vmatprep.subr.mxu0 %v109
      %902 = vmatpush1.msra.mxu0 %v108
      %903 = vmatprep.subr.mxu0 %v105
      %904 = vmatpush1.msra.mxu0 %v104
      %905 = vmatprep.subr.mxu0 %v101
      %906 = vmatpush1.msra.mxu0 %v100
      %907 = vmatprep.subr.mxu0 %v97
      %908 = vmatpush1.msra.mxu0 %v96
      %909 = vmatprep.subr.mxu0 0.0
      %910 = vmatpush2.msra.mxu0 0.0
      %911 = vmatprep.subr.mxu0 0.0
      %912 = vmatpush2.msra.mxu0 0.0
      %913 = vmatprep.subr.mxu0 0.0
      %914 = vmatpush2.msra.mxu0 0.0
      %915 = vmatprep.subr.mxu0 0.0
      %916 = vmatpush2.msra.mxu0 0.0
      %917 = vmatprep.subr.mxu0 0.0
      %918 = vmatpush2.msra.mxu0 0.0
      %919 = vmatprep.subr.mxu0 0.0
      %920 = vmatpush2.msra.mxu0 0.0
      %921 = vmatprep.subr.mxu0 0.0
      %922 = vmatpush2.msra.mxu0 0.0
      %923 = vmatprep.subr.mxu0 0.0
      %924 = vmatpush2.msra.mxu0 0.0
      %925 = vmatprep.subr.mxu0 0.0
      %926 = vmatpush2.msra.mxu0 0.0
      %927 = vmatprep.subr.mxu0 0.0
      %928 = vmatpush2.msra.mxu0 0.0
      %929 = vmatprep.subr.mxu0 0.0
      %930 = vmatpush2.msra.mxu0 0.0
      %931 = vmatprep.subr.mxu0 0.0
      %932 = vmatpush2.msra.mxu0 0.0
      %933 = vmatprep.subr.mxu0 0.0
      %934 = vmatpush2.msra.mxu0 0.0
      %935 = vmatprep.subr.mxu0 0.0
      %936 = vmatpush2.msra.mxu0 0.0
      %937 = vmatprep.subr.mxu0 0.0
      %938 = vmatpush2.msra.mxu0 0.0
      %939 = vmatprep.subr.mxu0 0.0
      %940 = vmatpush2.msra.mxu0 0.0
      %941 = vmatprep.mubr.f32.mxu0 0.0
      %942 = vmatmul.mubr.f32.gmra.mxu0 %v875
      %v943 = vpop.f32.mrf.mxu0
      %v944 = vadd.f32 0.0, %v943
      %v945 = vpop.f32.mrf.mxu0
      %v946 = vadd.f32 0.0, %v945
      %947 = vdwg.mxu0
      %948 = vmatprep.subr.mxu0 %v159
      %949 = vmatpush1.msra.mxu0 %v158
      %950 = vmatprep.subr.mxu0 %v155
      %951 = vmatpush1.msra.mxu0 %v154
      %952 = vmatprep.subr.mxu0 %v151
      %953 = vmatpush1.msra.mxu0 %v150
      %954 = vmatprep.subr.mxu0 %v147
      %955 = vmatpush1.msra.mxu0 %v146
      %956 = vmatprep.subr.mxu0 %v143
      %957 = vmatpush1.msra.mxu0 %v142
      %958 = vmatprep.subr.mxu0 %v139
      %959 = vmatpush1.msra.mxu0 %v138
      %960 = vmatprep.subr.mxu0 %v135
      %961 = vmatpush1.msra.mxu0 %v134
      %962 = vmatprep.subr.mxu0 %v131
      %963 = vmatpush1.msra.mxu0 %v130
      %964 = vmatprep.subr.mxu0 %v127
      %965 = vmatpush1.msra.mxu0 %v126
      %966 = vmatprep.subr.mxu0 %v123
      %967 = vmatpush1.msra.mxu0 %v122
      %968 = vmatprep.subr.mxu0 %v119
      %969 = vmatpush1.msra.mxu0 %v118
      %970 = vmatprep.subr.mxu0 %v115
      %971 = vmatpush1.msra.mxu0 %v114
      %972 = vmatprep.subr.mxu0 %v111
      %973 = vmatpush1.msra.mxu0 %v110
      %974 = vmatprep.subr.mxu0 %v107
      %975 = vmatpush1.msra.mxu0 %v106
      %976 = vmatprep.subr.mxu0 %v103
      %977 = vmatpush1.msra.mxu0 %v102
      %978 = vmatprep.subr.mxu0 %v99
      %979 = vmatpush1.msra.mxu0 %v98
      %980 = vmatprep.subr.mxu0 0.0
      %981 = vmatpush2.msra.mxu0 0.0
      %982 = vmatprep.subr.mxu0 0.0
      %983 = vmatpush2.msra.mxu0 0.0
      %984 = vmatprep.subr.mxu0 0.0
      %985 = vmatpush2.msra.mxu0 0.0
      %986 = vmatprep.subr.mxu0 0.0
      %987 = vmatpush2.msra.mxu0 0.0
      %988 = vmatprep.subr.mxu0 0.0
      %989 = vmatpush2.msra.mxu0 0.0
      %990 = vmatprep.subr.mxu0 0.0
      %991 = vmatpush2.msra.mxu0 0.0
      %992 = vmatprep.subr.mxu0 0.0
      %993 = vmatpush2.msra.mxu0 0.0
      %994 = vmatprep.subr.mxu0 0.0
      %995 = vmatpush2.msra.mxu0 0.0
      %996 = vmatprep.subr.mxu0 0.0
      %997 = vmatpush2.msra.mxu0 0.0
      %998 = vmatprep.subr.mxu0 0.0
      %999 = vmatpush2.msra.mxu0 0.0
      %1000 = vmatprep.subr.mxu0 0.0
      %1001 = vmatpush2.msra.mxu0 0.0
      %1002 = vmatprep.subr.mxu0 0.0
      %1003 = vmatpush2.msra.mxu0 0.0
      %1004 = vmatprep.subr.mxu0 0.0
      %1005 = vmatpush2.msra.mxu0 0.0
      %1006 = vmatprep.subr.mxu0 0.0
      %1007 = vmatpush2.msra.mxu0 0.0
      %1008 = vmatprep.subr.mxu0 0.0
      %1009 = vmatpush2.msra.mxu0 0.0
      %1010 = vmatprep.subr.mxu0 0.0
      %1011 = vmatpush2.msra.mxu0 0.0
      %1012 = vmatprep.mubr.f32.mxu0 0.0
      %1013 = vmatmul.mubr.f32.gmra.mxu0 %v875
      %v1014 = vpop.f32.mrf.mxu0
      %v1015 = vadd.f32 0.0, %v1014
      %v1016 = vpop.f32.mrf.mxu0
      %v1017 = vadd.f32 0.0, %v1016
      %1018 = vdwg.mxu0
      %v1023 = vrot.slane %v944, 5
      %v1024 = vrot.slane %v946, 5
      %v1025 = vrot.slane %v1015, 5
      %v1026 = vrot.slane %v1017, 5
      %v1031 = vadd.f32 %v253, %v1023
      %v1032 = vadd.f32 %v255, %v1024
      %v1033 = vadd.f32 %v324, %v1025
      %v1034 = vadd.f32 %v326, %v1026
      %v1035 = vxor.u32 %v1031, 2147483648
      %v1036 = vmul.f32 %v1035, 1.442695
      %v1037 = vpow.pop %v1036
      %v1038 = vadd.f32 %v1037, 1.0
      %v1039 = vrcp.pop %v1038
      %v1040 = vmul.f32 1.0, %v1039
      %v1041 = vxor.u32 %v1032, 2147483648
      %v1042 = vmul.f32 %v1041, 1.442695
      %v1043 = vpow.pop %v1042
      %v1044 = vadd.f32 %v1043, 1.0
      %v1045 = vrcp.pop %v1044
      %v1046 = vmul.f32 1.0, %v1045
      %v1047 = vtanh.pop %v1033
      %v1048 = vxor.u32 %v1034, 2147483648
      %v1049 = vmul.f32 %v1048, 1.442695
      %v1050 = vpow.pop %v1049
      %v1051 = vadd.f32 %v1050, 1.0
      %v1052 = vrcp.pop %v1051
      %v1053 = vmul.f32 1.0, %v1052
      %v1055 = vrot.slane %v870, 7
      %v1057 = vmul.f32 %v1046, %v1055
      %v1058 = vmul.f32 %v1040, %v1047
      %v1059 = vadd.f32 %v1057, %v1058
      %v1060 = vtanh.pop %v1059
      %v1061 = vmul.f32 %v1053, %v1060
      %1062 = vst [vmem:[#allocation2] sm:$0x8] %v1061
      %v1064 = vrot.slane %v1061, 3
      %1066 = vmatprep.subr.mxu0 %v157
      %1067 = vmatpush1.msra.mxu0 %v156
      %1068 = vmatprep.subr.mxu0 %v153
      %1069 = vmatpush1.msra.mxu0 %v152
      %1070 = vmatprep.subr.mxu0 %v149
      %1071 = vmatpush1.msra.mxu0 %v148
      %1072 = vmatprep.subr.mxu0 %v145
      %1073 = vmatpush1.msra.mxu0 %v144
      %1074 = vmatprep.subr.mxu0 %v141
      %1075 = vmatpush1.msra.mxu0 %v140
      %1076 = vmatprep.subr.mxu0 %v137
      %1077 = vmatpush1.msra.mxu0 %v136
      %1078 = vmatprep.subr.mxu0 %v133
      %1079 = vmatpush1.msra.mxu0 %v132
      %1080 = vmatprep.subr.mxu0 %v129
      %1081 = vmatpush1.msra.mxu0 %v128
      %1082 = vmatprep.subr.mxu0 %v125
      %1083 = vmatpush1.msra.mxu0 %v124
      %1084 = vmatprep.subr.mxu0 %v121
      %1085 = vmatpush1.msra.mxu0 %v120
      %1086 = vmatprep.subr.mxu0 %v117
      %1087 = vmatpush1.msra.mxu0 %v116
      %1088 = vmatprep.subr.mxu0 %v113
      %1089 = vmatpush1.msra.mxu0 %v112
      %1090 = vmatprep.subr.mxu0 %v109
      %1091 = vmatpush1.msra.mxu0 %v108
      %1092 = vmatprep.subr.mxu0 %v105
      %1093 = vmatpush1.msra.mxu0 %v104
      %1094 = vmatprep.subr.mxu0 %v101
      %1095 = vmatpush1.msra.mxu0 %v100
      %1096 = vmatprep.subr.mxu0 %v97
      %1097 = vmatpush1.msra.mxu0 %v96
      %1098 = vmatprep.subr.mxu0 0.0
      %1099 = vmatpush2.msra.mxu0 0.0
      %1100 = vmatprep.subr.mxu0 0.0
      %1101 = vmatpush2.msra.mxu0 0.0
      %1102 = vmatprep.subr.mxu0 0.0
      %1103 = vmatpush2.msra.mxu0 0.0
      %1104 = vmatprep.subr.mxu0 0.0
      %1105 = vmatpush2.msra.mxu0 0.0
      %1106 = vmatprep.subr.mxu0 0.0
      %1107 = vmatpush2.msra.mxu0 0.0
      %1108 = vmatprep.subr.mxu0 0.0
      %1109 = vmatpush2.msra.mxu0 0.0
      %1110 = vmatprep.subr.mxu0 0.0
      %1111 = vmatpush2.msra.mxu0 0.0
      %1112 = vmatprep.subr.mxu0 0.0
      %1113 = vmatpush2.msra.mxu0 0.0
      %1114 = vmatprep.subr.mxu0 0.0
      %1115 = vmatpush2.msra.mxu0 0.0
      %1116 = vmatprep.subr.mxu0 0.0
      %1117 = vmatpush2.msra.mxu0 0.0
      %1118 = vmatprep.subr.mxu0 0.0
      %1119 = vmatpush2.msra.mxu0 0.0
      %1120 = vmatprep.subr.mxu0 0.0
      %1121 = vmatpush2.msra.mxu0 0.0
      %1122 = vmatprep.subr.mxu0 0.0
      %1123 = vmatpush2.msra.mxu0 0.0
      %1124 = vmatprep.subr.mxu0 0.0
      %1125 = vmatpush2.msra.mxu0 0.0
      %1126 = vmatprep.subr.mxu0 0.0
      %1127 = vmatpush2.msra.mxu0 0.0
      %1128 = vmatprep.subr.mxu0 0.0
      %1129 = vmatpush2.msra.mxu0 0.0
      %1130 = vmatprep.mubr.f32.mxu0 0.0
      %1131 = vmatmul.mubr.f32.gmra.mxu0 %v1064
      %v1132 = vpop.f32.mrf.mxu0
      %v1133 = vadd.f32 0.0, %v1132
      %v1134 = vpop.f32.mrf.mxu0
      %v1135 = vadd.f32 0.0, %v1134
      %1136 = vdwg.mxu0
      %1137 = vmatprep.subr.mxu0 %v159
      %1138 = vmatpush1.msra.mxu0 %v158
      %1139 = vmatprep.subr.mxu0 %v155
      %1140 = vmatpush1.msra.mxu0 %v154
      %1141 = vmatprep.subr.mxu0 %v151
      %1142 = vmatpush1.msra.mxu0 %v150
      %1143 = vmatprep.subr.mxu0 %v147
      %1144 = vmatpush1.msra.mxu0 %v146
      %1145 = vmatprep.subr.mxu0 %v143
      %1146 = vmatpush1.msra.mxu0 %v142
      %1147 = vmatprep.subr.mxu0 %v139
      %1148 = vmatpush1.msra.mxu0 %v138
      %1149 = vmatprep.subr.mxu0 %v135
      %1150 = vmatpush1.msra.mxu0 %v134
      %1151 = vmatprep.subr.mxu0 %v131
      %1152 = vmatpush1.msra.mxu0 %v130
      %1153 = vmatprep.subr.mxu0 %v127
      %1154 = vmatpush1.msra.mxu0 %v126
      %1155 = vmatprep.subr.mxu0 %v123
      %1156 = vmatpush1.msra.mxu0 %v122
      %1157 = vmatprep.subr.mxu0 %v119
      %1158 = vmatpush1.msra.mxu0 %v118
      %1159 = vmatprep.subr.mxu0 %v115
      %1160 = vmatpush1.msra.mxu0 %v114
      %1161 = vmatprep.subr.mxu0 %v111
      %1162 = vmatpush1.msra.mxu0 %v110
      %1163 = vmatprep.subr.mxu0 %v107
      %1164 = vmatpush1.msra.mxu0 %v106
      %1165 = vmatprep.subr.mxu0 %v103
      %1166 = vmatpush1.msra.mxu0 %v102
      %1167 = vmatprep.subr.mxu0 %v99
      %1168 = vmatpush1.msra.mxu0 %v98
      %1169 = vmatprep.subr.mxu0 0.0
      %1170 = vmatpush2.msra.mxu0 0.0
      %1171 = vmatprep.subr.mxu0 0.0
      %1172 = vmatpush2.msra.mxu0 0.0
      %1173 = vmatprep.subr.mxu0 0.0
      %1174 = vmatpush2.msra.mxu0 0.0
      %1175 = vmatprep.subr.mxu0 0.0
      %1176 = vmatpush2.msra.mxu0 0.0
      %1177 = vmatprep.subr.mxu0 0.0
      %1178 = vmatpush2.msra.mxu0 0.0
      %1179 = vmatprep.subr.mxu0 0.0
      %1180 = vmatpush2.msra.mxu0 0.0
      %1181 = vmatprep.subr.mxu0 0.0
      %1182 = vmatpush2.msra.mxu0 0.0
      %1183 = vmatprep.subr.mxu0 0.0
      %1184 = vmatpush2.msra.mxu0 0.0
      %1185 = vmatprep.subr.mxu0 0.0
      %1186 = vmatpush2.msra.mxu0 0.0
      %1187 = vmatprep.subr.mxu0 0.0
      %1188 = vmatpush2.msra.mxu0 0.0
      %1189 = vmatprep.subr.mxu0 0.0
      %1190 = vmatpush2.msra.mxu0 0.0
      %1191 = vmatprep.subr.mxu0 0.0
      %1192 = vmatpush2.msra.mxu0 0.0
      %1193 = vmatprep.subr.mxu0 0.0
      %1194 = vmatpush2.msra.mxu0 0.0
      %1195 = vmatprep.subr.mxu0 0.0
      %1196 = vmatpush2.msra.mxu0 0.0
      %1197 = vmatprep.subr.mxu0 0.0
      %1198 = vmatpush2.msra.mxu0 0.0
      %1199 = vmatprep.subr.mxu0 0.0
      %1200 = vmatpush2.msra.mxu0 0.0
      %1201 = vmatprep.mubr.f32.mxu0 0.0
      %1202 = vmatmul.mubr.f32.gmra.mxu0 %v1064
      %v1203 = vpop.f32.mrf.mxu0
      %v1204 = vadd.f32 0.0, %v1203
      %v1205 = vpop.f32.mrf.mxu0
      %v1206 = vadd.f32 0.0, %v1205
      %1207 = vdwg.mxu0
      %v1212 = vrot.slane %v1133, 4
      %v1213 = vrot.slane %v1135, 4
      %v1214 = vrot.slane %v1204, 4
      %v1215 = vrot.slane %v1206, 4
      %v1220 = vadd.f32 %v253, %v1212
      %v1221 = vadd.f32 %v255, %v1213
      %v1222 = vadd.f32 %v324, %v1214
      %v1223 = vadd.f32 %v326, %v1215
      %v1224 = vxor.u32 %v1220, 2147483648
      %v1225 = vmul.f32 %v1224, 1.442695
      %v1226 = vpow.pop %v1225
      %v1227 = vadd.f32 %v1226, 1.0
      %v1228 = vrcp.pop %v1227
      %v1229 = vmul.f32 1.0, %v1228
      %v1230 = vxor.u32 %v1221, 2147483648
      %v1231 = vmul.f32 %v1230, 1.442695
      %v1232 = vpow.pop %v1231
      %v1233 = vadd.f32 %v1232, 1.0
      %v1234 = vrcp.pop %v1233
      %v1235 = vmul.f32 1.0, %v1234
      %v1236 = vtanh.pop %v1222
      %v1237 = vxor.u32 %v1223, 2147483648
      %v1238 = vmul.f32 %v1237, 1.442695
      %v1239 = vpow.pop %v1238
      %v1240 = vadd.f32 %v1239, 1.0
      %v1241 = vrcp.pop %v1240
      %v1242 = vmul.f32 1.0, %v1241
      %v1244 = vrot.slane %v1059, 7
      %v1246 = vmul.f32 %v1235, %v1244
      %v1247 = vmul.f32 %v1229, %v1236
      %v1248 = vadd.f32 %v1246, %v1247
      %v1249 = vtanh.pop %v1248
      %v1250 = vmul.f32 %v1242, %v1249
      %1251 = vst [vmem:[#allocation2] sm:$0x10] %v1250
      %v1253 = vrot.slane %v1250, 4
      %1255 = vmatprep.subr.mxu0 %v157
      %1256 = vmatpush1.msra.mxu0 %v156
      %1257 = vmatprep.subr.mxu0 %v153
      %1258 = vmatpush1.msra.mxu0 %v152
      %1259 = vmatprep.subr.mxu0 %v149
      %1260 = vmatpush1.msra.mxu0 %v148
      %1261 = vmatprep.subr.mxu0 %v145
      %1262 = vmatpush1.msra.mxu0 %v144
      %1263 = vmatprep.subr.mxu0 %v141
      %1264 = vmatpush1.msra.mxu0 %v140
      %1265 = vmatprep.subr.mxu0 %v137
      %1266 = vmatpush1.msra.mxu0 %v136
      %1267 = vmatprep.subr.mxu0 %v133
      %1268 = vmatpush1.msra.mxu0 %v132
      %1269 = vmatprep.subr.mxu0 %v129
      %1270 = vmatpush1.msra.mxu0 %v128
      %1271 = vmatprep.subr.mxu0 %v125
      %1272 = vmatpush1.msra.mxu0 %v124
      %1273 = vmatprep.subr.mxu0 %v121
      %1274 = vmatpush1.msra.mxu0 %v120
      %1275 = vmatprep.subr.mxu0 %v117
      %1276 = vmatpush1.msra.mxu0 %v116
      %1277 = vmatprep.subr.mxu0 %v113
      %1278 = vmatpush1.msra.mxu0 %v112
      %1279 = vmatprep.subr.mxu0 %v109
      %1280 = vmatpush1.msra.mxu0 %v108
      %1281 = vmatprep.subr.mxu0 %v105
      %1282 = vmatpush1.msra.mxu0 %v104
      %1283 = vmatprep.subr.mxu0 %v101
      %1284 = vmatpush1.msra.mxu0 %v100
      %1285 = vmatprep.subr.mxu0 %v97
      %1286 = vmatpush1.msra.mxu0 %v96
      %1287 = vmatprep.subr.mxu0 0.0
      %1288 = vmatpush2.msra.mxu0 0.0
      %1289 = vmatprep.subr.mxu0 0.0
      %1290 = vmatpush2.msra.mxu0 0.0
      %1291 = vmatprep.subr.mxu0 0.0
      %1292 = vmatpush2.msra.mxu0 0.0
      %1293 = vmatprep.subr.mxu0 0.0
      %1294 = vmatpush2.msra.mxu0 0.0
      %1295 = vmatprep.subr.mxu0 0.0
      %1296 = vmatpush2.msra.mxu0 0.0
      %1297 = vmatprep.subr.mxu0 0.0
      %1298 = vmatpush2.msra.mxu0 0.0
      %1299 = vmatprep.subr.mxu0 0.0
      %1300 = vmatpush2.msra.mxu0 0.0
      %1301 = vmatprep.subr.mxu0 0.0
      %1302 = vmatpush2.msra.mxu0 0.0
      %1303 = vmatprep.subr.mxu0 0.0
      %1304 = vmatpush2.msra.mxu0 0.0
      %1305 = vmatprep.subr.mxu0 0.0
      %1306 = vmatpush2.msra.mxu0 0.0
      %1307 = vmatprep.subr.mxu0 0.0
      %1308 = vmatpush2.msra.mxu0 0.0
      %1309 = vmatprep.subr.mxu0 0.0
      %1310 = vmatpush2.msra.mxu0 0.0
      %1311 = vmatprep.subr.mxu0 0.0
      %1312 = vmatpush2.msra.mxu0 0.0
      %1313 = vmatprep.subr.mxu0 0.0
      %1314 = vmatpush2.msra.mxu0 0.0
      %1315 = vmatprep.subr.mxu0 0.0
      %1316 = vmatpush2.msra.mxu0 0.0
      %1317 = vmatprep.subr.mxu0 0.0
      %1318 = vmatpush2.msra.mxu0 0.0
      %1319 = vmatprep.mubr.f32.mxu0 0.0
      %1320 = vmatmul.mubr.f32.gmra.mxu0 %v1253
      %v1321 = vpop.f32.mrf.mxu0
      %v1322 = vadd.f32 0.0, %v1321
      %v1323 = vpop.f32.mrf.mxu0
      %v1324 = vadd.f32 0.0, %v1323
      %1325 = vdwg.mxu0
      %1326 = vmatprep.subr.mxu0 %v159
      %1327 = vmatpush1.msra.mxu0 %v158
      %1328 = vmatprep.subr.mxu0 %v155
      %1329 = vmatpush1.msra.mxu0 %v154
      %1330 = vmatprep.subr.mxu0 %v151
      %1331 = vmatpush1.msra.mxu0 %v150
      %1332 = vmatprep.subr.mxu0 %v147
      %1333 = vmatpush1.msra.mxu0 %v146
      %1334 = vmatprep.subr.mxu0 %v143
      %1335 = vmatpush1.msra.mxu0 %v142
      %1336 = vmatprep.subr.mxu0 %v139
      %1337 = vmatpush1.msra.mxu0 %v138
      %1338 = vmatprep.subr.mxu0 %v135
      %1339 = vmatpush1.msra.mxu0 %v134
      %1340 = vmatprep.subr.mxu0 %v131
      %1341 = vmatpush1.msra.mxu0 %v130
      %1342 = vmatprep.subr.mxu0 %v127
      %1343 = vmatpush1.msra.mxu0 %v126
      %1344 = vmatprep.subr.mxu0 %v123
      %1345 = vmatpush1.msra.mxu0 %v122
      %1346 = vmatprep.subr.mxu0 %v119
      %1347 = vmatpush1.msra.mxu0 %v118
      %1348 = vmatprep.subr.mxu0 %v115
      %1349 = vmatpush1.msra.mxu0 %v114
      %1350 = vmatprep.subr.mxu0 %v111
      %1351 = vmatpush1.msra.mxu0 %v110
      %1352 = vmatprep.subr.mxu0 %v107
      %1353 = vmatpush1.msra.mxu0 %v106
      %1354 = vmatprep.subr.mxu0 %v103
      %1355 = vmatpush1.msra.mxu0 %v102
      %1356 = vmatprep.subr.mxu0 %v99
      %1357 = vmatpush1.msra.mxu0 %v98
      %1358 = vmatprep.subr.mxu0 0.0
      %1359 = vmatpush2.msra.mxu0 0.0
      %1360 = vmatprep.subr.mxu0 0.0
      %1361 = vmatpush2.msra.mxu0 0.0
      %1362 = vmatprep.subr.mxu0 0.0
      %1363 = vmatpush2.msra.mxu0 0.0
      %1364 = vmatprep.subr.mxu0 0.0
      %1365 = vmatpush2.msra.mxu0 0.0
      %1366 = vmatprep.subr.mxu0 0.0
      %1367 = vmatpush2.msra.mxu0 0.0
      %1368 = vmatprep.subr.mxu0 0.0
      %1369 = vmatpush2.msra.mxu0 0.0
      %1370 = vmatprep.subr.mxu0 0.0
      %1371 = vmatpush2.msra.mxu0 0.0
      %1372 = vmatprep.subr.mxu0 0.0
      %1373 = vmatpush2.msra.mxu0 0.0
      %1374 = vmatprep.subr.mxu0 0.0
      %1375 = vmatpush2.msra.mxu0 0.0
      %1376 = vmatprep.subr.mxu0 0.0
      %1377 = vmatpush2.msra.mxu0 0.0
      %1378 = vmatprep.subr.mxu0 0.0
      %1379 = vmatpush2.msra.mxu0 0.0
      %1380 = vmatprep.subr.mxu0 0.0
      %1381 = vmatpush2.msra.mxu0 0.0
      %1382 = vmatprep.subr.mxu0 0.0
      %1383 = vmatpush2.msra.mxu0 0.0
      %1384 = vmatprep.subr.mxu0 0.0
      %1385 = vmatpush2.msra.mxu0 0.0
      %1386 = vmatprep.subr.mxu0 0.0
      %1387 = vmatpush2.msra.mxu0 0.0
      %1388 = vmatprep.subr.mxu0 0.0
      %1389 = vmatpush2.msra.mxu0 0.0
      %1390 = vmatprep.mubr.f32.mxu0 0.0
      %1391 = vmatmul.mubr.f32.gmra.mxu0 %v1253
      %v1392 = vpop.f32.mrf.mxu0
      %v1393 = vadd.f32 0.0, %v1392
      %v1394 = vpop.f32.mrf.mxu0
      %v1395 = vadd.f32 0.0, %v1394
      %1396 = vdwg.mxu0
      %v1401 = vrot.slane %v1322, 3
      %v1402 = vrot.slane %v1324, 3
      %v1403 = vrot.slane %v1393, 3
      %v1404 = vrot.slane %v1395, 3
      %v1409 = vadd.f32 %v253, %v1401
      %v1410 = vadd.f32 %v255, %v1402
      %v1411 = vadd.f32 %v324, %v1403
      %v1412 = vadd.f32 %v326, %v1404
      %v1413 = vxor.u32 %v1409, 2147483648
      %v1414 = vmul.f32 %v1413, 1.442695
      %v1415 = vpow.pop %v1414
      %v1416 = vadd.f32 %v1415, 1.0
      %v1417 = vrcp.pop %v1416
      %v1418 = vmul.f32 1.0, %v1417
      %v1419 = vxor.u32 %v1410, 2147483648
      %v1420 = vmul.f32 %v1419, 1.442695
      %v1421 = vpow.pop %v1420
      %v1422 = vadd.f32 %v1421, 1.0
      %v1423 = vrcp.pop %v1422
      %v1424 = vmul.f32 1.0, %v1423
      %v1425 = vtanh.pop %v1411
      %v1426 = vxor.u32 %v1412, 2147483648
      %v1427 = vmul.f32 %v1426, 1.442695
      %v1428 = vpow.pop %v1427
      %v1429 = vadd.f32 %v1428, 1.0
      %v1430 = vrcp.pop %v1429
      %v1431 = vmul.f32 1.0, %v1430
      %v1433 = vrot.slane %v1248, 7
      %v1435 = vmul.f32 %v1424, %v1433
      %v1436 = vmul.f32 %v1418, %v1425
      %v1437 = vadd.f32 %v1435, %v1436
      %v1438 = vtanh.pop %v1437
      %v1439 = vmul.f32 %v1431, %v1438
      %1440 = vst [vmem:[#allocation2] sm:$0x20] %v1439
      %v1442 = vrot.slane %v1439, 5
      %1444 = vmatprep.subr.mxu0 %v157
      %1445 = vmatpush1.msra.mxu0 %v156
      %1446 = vmatprep.subr.mxu0 %v153
      %1447 = vmatpush1.msra.mxu0 %v152
      %1448 = vmatprep.subr.mxu0 %v149
      %1449 = vmatpush1.msra.mxu0 %v148
      %1450 = vmatprep.subr.mxu0 %v145
      %1451 = vmatpush1.msra.mxu0 %v144
      %1452 = vmatprep.subr.mxu0 %v141
      %1453 = vmatpush1.msra.mxu0 %v140
      %1454 = vmatprep.subr.mxu0 %v137
      %1455 = vmatpush1.msra.mxu0 %v136
      %1456 = vmatprep.subr.mxu0 %v133
      %1457 = vmatpush1.msra.mxu0 %v132
      %1458 = vmatprep.subr.mxu0 %v129
      %1459 = vmatpush1.msra.mxu0 %v128
      %1460 = vmatprep.subr.mxu0 %v125
      %1461 = vmatpush1.msra.mxu0 %v124
      %1462 = vmatprep.subr.mxu0 %v121
      %1463 = vmatpush1.msra.mxu0 %v120
      %1464 = vmatprep.subr.mxu0 %v117
      %1465 = vmatpush1.msra.mxu0 %v116
      %1466 = vmatprep.subr.mxu0 %v113
      %1467 = vmatpush1.msra.mxu0 %v112
      %1468 = vmatprep.subr.mxu0 %v109
      %1469 = vmatpush1.msra.mxu0 %v108
      %1470 = vmatprep.subr.mxu0 %v105
      %1471 = vmatpush1.msra.mxu0 %v104
      %1472 = vmatprep.subr.mxu0 %v101
      %1473 = vmatpush1.msra.mxu0 %v100
      %1474 = vmatprep.subr.mxu0 %v97
      %1475 = vmatpush1.msra.mxu0 %v96
      %1476 = vmatprep.subr.mxu0 0.0
      %1477 = vmatpush2.msra.mxu0 0.0
      %1478 = vmatprep.subr.mxu0 0.0
      %1479 = vmatpush2.msra.mxu0 0.0
      %1480 = vmatprep.subr.mxu0 0.0
      %1481 = vmatpush2.msra.mxu0 0.0
      %1482 = vmatprep.subr.mxu0 0.0
      %1483 = vmatpush2.msra.mxu0 0.0
      %1484 = vmatprep.subr.mxu0 0.0
      %1485 = vmatpush2.msra.mxu0 0.0
      %1486 = vmatprep.subr.mxu0 0.0
      %1487 = vmatpush2.msra.mxu0 0.0
      %1488 = vmatprep.subr.mxu0 0.0
      %1489 = vmatpush2.msra.mxu0 0.0
      %1490 = vmatprep.subr.mxu0 0.0
      %1491 = vmatpush2.msra.mxu0 0.0
      %1492 = vmatprep.subr.mxu0 0.0
      %1493 = vmatpush2.msra.mxu0 0.0
      %1494 = vmatprep.subr.mxu0 0.0
      %1495 = vmatpush2.msra.mxu0 0.0
      %1496 = vmatprep.subr.mxu0 0.0
      %1497 = vmatpush2.msra.mxu0 0.0
      %1498 = vmatprep.subr.mxu0 0.0
      %1499 = vmatpush2.msra.mxu0 0.0
      %1500 = vmatprep.subr.mxu0 0.0
      %1501 = vmatpush2.msra.mxu0 0.0
      %1502 = vmatprep.subr.mxu0 0.0
      %1503 = vmatpush2.msra.mxu0 0.0
      %1504 = vmatprep.subr.mxu0 0.0
      %1505 = vmatpush2.msra.mxu0 0.0
      %1506 = vmatprep.subr.mxu0 0.0
      %1507 = vmatpush2.msra.mxu0 0.0
      %1508 = vmatprep.mubr.f32.mxu0 0.0
      %1509 = vmatmul.mubr.f32.gmra.mxu0 %v1442
      %v1510 = vpop.f32.mrf.mxu0
      %v1511 = vadd.f32 0.0, %v1510
      %v1512 = vpop.f32.mrf.mxu0
      %v1513 = vadd.f32 0.0, %v1512
      %1514 = vdwg.mxu0
      %1515 = vmatprep.subr.mxu0 %v159
      %1516 = vmatpush1.msra.mxu0 %v158
      %1517 = vmatprep.subr.mxu0 %v155
      %1518 = vmatpush1.msra.mxu0 %v154
      %1519 = vmatprep.subr.mxu0 %v151
      %1520 = vmatpush1.msra.mxu0 %v150
      %1521 = vmatprep.subr.mxu0 %v147
      %1522 = vmatpush1.msra.mxu0 %v146
      %1523 = vmatprep.subr.mxu0 %v143
      %1524 = vmatpush1.msra.mxu0 %v142
      %1525 = vmatprep.subr.mxu0 %v139
      %1526 = vmatpush1.msra.mxu0 %v138
      %1527 = vmatprep.subr.mxu0 %v135
      %1528 = vmatpush1.msra.mxu0 %v134
      %1529 = vmatprep.subr.mxu0 %v131
      %1530 = vmatpush1.msra.mxu0 %v130
      %1531 = vmatprep.subr.mxu0 %v127
      %1532 = vmatpush1.msra.mxu0 %v126
      %1533 = vmatprep.subr.mxu0 %v123
      %1534 = vmatpush1.msra.mxu0 %v122
      %1535 = vmatprep.subr.mxu0 %v119
      %1536 = vmatpush1.msra.mxu0 %v118
      %1537 = vmatprep.subr.mxu0 %v115
      %1538 = vmatpush1.msra.mxu0 %v114
      %1539 = vmatprep.subr.mxu0 %v111
      %1540 = vmatpush1.msra.mxu0 %v110
      %1541 = vmatprep.subr.mxu0 %v107
      %1542 = vmatpush1.msra.mxu0 %v106
      %1543 = vmatprep.subr.mxu0 %v103
      %1544 = vmatpush1.msra.mxu0 %v102
      %1545 = vmatprep.subr.mxu0 %v99
      %1546 = vmatpush1.msra.mxu0 %v98
      %1547 = vmatprep.subr.mxu0 0.0
      %1548 = vmatpush2.msra.mxu0 0.0
      %1549 = vmatprep.subr.mxu0 0.0
      %1550 = vmatpush2.msra.mxu0 0.0
      %1551 = vmatprep.subr.mxu0 0.0
      %1552 = vmatpush2.msra.mxu0 0.0
      %1553 = vmatprep.subr.mxu0 0.0
      %1554 = vmatpush2.msra.mxu0 0.0
      %1555 = vmatprep.subr.mxu0 0.0
      %1556 = vmatpush2.msra.mxu0 0.0
      %1557 = vmatprep.subr.mxu0 0.0
      %1558 = vmatpush2.msra.mxu0 0.0
      %1559 = vmatprep.subr.mxu0 0.0
      %1560 = vmatpush2.msra.mxu0 0.0
      %1561 = vmatprep.subr.mxu0 0.0
      %1562 = vmatpush2.msra.mxu0 0.0
      %1563 = vmatprep.subr.mxu0 0.0
      %1564 = vmatpush2.msra.mxu0 0.0
      %1565 = vmatprep.subr.mxu0 0.0
      %1566 = vmatpush2.msra.mxu0 0.0
      %1567 = vmatprep.subr.mxu0 0.0
      %1568 = vmatpush2.msra.mxu0 0.0
      %1569 = vmatprep.subr.mxu0 0.0
      %1570 = vmatpush2.msra.mxu0 0.0
      %1571 = vmatprep.subr.mxu0 0.0
      %1572 = vmatpush2.msra.mxu0 0.0
      %1573 = vmatprep.subr.mxu0 0.0
      %1574 = vmatpush2.msra.mxu0 0.0
      %1575 = vmatprep.subr.mxu0 0.0
      %1576 = vmatpush2.msra.mxu0 0.0
      %1577 = vmatprep.subr.mxu0 0.0
      %1578 = vmatpush2.msra.mxu0 0.0
      %1579 = vmatprep.mubr.f32.mxu0 0.0
      %1580 = vmatmul.mubr.f32.gmra.mxu0 %v1442
      %v1581 = vpop.f32.mrf.mxu0
      %v1582 = vadd.f32 0.0, %v1581
      %v1583 = vpop.f32.mrf.mxu0
      %v1584 = vadd.f32 0.0, %v1583
      %1585 = vdwg.mxu0
      %v1590 = vrot.slane %v1511, 2
      %v1591 = vrot.slane %v1513, 2
      %v1592 = vrot.slane %v1582, 2
      %v1593 = vrot.slane %v1584, 2
      %v1598 = vadd.f32 %v253, %v1590
      %v1599 = vadd.f32 %v255, %v1591
      %v1600 = vadd.f32 %v324, %v1592
      %v1601 = vadd.f32 %v326, %v1593
      %v1602 = vxor.u32 %v1598, 2147483648
      %v1603 = vmul.f32 %v1602, 1.442695
      %v1604 = vpow.pop %v1603
      %v1605 = vadd.f32 %v1604, 1.0
      %v1606 = vrcp.pop %v1605
      %v1607 = vmul.f32 1.0, %v1606
      %v1608 = vxor.u32 %v1599, 2147483648
      %v1609 = vmul.f32 %v1608, 1.442695
      %v1610 = vpow.pop %v1609
      %v1611 = vadd.f32 %v1610, 1.0
      %v1612 = vrcp.pop %v1611
      %v1613 = vmul.f32 1.0, %v1612
      %v1614 = vtanh.pop %v1600
      %v1615 = vxor.u32 %v1601, 2147483648
      %v1616 = vmul.f32 %v1615, 1.442695
      %v1617 = vpow.pop %v1616
      %v1618 = vadd.f32 %v1617, 1.0
      %v1619 = vrcp.pop %v1618
      %v1620 = vmul.f32 1.0, %v1619
      %v1622 = vrot.slane %v1437, 7
      %v1624 = vmul.f32 %v1613, %v1622
      %v1625 = vmul.f32 %v1607, %v1614
      %v1626 = vadd.f32 %v1624, %v1625
      %v1627 = vtanh.pop %v1626
      %v1628 = vmul.f32 %v1620, %v1627
      %1629 = vst [vmem:[#allocation2] sm:$0x40] %v1628
      %v1631 = vrot.slane %v1628, 6
      %1633 = vmatprep.subr.mxu0 %v157
      %1634 = vmatpush1.msra.mxu0 %v156
      %1635 = vmatprep.subr.mxu0 %v153
      %1636 = vmatpush1.msra.mxu0 %v152
      %1637 = vmatprep.subr.mxu0 %v149
      %1638 = vmatpush1.msra.mxu0 %v148
      %1639 = vmatprep.subr.mxu0 %v145
      %1640 = vmatpush1.msra.mxu0 %v144
      %1641 = vmatprep.subr.mxu0 %v141
      %1642 = vmatpush1.msra.mxu0 %v140
      %1643 = vmatprep.subr.mxu0 %v137
      %1644 = vmatpush1.msra.mxu0 %v136
      %1645 = vmatprep.subr.mxu0 %v133
      %1646 = vmatpush1.msra.mxu0 %v132
      %1647 = vmatprep.subr.mxu0 %v129
      %1648 = vmatpush1.msra.mxu0 %v128
      %1649 = vmatprep.subr.mxu0 %v125
      %1650 = vmatpush1.msra.mxu0 %v124
      %1651 = vmatprep.subr.mxu0 %v121
      %1652 = vmatpush1.msra.mxu0 %v120
      %1653 = vmatprep.subr.mxu0 %v117
      %1654 = vmatpush1.msra.mxu0 %v116
      %1655 = vmatprep.subr.mxu0 %v113
      %1656 = vmatpush1.msra.mxu0 %v112
      %1657 = vmatprep.subr.mxu0 %v109
      %1658 = vmatpush1.msra.mxu0 %v108
      %1659 = vmatprep.subr.mxu0 %v105
      %1660 = vmatpush1.msra.mxu0 %v104
      %1661 = vmatprep.subr.mxu0 %v101
      %1662 = vmatpush1.msra.mxu0 %v100
      %1663 = vmatprep.subr.mxu0 %v97
      %1664 = vmatpush1.msra.mxu0 %v96
      %1665 = vmatprep.subr.mxu0 0.0
      %1666 = vmatpush2.msra.mxu0 0.0
      %1667 = vmatprep.subr.mxu0 0.0
      %1668 = vmatpush2.msra.mxu0 0.0
      %1669 = vmatprep.subr.mxu0 0.0
      %1670 = vmatpush2.msra.mxu0 0.0
      %1671 = vmatprep.subr.mxu0 0.0
      %1672 = vmatpush2.msra.mxu0 0.0
      %1673 = vmatprep.subr.mxu0 0.0
      %1674 = vmatpush2.msra.mxu0 0.0
      %1675 = vmatprep.subr.mxu0 0.0
      %1676 = vmatpush2.msra.mxu0 0.0
      %1677 = vmatprep.subr.mxu0 0.0
      %1678 = vmatpush2.msra.mxu0 0.0
      %1679 = vmatprep.subr.mxu0 0.0
      %1680 = vmatpush2.msra.mxu0 0.0
      %1681 = vmatprep.subr.mxu0 0.0
      %1682 = vmatpush2.msra.mxu0 0.0
      %1683 = vmatprep.subr.mxu0 0.0
      %1684 = vmatpush2.msra.mxu0 0.0
      %1685 = vmatprep.subr.mxu0 0.0
      %1686 = vmatpush2.msra.mxu0 0.0
      %1687 = vmatprep.subr.mxu0 0.0
      %1688 = vmatpush2.msra.mxu0 0.0
      %1689 = vmatprep.subr.mxu0 0.0
      %1690 = vmatpush2.msra.mxu0 0.0
      %1691 = vmatprep.subr.mxu0 0.0
      %1692 = vmatpush2.msra.mxu0 0.0
      %1693 = vmatprep.subr.mxu0 0.0
      %1694 = vmatpush2.msra.mxu0 0.0
      %1695 = vmatprep.subr.mxu0 0.0
      %1696 = vmatpush2.msra.mxu0 0.0
      %1697 = vmatprep.mubr.f32.mxu0 0.0
      %1698 = vmatmul.mubr.f32.gmra.mxu0 %v1631
      %v1699 = vpop.f32.mrf.mxu0
      %v1700 = vadd.f32 0.0, %v1699
      %v1701 = vpop.f32.mrf.mxu0
      %v1702 = vadd.f32 0.0, %v1701
      %1703 = vdwg.mxu0
      %1704 = vmatprep.subr.mxu0 %v159
      %1705 = vmatpush1.msra.mxu0 %v158
      %1706 = vmatprep.subr.mxu0 %v155
      %1707 = vmatpush1.msra.mxu0 %v154
      %1708 = vmatprep.subr.mxu0 %v151
      %1709 = vmatpush1.msra.mxu0 %v150
      %1710 = vmatprep.subr.mxu0 %v147
      %1711 = vmatpush1.msra.mxu0 %v146
      %1712 = vmatprep.subr.mxu0 %v143
      %1713 = vmatpush1.msra.mxu0 %v142
      %1714 = vmatprep.subr.mxu0 %v139
      %1715 = vmatpush1.msra.mxu0 %v138
      %1716 = vmatprep.subr.mxu0 %v135
      %1717 = vmatpush1.msra.mxu0 %v134
      %1718 = vmatprep.subr.mxu0 %v131
      %1719 = vmatpush1.msra.mxu0 %v130
      %1720 = vmatprep.subr.mxu0 %v127
      %1721 = vmatpush1.msra.mxu0 %v126
      %1722 = vmatprep.subr.mxu0 %v123
      %1723 = vmatpush1.msra.mxu0 %v122
      %1724 = vmatprep.subr.mxu0 %v119
      %1725 = vmatpush1.msra.mxu0 %v118
      %1726 = vmatprep.subr.mxu0 %v115
      %1727 = vmatpush1.msra.mxu0 %v114
      %1728 = vmatprep.subr.mxu0 %v111
      %1729 = vmatpush1.msra.mxu0 %v110
      %1730 = vmatprep.subr.mxu0 %v107
      %1731 = vmatpush1.msra.mxu0 %v106
      %1732 = vmatprep.subr.mxu0 %v103
      %1733 = vmatpush1.msra.mxu0 %v102
      %1734 = vmatprep.subr.mxu0 %v99
      %1735 = vmatpush1.msra.mxu0 %v98
      %1736 = vmatprep.subr.mxu0 0.0
      %1737 = vmatpush2.msra.mxu0 0.0
      %1738 = vmatprep.subr.mxu0 0.0
      %1739 = vmatpush2.msra.mxu0 0.0
      %1740 = vmatprep.subr.mxu0 0.0
      %1741 = vmatpush2.msra.mxu0 0.0
      %1742 = vmatprep.subr.mxu0 0.0
      %1743 = vmatpush2.msra.mxu0 0.0
      %1744 = vmatprep.subr.mxu0 0.0
      %1745 = vmatpush2.msra.mxu0 0.0
      %1746 = vmatprep.subr.mxu0 0.0
      %1747 = vmatpush2.msra.mxu0 0.0
      %1748 = vmatprep.subr.mxu0 0.0
      %1749 = vmatpush2.msra.mxu0 0.0
      %1750 = vmatprep.subr.mxu0 0.0
      %1751 = vmatpush2.msra.mxu0 0.0
      %1752 = vmatprep.subr.mxu0 0.0
      %1753 = vmatpush2.msra.mxu0 0.0
      %1754 = vmatprep.subr.mxu0 0.0
      %1755 = vmatpush2.msra.mxu0 0.0
      %1756 = vmatprep.subr.mxu0 0.0
      %1757 = vmatpush2.msra.mxu0 0.0
      %1758 = vmatprep.subr.mxu0 0.0
      %1759 = vmatpush2.msra.mxu0 0.0
      %1760 = vmatprep.subr.mxu0 0.0
      %1761 = vmatpush2.msra.mxu0 0.0
      %1762 = vmatprep.subr.mxu0 0.0
      %1763 = vmatpush2.msra.mxu0 0.0
      %1764 = vmatprep.subr.mxu0 0.0
      %1765 = vmatpush2.msra.mxu0 0.0
      %1766 = vmatprep.subr.mxu0 0.0
      %1767 = vmatpush2.msra.mxu0 0.0
      %1768 = vmatprep.mubr.f32.mxu0 0.0
      %1769 = vmatmul.mubr.f32.gmra.mxu0 %v1631
      %v1770 = vpop.f32.mrf.mxu0
      %v1771 = vadd.f32 0.0, %v1770
      %v1772 = vpop.f32.mrf.mxu0
      %v1773 = vadd.f32 0.0, %v1772
      %1774 = vdwg.mxu0
      %v1779 = vrot.slane %v1700, 1
      %v1780 = vrot.slane %v1702, 1
      %v1781 = vrot.slane %v1771, 1
      %v1782 = vrot.slane %v1773, 1
      %v1787 = vadd.f32 %v253, %v1779
      %v1788 = vadd.f32 %v255, %v1780
      %v1789 = vadd.f32 %v324, %v1781
      %v1790 = vadd.f32 %v326, %v1782
      %v1791 = vxor.u32 %v1787, 2147483648
      %v1792 = vmul.f32 %v1791, 1.442695
      %v1793 = vpow.pop %v1792
      %v1794 = vadd.f32 %v1793, 1.0
      %v1795 = vrcp.pop %v1794
      %v1796 = vmul.f32 1.0, %v1795
      %v1797 = vxor.u32 %v1788, 2147483648
      %v1798 = vmul.f32 %v1797, 1.442695
      %v1799 = vpow.pop %v1798
      %v1800 = vadd.f32 %v1799, 1.0
      %v1801 = vrcp.pop %v1800
      %v1802 = vmul.f32 1.0, %v1801
      %v1803 = vtanh.pop %v1789
      %v1804 = vxor.u32 %v1790, 2147483648
      %v1805 = vmul.f32 %v1804, 1.442695
      %v1806 = vpow.pop %v1805
      %v1807 = vadd.f32 %v1806, 1.0
      %v1808 = vrcp.pop %v1807
      %v1809 = vmul.f32 1.0, %v1808
      %v1811 = vrot.slane %v1626, 7
      %v1813 = vmul.f32 %v1802, %v1811
      %v1814 = vmul.f32 %v1796, %v1803
      %v1815 = vadd.f32 %v1813, %v1814
      %v1816 = vtanh.pop %v1815
      %v1817 = vmul.f32 %v1809, %v1816
      %1818 = vst [vmem:[#allocation2] sm:$0x80] %v1817
      %v1819 = vld [vmem:[#allocation2] sm:$0xff]
      %v1820 = vld [vmem:[#allocation6] sm:$0xff]
      %v1821 = vld [vmem:[#allocation6 + $0x8] sm:$0xff]
      %v1822 = vld [vmem:[#allocation6 + $0x10] sm:$0xff]
      %v1823 = vld [vmem:[#allocation6 + $0x18] sm:$0xff]
      %v1824 = vld [vmem:[#allocation6 + $0x20] sm:$0xff]
      %v1825 = vld [vmem:[#allocation6 + $0x28] sm:$0xff]
      %v1826 = vld [vmem:[#allocation6 + $0x30] sm:$0xff]
      %v1827 = vld [vmem:[#allocation6 + $0x38] sm:$0xff]
      %v1828 = vld [vmem:[#allocation6 + $0x40] sm:$0xff]
      %v1829 = vld [vmem:[#allocation6 + $0x48] sm:$0xff]
      %v1830 = vld [vmem:[#allocation6 + $0x50] sm:$0xff]
      %v1831 = vld [vmem:[#allocation6 + $0x58] sm:$0xff]
      %v1832 = vld [vmem:[#allocation6 + $0x60] sm:$0xff]
      %v1833 = vld [vmem:[#allocation6 + $0x68] sm:$0xff]
      %v1834 = vld [vmem:[#allocation6 + $0x70] sm:$0xff]
      %v1835 = vld [vmem:[#allocation6 + $0x78] sm:$0xff]
      %v1836 = vld [vmem:[#allocation6 + $0x80] sm:$0xff]
      %v1837 = vld [vmem:[#allocation6 + $0x88] sm:$0xff]
      %v1838 = vld [vmem:[#allocation6 + $0x90] sm:$0xff]
      %v1839 = vld [vmem:[#allocation6 + $0x98] sm:$0xff]
      %v1840 = vld [vmem:[#allocation6 + $0xa0] sm:$0xff]
      %v1841 = vld [vmem:[#allocation6 + $0xa8] sm:$0xff]
      %v1842 = vld [vmem:[#allocation6 + $0xb0] sm:$0xff]
      %v1843 = vld [vmem:[#allocation6 + $0xb8] sm:$0xff]
      %v1844 = vld [vmem:[#allocation6 + $0xc0] sm:$0xff]
      %v1845 = vld [vmem:[#allocation6 + $0xc8] sm:$0xff]
      %v1846 = vld [vmem:[#allocation6 + $0xd0] sm:$0xff]
      %v1847 = vld [vmem:[#allocation6 + $0xd8] sm:$0xff]
      %v1848 = vld [vmem:[#allocation6 + $0xe0] sm:$0xff]
      %v1849 = vld [vmem:[#allocation6 + $0xe8] sm:$0xff]
      %v1850 = vld [vmem:[#allocation6 + $0xf0] sm:$0xff]
      %v1851 = vld [vmem:[#allocation6 + $0xf8] sm:$0xff]
      %v1852 = vld [vmem:[#allocation6 + $0x100] sm:$0xff]
      %v1853 = vld [vmem:[#allocation6 + $0x108] sm:$0xff]
      %v1854 = vld [vmem:[#allocation6 + $0x110] sm:$0xff]
      %v1855 = vld [vmem:[#allocation6 + $0x118] sm:$0xff]
      %v1856 = vld [vmem:[#allocation6 + $0x120] sm:$0xff]
      %v1857 = vld [vmem:[#allocation6 + $0x128] sm:$0xff]
      %v1858 = vld [vmem:[#allocation6 + $0x130] sm:$0xff]
      %v1859 = vld [vmem:[#allocation6 + $0x138] sm:$0xff]
      %v1860 = vld [vmem:[#allocation6 + $0x140] sm:$0xff]
      %v1861 = vld [vmem:[#allocation6 + $0x148] sm:$0xff]
      %v1862 = vld [vmem:[#allocation6 + $0x150] sm:$0xff]
      %v1863 = vld [vmem:[#allocation6 + $0x158] sm:$0xff]
      %v1864 = vld [vmem:[#allocation6 + $0x160] sm:$0xff]
      %v1865 = vld [vmem:[#allocation6 + $0x168] sm:$0xff]
      %v1866 = vld [vmem:[#allocation6 + $0x170] sm:$0xff]
      %v1867 = vld [vmem:[#allocation6 + $0x178] sm:$0xff]
      %v1868 = vld [vmem:[#allocation6 + $0x180] sm:$0xff]
      %v1869 = vld [vmem:[#allocation6 + $0x188] sm:$0xff]
      %v1870 = vld [vmem:[#allocation6 + $0x190] sm:$0xff]
      %v1871 = vld [vmem:[#allocation6 + $0x198] sm:$0xff]
      %v1872 = vld [vmem:[#allocation6 + $0x1a0] sm:$0xff]
      %v1873 = vld [vmem:[#allocation6 + $0x1a8] sm:$0xff]
      %v1874 = vld [vmem:[#allocation6 + $0x1b0] sm:$0xff]
      %v1875 = vld [vmem:[#allocation6 + $0x1b8] sm:$0xff]
      %v1876 = vld [vmem:[#allocation6 + $0x1c0] sm:$0xff]
      %v1877 = vld [vmem:[#allocation6 + $0x1c8] sm:$0xff]
      %v1878 = vld [vmem:[#allocation6 + $0x1d0] sm:$0xff]
      %v1879 = vld [vmem:[#allocation6 + $0x1d8] sm:$0xff]
      %v1880 = vld [vmem:[#allocation6 + $0x1e0] sm:$0xff]
      %v1881 = vld [vmem:[#allocation6 + $0x1e8] sm:$0xff]
      %v1882 = vld [vmem:[#allocation6 + $0x1f0] sm:$0xff]
      %v1883 = vld [vmem:[#allocation6 + $0x1f8] sm:$0xff]
      %v1884 = vld [vmem:[#allocation8] sm:$0xff]
      %v1885 = vld [vmem:[#allocation8 + $0x8] sm:$0xff]
      %v1886 = vld [vmem:[#allocation8 + $0x10] sm:$0xff]
      %v1887 = vld [vmem:[#allocation8 + $0x18] sm:$0xff]
      %v1888 = vld [vmem:[#allocation8 + $0x20] sm:$0xff]
      %v1889 = vld [vmem:[#allocation8 + $0x28] sm:$0xff]
      %v1890 = vld [vmem:[#allocation8 + $0x30] sm:$0xff]
      %v1891 = vld [vmem:[#allocation8 + $0x38] sm:$0xff]
      %v1892 = vld [vmem:[#allocation8 + $0x40] sm:$0xff]
      %v1893 = vld [vmem:[#allocation8 + $0x48] sm:$0xff]
      %v1894 = vld [vmem:[#allocation8 + $0x50] sm:$0xff]
      %v1895 = vld [vmem:[#allocation8 + $0x58] sm:$0xff]
      %v1896 = vld [vmem:[#allocation8 + $0x60] sm:$0xff]
      %v1897 = vld [vmem:[#allocation8 + $0x68] sm:$0xff]
      %v1898 = vld [vmem:[#allocation8 + $0x70] sm:$0xff]
      %v1899 = vld [vmem:[#allocation8 + $0x78] sm:$0xff]
      %v1900 = vld [vmem:[#allocation8 + $0x80] sm:$0xff]
      %v1901 = vld [vmem:[#allocation8 + $0x88] sm:$0xff]
      %v1902 = vld [vmem:[#allocation8 + $0x90] sm:$0xff]
      %v1903 = vld [vmem:[#allocation8 + $0x98] sm:$0xff]
      %v1904 = vld [vmem:[#allocation8 + $0xa0] sm:$0xff]
      %v1905 = vld [vmem:[#allocation8 + $0xa8] sm:$0xff]
      %v1906 = vld [vmem:[#allocation8 + $0xb0] sm:$0xff]
      %v1907 = vld [vmem:[#allocation8 + $0xb8] sm:$0xff]
      %v1908 = vld [vmem:[#allocation8 + $0xc0] sm:$0xff]
      %v1909 = vld [vmem:[#allocation8 + $0xc8] sm:$0xff]
      %v1910 = vld [vmem:[#allocation8 + $0xd0] sm:$0xff]
      %v1911 = vld [vmem:[#allocation8 + $0xd8] sm:$0xff]
      %v1912 = vld [vmem:[#allocation8 + $0xe0] sm:$0xff]
      %v1913 = vld [vmem:[#allocation8 + $0xe8] sm:$0xff]
      %v1914 = vld [vmem:[#allocation8 + $0xf0] sm:$0xff]
      %v1915 = vld [vmem:[#allocation8 + $0xf8] sm:$0xff]
      %v1916 = vld [vmem:[#allocation8 + $0x100] sm:$0xff]
      %v1917 = vld [vmem:[#allocation8 + $0x108] sm:$0xff]
      %v1918 = vld [vmem:[#allocation8 + $0x110] sm:$0xff]
      %v1919 = vld [vmem:[#allocation8 + $0x118] sm:$0xff]
      %v1920 = vld [vmem:[#allocation8 + $0x120] sm:$0xff]
      %v1921 = vld [vmem:[#allocation8 + $0x128] sm:$0xff]
      %v1922 = vld [vmem:[#allocation8 + $0x130] sm:$0xff]
      %v1923 = vld [vmem:[#allocation8 + $0x138] sm:$0xff]
      %v1924 = vld [vmem:[#allocation8 + $0x140] sm:$0xff]
      %v1925 = vld [vmem:[#allocation8 + $0x148] sm:$0xff]
      %v1926 = vld [vmem:[#allocation8 + $0x150] sm:$0xff]
      %v1927 = vld [vmem:[#allocation8 + $0x158] sm:$0xff]
      %v1928 = vld [vmem:[#allocation8 + $0x160] sm:$0xff]
      %v1929 = vld [vmem:[#allocation8 + $0x168] sm:$0xff]
      %v1930 = vld [vmem:[#allocation8 + $0x170] sm:$0xff]
      %v1931 = vld [vmem:[#allocation8 + $0x178] sm:$0xff]
      %v1932 = vld [vmem:[#allocation8 + $0x180] sm:$0xff]
      %v1933 = vld [vmem:[#allocation8 + $0x188] sm:$0xff]
      %v1934 = vld [vmem:[#allocation8 + $0x190] sm:$0xff]
      %v1935 = vld [vmem:[#allocation8 + $0x198] sm:$0xff]
      %v1936 = vld [vmem:[#allocation8 + $0x1a0] sm:$0xff]
      %v1937 = vld [vmem:[#allocation8 + $0x1a8] sm:$0xff]
      %v1938 = vld [vmem:[#allocation8 + $0x1b0] sm:$0xff]
      %v1939 = vld [vmem:[#allocation8 + $0x1b8] sm:$0xff]
      %v1940 = vld [vmem:[#allocation8 + $0x1c0] sm:$0xff]
      %v1941 = vld [vmem:[#allocation8 + $0x1c8] sm:$0xff]
      %v1942 = vld [vmem:[#allocation8 + $0x1d0] sm:$0xff]
      %v1943 = vld [vmem:[#allocation8 + $0x1d8] sm:$0xff]
      %v1944 = vld [vmem:[#allocation8 + $0x1e0] sm:$0xff]
      %v1945 = vld [vmem:[#allocation8 + $0x1e8] sm:$0xff]
      %v1946 = vld [vmem:[#allocation8 + $0x1f0] sm:$0xff]
      %v1947 = vld [vmem:[#allocation8 + $0x1f8] sm:$0xff]
      %v1948 = vld [vmem:[%s6] sm:$0xf]
      %v1950 = vlaneseq
      %v1951 = vshrl.u32 %v1950, 7
      %v1952 = vsub.s32 0, %v1951
      %v1953 = vrot.slane %v1948, %v1952
      %v1954 = vlaneseq
      %v1955 = vshrl.u32 %v1954, 7
      %v1956 = vsub.s32 1, %v1955
      %v1957 = vrot.slane %v1948, %v1956
      %v1958 = vlaneseq
      %v1959 = vshrl.u32 %v1958, 7
      %v1960 = vsub.s32 2, %v1959
      %v1961 = vrot.slane %v1948, %v1960
      %v1962 = vlaneseq
      %v1963 = vshrl.u32 %v1962, 7
      %v1964 = vsub.s32 3, %v1963
      %v1965 = vrot.slane %v1948, %v1964
      %1970 = vmatprep.subr.mxu0 %v1881
      %1971 = vmatpush1.msra.mxu0 %v1880
      %1972 = vmatprep.subr.mxu0 %v1877
      %1973 = vmatpush1.msra.mxu0 %v1876
      %1974 = vmatprep.subr.mxu0 %v1873
      %1975 = vmatpush1.msra.mxu0 %v1872
      %1976 = vmatprep.subr.mxu0 %v1869
      %1977 = vmatpush1.msra.mxu0 %v1868
      %1978 = vmatprep.subr.mxu0 %v1865
      %1979 = vmatpush1.msra.mxu0 %v1864
      %1980 = vmatprep.subr.mxu0 %v1861
      %1981 = vmatpush1.msra.mxu0 %v1860
      %1982 = vmatprep.subr.mxu0 %v1857
      %1983 = vmatpush1.msra.mxu0 %v1856
      %1984 = vmatprep.subr.mxu0 %v1853
      %1985 = vmatpush1.msra.mxu0 %v1852
      %1986 = vmatprep.subr.mxu0 %v1849
      %1987 = vmatpush1.msra.mxu0 %v1848
      %1988 = vmatprep.subr.mxu0 %v1845
      %1989 = vmatpush1.msra.mxu0 %v1844
      %1990 = vmatprep.subr.mxu0 %v1841
      %1991 = vmatpush1.msra.mxu0 %v1840
      %1992 = vmatprep.subr.mxu0 %v1837
      %1993 = vmatpush1.msra.mxu0 %v1836
      %1994 = vmatprep.subr.mxu0 %v1833
      %1995 = vmatpush1.msra.mxu0 %v1832
      %1996 = vmatprep.subr.mxu0 %v1829
      %1997 = vmatpush1.msra.mxu0 %v1828
      %1998 = vmatprep.subr.mxu0 %v1825
      %1999 = vmatpush1.msra.mxu0 %v1824
      %2000 = vmatprep.subr.mxu0 %v1821
      %2001 = vmatpush1.msra.mxu0 %v1820
      %2002 = vmatprep.subr.mxu0 0.0
      %2003 = vmatpush2.msra.mxu0 0.0
      %2004 = vmatprep.subr.mxu0 0.0
      %2005 = vmatpush2.msra.mxu0 0.0
      %2006 = vmatprep.subr.mxu0 0.0
      %2007 = vmatpush2.msra.mxu0 0.0
      %2008 = vmatprep.subr.mxu0 0.0
      %2009 = vmatpush2.msra.mxu0 0.0
      %2010 = vmatprep.subr.mxu0 0.0
      %2011 = vmatpush2.msra.mxu0 0.0
      %2012 = vmatprep.subr.mxu0 0.0
      %2013 = vmatpush2.msra.mxu0 0.0
      %2014 = vmatprep.subr.mxu0 0.0
      %2015 = vmatpush2.msra.mxu0 0.0
      %2016 = vmatprep.subr.mxu0 0.0
      %2017 = vmatpush2.msra.mxu0 0.0
      %2018 = vmatprep.subr.mxu0 0.0
      %2019 = vmatpush2.msra.mxu0 0.0
      %2020 = vmatprep.subr.mxu0 0.0
      %2021 = vmatpush2.msra.mxu0 0.0
      %2022 = vmatprep.subr.mxu0 0.0
      %2023 = vmatpush2.msra.mxu0 0.0
      %2024 = vmatprep.subr.mxu0 0.0
      %2025 = vmatpush2.msra.mxu0 0.0
      %2026 = vmatprep.subr.mxu0 0.0
      %2027 = vmatpush2.msra.mxu0 0.0
      %2028 = vmatprep.subr.mxu0 0.0
      %2029 = vmatpush2.msra.mxu0 0.0
      %2030 = vmatprep.subr.mxu0 0.0
      %2031 = vmatpush2.msra.mxu0 0.0
      %2032 = vmatprep.subr.mxu0 0.0
      %2033 = vmatpush2.msra.mxu0 0.0
      %2034 = vmatprep.mubr.f32.mxu0 0.0
      %2035 = vmatmul.mubr.f32.gmra.mxu0 %v1819
      %v2036 = vpop.f32.mrf.mxu0
      %v2037 = vadd.f32 %v1953, %v2036
      %v2038 = vpop.f32.mrf.mxu0
      %v2039 = vadd.f32 %v1957, %v2038
      %2040 = vdwg.mxu0
      %2041 = vmatprep.subr.mxu0 %v1883
      %2042 = vmatpush1.msra.mxu0 %v1882
      %2043 = vmatprep.subr.mxu0 %v1879
      %2044 = vmatpush1.msra.mxu0 %v1878
      %2045 = vmatprep.subr.mxu0 %v1875
      %2046 = vmatpush1.msra.mxu0 %v1874
      %2047 = vmatprep.subr.mxu0 %v1871
      %2048 = vmatpush1.msra.mxu0 %v1870
      %2049 = vmatprep.subr.mxu0 %v1867
      %2050 = vmatpush1.msra.mxu0 %v1866
      %2051 = vmatprep.subr.mxu0 %v1863
      %2052 = vmatpush1.msra.mxu0 %v1862
      %2053 = vmatprep.subr.mxu0 %v1859
      %2054 = vmatpush1.msra.mxu0 %v1858
      %2055 = vmatprep.subr.mxu0 %v1855
      %2056 = vmatpush1.msra.mxu0 %v1854
      %2057 = vmatprep.subr.mxu0 %v1851
      %2058 = vmatpush1.msra.mxu0 %v1850
      %2059 = vmatprep.subr.mxu0 %v1847
      %2060 = vmatpush1.msra.mxu0 %v1846
      %2061 = vmatprep.subr.mxu0 %v1843
      %2062 = vmatpush1.msra.mxu0 %v1842
      %2063 = vmatprep.subr.mxu0 %v1839
      %2064 = vmatpush1.msra.mxu0 %v1838
      %2065 = vmatprep.subr.mxu0 %v1835
      %2066 = vmatpush1.msra.mxu0 %v1834
      %2067 = vmatprep.subr.mxu0 %v1831
      %2068 = vmatpush1.msra.mxu0 %v1830
      %2069 = vmatprep.subr.mxu0 %v1827
      %2070 = vmatpush1.msra.mxu0 %v1826
      %2071 = vmatprep.subr.mxu0 %v1823
      %2072 = vmatpush1.msra.mxu0 %v1822
      %2073 = vmatprep.subr.mxu0 0.0
      %2074 = vmatpush2.msra.mxu0 0.0
      %2075 = vmatprep.subr.mxu0 0.0
      %2076 = vmatpush2.msra.mxu0 0.0
      %2077 = vmatprep.subr.mxu0 0.0
      %2078 = vmatpush2.msra.mxu0 0.0
      %2079 = vmatprep.subr.mxu0 0.0
      %2080 = vmatpush2.msra.mxu0 0.0
      %2081 = vmatprep.subr.mxu0 0.0
      %2082 = vmatpush2.msra.mxu0 0.0
      %2083 = vmatprep.subr.mxu0 0.0
      %2084 = vmatpush2.msra.mxu0 0.0
      %2085 = vmatprep.subr.mxu0 0.0
      %2086 = vmatpush2.msra.mxu0 0.0
      %2087 = vmatprep.subr.mxu0 0.0
      %2088 = vmatpush2.msra.mxu0 0.0
      %2089 = vmatprep.subr.mxu0 0.0
      %2090 = vmatpush2.msra.mxu0 0.0
      %2091 = vmatprep.subr.mxu0 0.0
      %2092 = vmatpush2.msra.mxu0 0.0
      %2093 = vmatprep.subr.mxu0 0.0
      %2094 = vmatpush2.msra.mxu0 0.0
      %2095 = vmatprep.subr.mxu0 0.0
      %2096 = vmatpush2.msra.mxu0 0.0
      %2097 = vmatprep.subr.mxu0 0.0
      %2098 = vmatpush2.msra.mxu0 0.0
      %2099 = vmatprep.subr.mxu0 0.0
      %2100 = vmatpush2.msra.mxu0 0.0
      %2101 = vmatprep.subr.mxu0 0.0
      %2102 = vmatpush2.msra.mxu0 0.0
      %2103 = vmatprep.subr.mxu0 0.0
      %2104 = vmatpush2.msra.mxu0 0.0
      %2105 = vmatprep.mubr.f32.mxu0 0.0
      %2106 = vmatmul.mubr.f32.gmra.mxu0 %v1819
      %v2107 = vpop.f32.mrf.mxu0
      %v2108 = vadd.f32 %v1961, %v2107
      %v2109 = vpop.f32.mrf.mxu0
      %v2110 = vadd.f32 %v1965, %v2109
      %2111 = vdwg.mxu0
      %2112 = vmatprep.subr.mxu0 %v1945
      %2113 = vmatpush1.msra.mxu0 %v1944
      %2114 = vmatprep.subr.mxu0 %v1941
      %2115 = vmatpush1.msra.mxu0 %v1940
      %2116 = vmatprep.subr.mxu0 %v1937
      %2117 = vmatpush1.msra.mxu0 %v1936
      %2118 = vmatprep.subr.mxu0 %v1933
      %2119 = vmatpush1.msra.mxu0 %v1932
      %2120 = vmatprep.subr.mxu0 %v1929
      %2121 = vmatpush1.msra.mxu0 %v1928
      %2122 = vmatprep.subr.mxu0 %v1925
      %2123 = vmatpush1.msra.mxu0 %v1924
      %2124 = vmatprep.subr.mxu0 %v1921
      %2125 = vmatpush1.msra.mxu0 %v1920
      %2126 = vmatprep.subr.mxu0 %v1917
      %2127 = vmatpush1.msra.mxu0 %v1916
      %2128 = vmatprep.subr.mxu0 %v1913
      %2129 = vmatpush1.msra.mxu0 %v1912
      %2130 = vmatprep.subr.mxu0 %v1909
      %2131 = vmatpush1.msra.mxu0 %v1908
      %2132 = vmatprep.subr.mxu0 %v1905
      %2133 = vmatpush1.msra.mxu0 %v1904
      %2134 = vmatprep.subr.mxu0 %v1901
      %2135 = vmatpush1.msra.mxu0 %v1900
      %2136 = vmatprep.subr.mxu0 %v1897
      %2137 = vmatpush1.msra.mxu0 %v1896
      %2138 = vmatprep.subr.mxu0 %v1893
      %2139 = vmatpush1.msra.mxu0 %v1892
      %2140 = vmatprep.subr.mxu0 %v1889
      %2141 = vmatpush1.msra.mxu0 %v1888
      %2142 = vmatprep.subr.mxu0 %v1885
      %2143 = vmatpush1.msra.mxu0 %v1884
      %2144 = vmatprep.subr.mxu0 0.0
      %2145 = vmatpush2.msra.mxu0 0.0
      %2146 = vmatprep.subr.mxu0 0.0
      %2147 = vmatpush2.msra.mxu0 0.0
      %2148 = vmatprep.subr.mxu0 0.0
      %2149 = vmatpush2.msra.mxu0 0.0
      %2150 = vmatprep.subr.mxu0 0.0
      %2151 = vmatpush2.msra.mxu0 0.0
      %2152 = vmatprep.subr.mxu0 0.0
      %2153 = vmatpush2.msra.mxu0 0.0
      %2154 = vmatprep.subr.mxu0 0.0
      %2155 = vmatpush2.msra.mxu0 0.0
      %2156 = vmatprep.subr.mxu0 0.0
      %2157 = vmatpush2.msra.mxu0 0.0
      %2158 = vmatprep.subr.mxu0 0.0
      %2159 = vmatpush2.msra.mxu0 0.0
      %2160 = vmatprep.subr.mxu0 0.0
      %2161 = vmatpush2.msra.mxu0 0.0
      %2162 = vmatprep.subr.mxu0 0.0
      %2163 = vmatpush2.msra.mxu0 0.0
      %2164 = vmatprep.subr.mxu0 0.0
      %2165 = vmatpush2.msra.mxu0 0.0
      %2166 = vmatprep.subr.mxu0 0.0
      %2167 = vmatpush2.msra.mxu0 0.0
      %2168 = vmatprep.subr.mxu0 0.0
      %2169 = vmatpush2.msra.mxu0 0.0
      %2170 = vmatprep.subr.mxu0 0.0
      %2171 = vmatpush2.msra.mxu0 0.0
      %2172 = vmatprep.subr.mxu0 0.0
      %2173 = vmatpush2.msra.mxu0 0.0
      %2174 = vmatprep.subr.mxu0 0.0
      %2175 = vmatpush2.msra.mxu0 0.0
      %2176 = vmatprep.mubr.f32.mxu0 0.0
      %2177 = vmatmul.mubr.f32.gmra.mxu0 0.0
      %v2178 = vpop.f32.mrf.mxu0
      %v2179 = vadd.f32 0.0, %v2178
      %v2180 = vpop.f32.mrf.mxu0
      %v2181 = vadd.f32 0.0, %v2180
      %2182 = vdwg.mxu0
      %2183 = vmatprep.subr.mxu0 %v1947
      %2184 = vmatpush1.msra.mxu0 %v1946
      %2185 = vmatprep.subr.mxu0 %v1943
      %2186 = vmatpush1.msra.mxu0 %v1942
      %2187 = vmatprep.subr.mxu0 %v1939
      %2188 = vmatpush1.msra.mxu0 %v1938
      %2189 = vmatprep.subr.mxu0 %v1935
      %2190 = vmatpush1.msra.mxu0 %v1934
      %2191 = vmatprep.subr.mxu0 %v1931
      %2192 = vmatpush1.msra.mxu0 %v1930
      %2193 = vmatprep.subr.mxu0 %v1927
      %2194 = vmatpush1.msra.mxu0 %v1926
      %2195 = vmatprep.subr.mxu0 %v1923
      %2196 = vmatpush1.msra.mxu0 %v1922
      %2197 = vmatprep.subr.mxu0 %v1919
      %2198 = vmatpush1.msra.mxu0 %v1918
      %2199 = vmatprep.subr.mxu0 %v1915
      %2200 = vmatpush1.msra.mxu0 %v1914
      %2201 = vmatprep.subr.mxu0 %v1911
      %2202 = vmatpush1.msra.mxu0 %v1910
      %2203 = vmatprep.subr.mxu0 %v1907
      %2204 = vmatpush1.msra.mxu0 %v1906
      %2205 = vmatprep.subr.mxu0 %v1903
      %2206 = vmatpush1.msra.mxu0 %v1902
      %2207 = vmatprep.subr.mxu0 %v1899
      %2208 = vmatpush1.msra.mxu0 %v1898
      %2209 = vmatprep.subr.mxu0 %v1895
      %2210 = vmatpush1.msra.mxu0 %v1894
      %2211 = vmatprep.subr.mxu0 %v1891
      %2212 = vmatpush1.msra.mxu0 %v1890
      %2213 = vmatprep.subr.mxu0 %v1887
      %2214 = vmatpush1.msra.mxu0 %v1886
      %2215 = vmatprep.subr.mxu0 0.0
      %2216 = vmatpush2.msra.mxu0 0.0
      %2217 = vmatprep.subr.mxu0 0.0
      %2218 = vmatpush2.msra.mxu0 0.0
      %2219 = vmatprep.subr.mxu0 0.0
      %2220 = vmatpush2.msra.mxu0 0.0
      %2221 = vmatprep.subr.mxu0 0.0
      %2222 = vmatpush2.msra.mxu0 0.0
      %2223 = vmatprep.subr.mxu0 0.0
      %2224 = vmatpush2.msra.mxu0 0.0
      %2225 = vmatprep.subr.mxu0 0.0
      %2226 = vmatpush2.msra.mxu0 0.0
      %2227 = vmatprep.subr.mxu0 0.0
      %2228 = vmatpush2.msra.mxu0 0.0
      %2229 = vmatprep.subr.mxu0 0.0
      %2230 = vmatpush2.msra.mxu0 0.0
      %2231 = vmatprep.subr.mxu0 0.0
      %2232 = vmatpush2.msra.mxu0 0.0
      %2233 = vmatprep.subr.mxu0 0.0
      %2234 = vmatpush2.msra.mxu0 0.0
      %2235 = vmatprep.subr.mxu0 0.0
      %2236 = vmatpush2.msra.mxu0 0.0
      %2237 = vmatprep.subr.mxu0 0.0
      %2238 = vmatpush2.msra.mxu0 0.0
      %2239 = vmatprep.subr.mxu0 0.0
      %2240 = vmatpush2.msra.mxu0 0.0
      %2241 = vmatprep.subr.mxu0 0.0
      %2242 = vmatpush2.msra.mxu0 0.0
      %2243 = vmatprep.subr.mxu0 0.0
      %2244 = vmatpush2.msra.mxu0 0.0
      %2245 = vmatprep.subr.mxu0 0.0
      %2246 = vmatpush2.msra.mxu0 0.0
      %2247 = vmatprep.mubr.f32.mxu0 0.0
      %2248 = vmatmul.mubr.f32.gmra.mxu0 0.0
      %v2249 = vpop.f32.mrf.mxu0
      %v2250 = vadd.f32 0.0, %v2249
      %v2251 = vpop.f32.mrf.mxu0
      %v2252 = vadd.f32 0.0, %v2251
      %2253 = vdwg.mxu0
      %v2254 = vadd.f32 %v2037, %v2179
      %v2255 = vadd.f32 %v2039, %v2181
      %v2256 = vadd.f32 %v2108, %v2250
      %v2257 = vadd.f32 %v2110, %v2252
      %v2258 = vxor.u32 %v2254, 2147483648
      %v2259 = vmul.f32 %v2258, 1.442695
      %v2260 = vpow.pop %v2259
      %v2261 = vadd.f32 %v2260, 1.0
      %v2262 = vrcp.pop %v2261
      %v2263 = vmul.f32 1.0, %v2262
      %v2264 = vxor.u32 %v2255, 2147483648
      %v2265 = vmul.f32 %v2264, 1.442695
      %v2266 = vpow.pop %v2265
      %v2267 = vadd.f32 %v2266, 1.0
      %v2268 = vrcp.pop %v2267
      %v2269 = vmul.f32 1.0, %v2268
      %v2270 = vtanh.pop %v2256
      %v2271 = vxor.u32 %v2257, 2147483648
      %v2272 = vmul.f32 %v2271, 1.442695
      %v2273 = vpow.pop %v2272
      %v2274 = vadd.f32 %v2273, 1.0
      %v2275 = vrcp.pop %v2274
      %v2276 = vmul.f32 1.0, %v2275
      %v2277 = vmul.f32 %v2269, 0.0
      %v2278 = vmul.f32 %v2263, %v2270
      %v2279 = vadd.f32 %v2277, %v2278
      %v2280 = vtanh.pop %v2279
      %v2281 = vmul.f32 %v2276, %v2280
      %2282 = vst [vmem:[#allocation2] sm:$0x1] %v2281
      %2283 = vmatprep.subr.mxu0 %v1945
      %2284 = vmatpush1.msra.mxu0 %v1944
      %2285 = vmatprep.subr.mxu0 %v1941
      %2286 = vmatpush1.msra.mxu0 %v1940
      %2287 = vmatprep.subr.mxu0 %v1937
      %2288 = vmatpush1.msra.mxu0 %v1936
      %2289 = vmatprep.subr.mxu0 %v1933
      %2290 = vmatpush1.msra.mxu0 %v1932
      %2291 = vmatprep.subr.mxu0 %v1929
      %2292 = vmatpush1.msra.mxu0 %v1928
      %2293 = vmatprep.subr.mxu0 %v1925
      %2294 = vmatpush1.msra.mxu0 %v1924
      %2295 = vmatprep.subr.mxu0 %v1921
      %2296 = vmatpush1.msra.mxu0 %v1920
      %2297 = vmatprep.subr.mxu0 %v1917
      %2298 = vmatpush1.msra.mxu0 %v1916
      %2299 = vmatprep.subr.mxu0 %v1913
      %2300 = vmatpush1.msra.mxu0 %v1912
      %2301 = vmatprep.subr.mxu0 %v1909
      %2302 = vmatpush1.msra.mxu0 %v1908
      %2303 = vmatprep.subr.mxu0 %v1905
      %2304 = vmatpush1.msra.mxu0 %v1904
      %2305 = vmatprep.subr.mxu0 %v1901
      %2306 = vmatpush1.msra.mxu0 %v1900
      %2307 = vmatprep.subr.mxu0 %v1897
      %2308 = vmatpush1.msra.mxu0 %v1896
      %2309 = vmatprep.subr.mxu0 %v1893
      %2310 = vmatpush1.msra.mxu0 %v1892
      %2311 = vmatprep.subr.mxu0 %v1889
      %2312 = vmatpush1.msra.mxu0 %v1888
      %2313 = vmatprep.subr.mxu0 %v1885
      %2314 = vmatpush1.msra.mxu0 %v1884
      %2315 = vmatprep.subr.mxu0 0.0
      %2316 = vmatpush2.msra.mxu0 0.0
      %2317 = vmatprep.subr.mxu0 0.0
      %2318 = vmatpush2.msra.mxu0 0.0
      %2319 = vmatprep.subr.mxu0 0.0
      %2320 = vmatpush2.msra.mxu0 0.0
      %2321 = vmatprep.subr.mxu0 0.0
      %2322 = vmatpush2.msra.mxu0 0.0
      %2323 = vmatprep.subr.mxu0 0.0
      %2324 = vmatpush2.msra.mxu0 0.0
      %2325 = vmatprep.subr.mxu0 0.0
      %2326 = vmatpush2.msra.mxu0 0.0
      %2327 = vmatprep.subr.mxu0 0.0
      %2328 = vmatpush2.msra.mxu0 0.0
      %2329 = vmatprep.subr.mxu0 0.0
      %2330 = vmatpush2.msra.mxu0 0.0
      %2331 = vmatprep.subr.mxu0 0.0
      %2332 = vmatpush2.msra.mxu0 0.0
      %2333 = vmatprep.subr.mxu0 0.0
      %2334 = vmatpush2.msra.mxu0 0.0
      %2335 = vmatprep.subr.mxu0 0.0
      %2336 = vmatpush2.msra.mxu0 0.0
      %2337 = vmatprep.subr.mxu0 0.0
      %2338 = vmatpush2.msra.mxu0 0.0
      %2339 = vmatprep.subr.mxu0 0.0
      %2340 = vmatpush2.msra.mxu0 0.0
      %2341 = vmatprep.subr.mxu0 0.0
      %2342 = vmatpush2.msra.mxu0 0.0
      %2343 = vmatprep.subr.mxu0 0.0
      %2344 = vmatpush2.msra.mxu0 0.0
      %2345 = vmatprep.subr.mxu0 0.0
      %2346 = vmatpush2.msra.mxu0 0.0
      %2347 = vmatprep.mubr.f32.mxu0 0.0
      %2348 = vmatmul.mubr.f32.gmra.mxu0 %v2281
      %v2349 = vpop.f32.mrf.mxu0
      %v2350 = vadd.f32 0.0, %v2349
      %v2351 = vpop.f32.mrf.mxu0
      %v2352 = vadd.f32 0.0, %v2351
      %2353 = vdwg.mxu0
      %2354 = vmatprep.subr.mxu0 %v1947
      %2355 = vmatpush1.msra.mxu0 %v1946
      %2356 = vmatprep.subr.mxu0 %v1943
      %2357 = vmatpush1.msra.mxu0 %v1942
      %2358 = vmatprep.subr.mxu0 %v1939
      %2359 = vmatpush1.msra.mxu0 %v1938
      %2360 = vmatprep.subr.mxu0 %v1935
      %2361 = vmatpush1.msra.mxu0 %v1934
      %2362 = vmatprep.subr.mxu0 %v1931
      %2363 = vmatpush1.msra.mxu0 %v1930
      %2364 = vmatprep.subr.mxu0 %v1927
      %2365 = vmatpush1.msra.mxu0 %v1926
      %2366 = vmatprep.subr.mxu0 %v1923
      %2367 = vmatpush1.msra.mxu0 %v1922
      %2368 = vmatprep.subr.mxu0 %v1919
      %2369 = vmatpush1.msra.mxu0 %v1918
      %2370 = vmatprep.subr.mxu0 %v1915
      %2371 = vmatpush1.msra.mxu0 %v1914
      %2372 = vmatprep.subr.mxu0 %v1911
      %2373 = vmatpush1.msra.mxu0 %v1910
      %2374 = vmatprep.subr.mxu0 %v1907
      %2375 = vmatpush1.msra.mxu0 %v1906
      %2376 = vmatprep.subr.mxu0 %v1903
      %2377 = vmatpush1.msra.mxu0 %v1902
      %2378 = vmatprep.subr.mxu0 %v1899
      %2379 = vmatpush1.msra.mxu0 %v1898
      %2380 = vmatprep.subr.mxu0 %v1895
      %2381 = vmatpush1.msra.mxu0 %v1894
      %2382 = vmatprep.subr.mxu0 %v1891
      %2383 = vmatpush1.msra.mxu0 %v1890
      %2384 = vmatprep.subr.mxu0 %v1887
      %2385 = vmatpush1.msra.mxu0 %v1886
      %2386 = vmatprep.subr.mxu0 0.0
      %2387 = vmatpush2.msra.mxu0 0.0
      %2388 = vmatprep.subr.mxu0 0.0
      %2389 = vmatpush2.msra.mxu0 0.0
      %2390 = vmatprep.subr.mxu0 0.0
      %2391 = vmatpush2.msra.mxu0 0.0
      %2392 = vmatprep.subr.mxu0 0.0
      %2393 = vmatpush2.msra.mxu0 0.0
      %2394 = vmatprep.subr.mxu0 0.0
      %2395 = vmatpush2.msra.mxu0 0.0
      %2396 = vmatprep.subr.mxu0 0.0
      %2397 = vmatpush2.msra.mxu0 0.0
      %2398 = vmatprep.subr.mxu0 0.0
      %2399 = vmatpush2.msra.mxu0 0.0
      %2400 = vmatprep.subr.mxu0 0.0
      %2401 = vmatpush2.msra.mxu0 0.0
      %2402 = vmatprep.subr.mxu0 0.0
      %2403 = vmatpush2.msra.mxu0 0.0
      %2404 = vmatprep.subr.mxu0 0.0
      %2405 = vmatpush2.msra.mxu0 0.0
      %2406 = vmatprep.subr.mxu0 0.0
      %2407 = vmatpush2.msra.mxu0 0.0
      %2408 = vmatprep.subr.mxu0 0.0
      %2409 = vmatpush2.msra.mxu0 0.0
      %2410 = vmatprep.subr.mxu0 0.0
      %2411 = vmatpush2.msra.mxu0 0.0
      %2412 = vmatprep.subr.mxu0 0.0
      %2413 = vmatpush2.msra.mxu0 0.0
      %2414 = vmatprep.subr.mxu0 0.0
      %2415 = vmatpush2.msra.mxu0 0.0
      %2416 = vmatprep.subr.mxu0 0.0
      %2417 = vmatpush2.msra.mxu0 0.0
      %2418 = vmatprep.mubr.f32.mxu0 0.0
      %2419 = vmatmul.mubr.f32.gmra.mxu0 %v2281
      %v2420 = vpop.f32.mrf.mxu0
      %v2421 = vadd.f32 0.0, %v2420
      %v2422 = vpop.f32.mrf.mxu0
      %v2423 = vadd.f32 0.0, %v2422
      %2424 = vdwg.mxu0
      %v2429 = vrot.slane %v2350, 7
      %v2430 = vrot.slane %v2352, 7
      %v2431 = vrot.slane %v2421, 7
      %v2432 = vrot.slane %v2423, 7
      %v2437 = vadd.f32 %v2037, %v2429
      %v2438 = vadd.f32 %v2039, %v2430
      %v2439 = vadd.f32 %v2108, %v2431
      %v2440 = vadd.f32 %v2110, %v2432
      %v2441 = vxor.u32 %v2437, 2147483648
      %v2442 = vmul.f32 %v2441, 1.442695
      %v2443 = vpow.pop %v2442
      %v2444 = vadd.f32 %v2443, 1.0
      %v2445 = vrcp.pop %v2444
      %v2446 = vmul.f32 1.0, %v2445
      %v2447 = vxor.u32 %v2438, 2147483648
      %v2448 = vmul.f32 %v2447, 1.442695
      %v2449 = vpow.pop %v2448
      %v2450 = vadd.f32 %v2449, 1.0
      %v2451 = vrcp.pop %v2450
      %v2452 = vmul.f32 1.0, %v2451
      %v2453 = vtanh.pop %v2439
      %v2454 = vxor.u32 %v2440, 2147483648
      %v2455 = vmul.f32 %v2454, 1.442695
      %v2456 = vpow.pop %v2455
      %v2457 = vadd.f32 %v2456, 1.0
      %v2458 = vrcp.pop %v2457
      %v2459 = vmul.f32 1.0, %v2458
      %v2461 = vrot.slane %v2279, 7
      %v2463 = vmul.f32 %v2452, %v2461
      %v2464 = vmul.f32 %v2446, %v2453
      %v2465 = vadd.f32 %v2463, %v2464
      %v2466 = vtanh.pop %v2465
      %v2467 = vmul.f32 %v2459, %v2466
      %2468 = vst [vmem:[#allocation2] sm:$0x2] %v2467
      %v2470 = vrot.slane %v2467, 1
      %2472 = vmatprep.subr.mxu0 %v1945
      %2473 = vmatpush1.msra.mxu0 %v1944
      %2474 = vmatprep.subr.mxu0 %v1941
      %2475 = vmatpush1.msra.mxu0 %v1940
      %2476 = vmatprep.subr.mxu0 %v1937
      %2477 = vmatpush1.msra.mxu0 %v1936
      %2478 = vmatprep.subr.mxu0 %v1933
      %2479 = vmatpush1.msra.mxu0 %v1932
      %2480 = vmatprep.subr.mxu0 %v1929
      %2481 = vmatpush1.msra.mxu0 %v1928
      %2482 = vmatprep.subr.mxu0 %v1925
      %2483 = vmatpush1.msra.mxu0 %v1924
      %2484 = vmatprep.subr.mxu0 %v1921
      %2485 = vmatpush1.msra.mxu0 %v1920
      %2486 = vmatprep.subr.mxu0 %v1917
      %2487 = vmatpush1.msra.mxu0 %v1916
      %2488 = vmatprep.subr.mxu0 %v1913
      %2489 = vmatpush1.msra.mxu0 %v1912
      %2490 = vmatprep.subr.mxu0 %v1909
      %2491 = vmatpush1.msra.mxu0 %v1908
      %2492 = vmatprep.subr.mxu0 %v1905
      %2493 = vmatpush1.msra.mxu0 %v1904
      %2494 = vmatprep.subr.mxu0 %v1901
      %2495 = vmatpush1.msra.mxu0 %v1900
      %2496 = vmatprep.subr.mxu0 %v1897
      %2497 = vmatpush1.msra.mxu0 %v1896
      %2498 = vmatprep.subr.mxu0 %v1893
      %2499 = vmatpush1.msra.mxu0 %v1892
      %2500 = vmatprep.subr.mxu0 %v1889
      %2501 = vmatpush1.msra.mxu0 %v1888
      %2502 = vmatprep.subr.mxu0 %v1885
      %2503 = vmatpush1.msra.mxu0 %v1884
      %2504 = vmatprep.subr.mxu0 0.0
      %2505 = vmatpush2.msra.mxu0 0.0
      %2506 = vmatprep.subr.mxu0 0.0
      %2507 = vmatpush2.msra.mxu0 0.0
      %2508 = vmatprep.subr.mxu0 0.0
      %2509 = vmatpush2.msra.mxu0 0.0
      %2510 = vmatprep.subr.mxu0 0.0
      %2511 = vmatpush2.msra.mxu0 0.0
      %2512 = vmatprep.subr.mxu0 0.0
      %2513 = vmatpush2.msra.mxu0 0.0
      %2514 = vmatprep.subr.mxu0 0.0
      %2515 = vmatpush2.msra.mxu0 0.0
      %2516 = vmatprep.subr.mxu0 0.0
      %2517 = vmatpush2.msra.mxu0 0.0
      %2518 = vmatprep.subr.mxu0 0.0
      %2519 = vmatpush2.msra.mxu0 0.0
      %2520 = vmatprep.subr.mxu0 0.0
      %2521 = vmatpush2.msra.mxu0 0.0
      %2522 = vmatprep.subr.mxu0 0.0
      %2523 = vmatpush2.msra.mxu0 0.0
      %2524 = vmatprep.subr.mxu0 0.0
      %2525 = vmatpush2.msra.mxu0 0.0
      %2526 = vmatprep.subr.mxu0 0.0
      %2527 = vmatpush2.msra.mxu0 0.0
      %2528 = vmatprep.subr.mxu0 0.0
      %2529 = vmatpush2.msra.mxu0 0.0
      %2530 = vmatprep.subr.mxu0 0.0
      %2531 = vmatpush2.msra.mxu0 0.0
      %2532 = vmatprep.subr.mxu0 0.0
      %2533 = vmatpush2.msra.mxu0 0.0
      %2534 = vmatprep.subr.mxu0 0.0
      %2535 = vmatpush2.msra.mxu0 0.0
      %2536 = vmatprep.mubr.f32.mxu0 0.0
      %2537 = vmatmul.mubr.f32.gmra.mxu0 %v2470
      %v2538 = vpop.f32.mrf.mxu0
      %v2539 = vadd.f32 0.0, %v2538
      %v2540 = vpop.f32.mrf.mxu0
      %v2541 = vadd.f32 0.0, %v2540
      %2542 = vdwg.mxu0
      %2543 = vmatprep.subr.mxu0 %v1947
      %2544 = vmatpush1.msra.mxu0 %v1946
      %2545 = vmatprep.subr.mxu0 %v1943
      %2546 = vmatpush1.msra.mxu0 %v1942
      %2547 = vmatprep.subr.mxu0 %v1939
      %2548 = vmatpush1.msra.mxu0 %v1938
      %2549 = vmatprep.subr.mxu0 %v1935
      %2550 = vmatpush1.msra.mxu0 %v1934
      %2551 = vmatprep.subr.mxu0 %v1931
      %2552 = vmatpush1.msra.mxu0 %v1930
      %2553 = vmatprep.subr.mxu0 %v1927
      %2554 = vmatpush1.msra.mxu0 %v1926
      %2555 = vmatprep.subr.mxu0 %v1923
      %2556 = vmatpush1.msra.mxu0 %v1922
      %2557 = vmatprep.subr.mxu0 %v1919
      %2558 = vmatpush1.msra.mxu0 %v1918
      %2559 = vmatprep.subr.mxu0 %v1915
      %2560 = vmatpush1.msra.mxu0 %v1914
      %2561 = vmatprep.subr.mxu0 %v1911
      %2562 = vmatpush1.msra.mxu0 %v1910
      %2563 = vmatprep.subr.mxu0 %v1907
      %2564 = vmatpush1.msra.mxu0 %v1906
      %2565 = vmatprep.subr.mxu0 %v1903
      %2566 = vmatpush1.msra.mxu0 %v1902
      %2567 = vmatprep.subr.mxu0 %v1899
      %2568 = vmatpush1.msra.mxu0 %v1898
      %2569 = vmatprep.subr.mxu0 %v1895
      %2570 = vmatpush1.msra.mxu0 %v1894
      %2571 = vmatprep.subr.mxu0 %v1891
      %2572 = vmatpush1.msra.mxu0 %v1890
      %2573 = vmatprep.subr.mxu0 %v1887
      %2574 = vmatpush1.msra.mxu0 %v1886
      %2575 = vmatprep.subr.mxu0 0.0
      %2576 = vmatpush2.msra.mxu0 0.0
      %2577 = vmatprep.subr.mxu0 0.0
      %2578 = vmatpush2.msra.mxu0 0.0
      %2579 = vmatprep.subr.mxu0 0.0
      %2580 = vmatpush2.msra.mxu0 0.0
      %2581 = vmatprep.subr.mxu0 0.0
      %2582 = vmatpush2.msra.mxu0 0.0
      %2583 = vmatprep.subr.mxu0 0.0
      %2584 = vmatpush2.msra.mxu0 0.0
      %2585 = vmatprep.subr.mxu0 0.0
      %2586 = vmatpush2.msra.mxu0 0.0
      %2587 = vmatprep.subr.mxu0 0.0
      %2588 = vmatpush2.msra.mxu0 0.0
      %2589 = vmatprep.subr.mxu0 0.0
      %2590 = vmatpush2.msra.mxu0 0.0
      %2591 = vmatprep.subr.mxu0 0.0
      %2592 = vmatpush2.msra.mxu0 0.0
      %2593 = vmatprep.subr.mxu0 0.0
      %2594 = vmatpush2.msra.mxu0 0.0
      %2595 = vmatprep.subr.mxu0 0.0
      %2596 = vmatpush2.msra.mxu0 0.0
      %2597 = vmatprep.subr.mxu0 0.0
      %2598 = vmatpush2.msra.mxu0 0.0
      %2599 = vmatprep.subr.mxu0 0.0
      %2600 = vmatpush2.msra.mxu0 0.0
      %2601 = vmatprep.subr.mxu0 0.0
      %2602 = vmatpush2.msra.mxu0 0.0
      %2603 = vmatprep.subr.mxu0 0.0
      %2604 = vmatpush2.msra.mxu0 0.0
      %2605 = vmatprep.subr.mxu0 0.0
      %2606 = vmatpush2.msra.mxu0 0.0
      %2607 = vmatprep.mubr.f32.mxu0 0.0
      %2608 = vmatmul.mubr.f32.gmra.mxu0 %v2470
      %v2609 = vpop.f32.mrf.mxu0
      %v2610 = vadd.f32 0.0, %v2609
      %v2611 = vpop.f32.mrf.mxu0
      %v2612 = vadd.f32 0.0, %v2611
      %2613 = vdwg.mxu0
      %v2618 = vrot.slane %v2539, 6
      %v2619 = vrot.slane %v2541, 6
      %v2620 = vrot.slane %v2610, 6
      %v2621 = vrot.slane %v2612, 6
      %v2626 = vadd.f32 %v2037, %v2618
      %v2627 = vadd.f32 %v2039, %v2619
      %v2628 = vadd.f32 %v2108, %v2620
      %v2629 = vadd.f32 %v2110, %v2621
      %v2630 = vxor.u32 %v2626, 2147483648
      %v2631 = vmul.f32 %v2630, 1.442695
      %v2632 = vpow.pop %v2631
      %v2633 = vadd.f32 %v2632, 1.0
      %v2634 = vrcp.pop %v2633
      %v2635 = vmul.f32 1.0, %v2634
      %v2636 = vxor.u32 %v2627, 2147483648
      %v2637 = vmul.f32 %v2636, 1.442695
      %v2638 = vpow.pop %v2637
      %v2639 = vadd.f32 %v2638, 1.0
      %v2640 = vrcp.pop %v2639
      %v2641 = vmul.f32 1.0, %v2640
      %v2642 = vtanh.pop %v2628
      %v2643 = vxor.u32 %v2629, 2147483648
      %v2644 = vmul.f32 %v2643, 1.442695
      %v2645 = vpow.pop %v2644
      %v2646 = vadd.f32 %v2645, 1.0
      %v2647 = vrcp.pop %v2646
      %v2648 = vmul.f32 1.0, %v2647
      %v2650 = vrot.slane %v2465, 7
      %v2652 = vmul.f32 %v2641, %v2650
      %v2653 = vmul.f32 %v2635, %v2642
      %v2654 = vadd.f32 %v2652, %v2653
      %v2655 = vtanh.pop %v2654
      %v2656 = vmul.f32 %v2648, %v2655
      %2657 = vst [vmem:[#allocation2] sm:$0x4] %v2656
      %v2659 = vrot.slane %v2656, 2
      %2661 = vmatprep.subr.mxu0 %v1945
      %2662 = vmatpush1.msra.mxu0 %v1944
      %2663 = vmatprep.subr.mxu0 %v1941
      %2664 = vmatpush1.msra.mxu0 %v1940
      %2665 = vmatprep.subr.mxu0 %v1937
      %2666 = vmatpush1.msra.mxu0 %v1936
      %2667 = vmatprep.subr.mxu0 %v1933
      %2668 = vmatpush1.msra.mxu0 %v1932
      %2669 = vmatprep.subr.mxu0 %v1929
      %2670 = vmatpush1.msra.mxu0 %v1928
      %2671 = vmatprep.subr.mxu0 %v1925
      %2672 = vmatpush1.msra.mxu0 %v1924
      %2673 = vmatprep.subr.mxu0 %v1921
      %2674 = vmatpush1.msra.mxu0 %v1920
      %2675 = vmatprep.subr.mxu0 %v1917
      %2676 = vmatpush1.msra.mxu0 %v1916
      %2677 = vmatprep.subr.mxu0 %v1913
      %2678 = vmatpush1.msra.mxu0 %v1912
      %2679 = vmatprep.subr.mxu0 %v1909
      %2680 = vmatpush1.msra.mxu0 %v1908
      %2681 = vmatprep.subr.mxu0 %v1905
      %2682 = vmatpush1.msra.mxu0 %v1904
      %2683 = vmatprep.subr.mxu0 %v1901
      %2684 = vmatpush1.msra.mxu0 %v1900
      %2685 = vmatprep.subr.mxu0 %v1897
      %2686 = vmatpush1.msra.mxu0 %v1896
      %2687 = vmatprep.subr.mxu0 %v1893
      %2688 = vmatpush1.msra.mxu0 %v1892
      %2689 = vmatprep.subr.mxu0 %v1889
      %2690 = vmatpush1.msra.mxu0 %v1888
      %2691 = vmatprep.subr.mxu0 %v1885
      %2692 = vmatpush1.msra.mxu0 %v1884
      %2693 = vmatprep.subr.mxu0 0.0
      %2694 = vmatpush2.msra.mxu0 0.0
      %2695 = vmatprep.subr.mxu0 0.0
      %2696 = vmatpush2.msra.mxu0 0.0
      %2697 = vmatprep.subr.mxu0 0.0
      %2698 = vmatpush2.msra.mxu0 0.0
      %2699 = vmatprep.subr.mxu0 0.0
      %2700 = vmatpush2.msra.mxu0 0.0
      %2701 = vmatprep.subr.mxu0 0.0
      %2702 = vmatpush2.msra.mxu0 0.0
      %2703 = vmatprep.subr.mxu0 0.0
      %2704 = vmatpush2.msra.mxu0 0.0
      %2705 = vmatprep.subr.mxu0 0.0
      %2706 = vmatpush2.msra.mxu0 0.0
      %2707 = vmatprep.subr.mxu0 0.0
      %2708 = vmatpush2.msra.mxu0 0.0
      %2709 = vmatprep.subr.mxu0 0.0
      %2710 = vmatpush2.msra.mxu0 0.0
      %2711 = vmatprep.subr.mxu0 0.0
      %2712 = vmatpush2.msra.mxu0 0.0
      %2713 = vmatprep.subr.mxu0 0.0
      %2714 = vmatpush2.msra.mxu0 0.0
      %2715 = vmatprep.subr.mxu0 0.0
      %2716 = vmatpush2.msra.mxu0 0.0
      %2717 = vmatprep.subr.mxu0 0.0
      %2718 = vmatpush2.msra.mxu0 0.0
      %2719 = vmatprep.subr.mxu0 0.0
      %2720 = vmatpush2.msra.mxu0 0.0
      %2721 = vmatprep.subr.mxu0 0.0
      %2722 = vmatpush2.msra.mxu0 0.0
      %2723 = vmatprep.subr.mxu0 0.0
      %2724 = vmatpush2.msra.mxu0 0.0
      %2725 = vmatprep.mubr.f32.mxu0 0.0
      %2726 = vmatmul.mubr.f32.gmra.mxu0 %v2659
      %v2727 = vpop.f32.mrf.mxu0
      %v2728 = vadd.f32 0.0, %v2727
      %v2729 = vpop.f32.mrf.mxu0
      %v2730 = vadd.f32 0.0, %v2729
      %2731 = vdwg.mxu0
      %2732 = vmatprep.subr.mxu0 %v1947
      %2733 = vmatpush1.msra.mxu0 %v1946
      %2734 = vmatprep.subr.mxu0 %v1943
      %2735 = vmatpush1.msra.mxu0 %v1942
      %2736 = vmatprep.subr.mxu0 %v1939
      %2737 = vmatpush1.msra.mxu0 %v1938
      %2738 = vmatprep.subr.mxu0 %v1935
      %2739 = vmatpush1.msra.mxu0 %v1934
      %2740 = vmatprep.subr.mxu0 %v1931
      %2741 = vmatpush1.msra.mxu0 %v1930
      %2742 = vmatprep.subr.mxu0 %v1927
      %2743 = vmatpush1.msra.mxu0 %v1926
      %2744 = vmatprep.subr.mxu0 %v1923
      %2745 = vmatpush1.msra.mxu0 %v1922
      %2746 = vmatprep.subr.mxu0 %v1919
      %2747 = vmatpush1.msra.mxu0 %v1918
      %2748 = vmatprep.subr.mxu0 %v1915
      %2749 = vmatpush1.msra.mxu0 %v1914
      %2750 = vmatprep.subr.mxu0 %v1911
      %2751 = vmatpush1.msra.mxu0 %v1910
      %2752 = vmatprep.subr.mxu0 %v1907
      %2753 = vmatpush1.msra.mxu0 %v1906
      %2754 = vmatprep.subr.mxu0 %v1903
      %2755 = vmatpush1.msra.mxu0 %v1902
      %2756 = vmatprep.subr.mxu0 %v1899
      %2757 = vmatpush1.msra.mxu0 %v1898
      %2758 = vmatprep.subr.mxu0 %v1895
      %2759 = vmatpush1.msra.mxu0 %v1894
      %2760 = vmatprep.subr.mxu0 %v1891
      %2761 = vmatpush1.msra.mxu0 %v1890
      %2762 = vmatprep.subr.mxu0 %v1887
      %2763 = vmatpush1.msra.mxu0 %v1886
      %2764 = vmatprep.subr.mxu0 0.0
      %2765 = vmatpush2.msra.mxu0 0.0
      %2766 = vmatprep.subr.mxu0 0.0
      %2767 = vmatpush2.msra.mxu0 0.0
      %2768 = vmatprep.subr.mxu0 0.0
      %2769 = vmatpush2.msra.mxu0 0.0
      %2770 = vmatprep.subr.mxu0 0.0
      %2771 = vmatpush2.msra.mxu0 0.0
      %2772 = vmatprep.subr.mxu0 0.0
      %2773 = vmatpush2.msra.mxu0 0.0
      %2774 = vmatprep.subr.mxu0 0.0
      %2775 = vmatpush2.msra.mxu0 0.0
      %2776 = vmatprep.subr.mxu0 0.0
      %2777 = vmatpush2.msra.mxu0 0.0
      %2778 = vmatprep.subr.mxu0 0.0
      %2779 = vmatpush2.msra.mxu0 0.0
      %2780 = vmatprep.subr.mxu0 0.0
      %2781 = vmatpush2.msra.mxu0 0.0
      %2782 = vmatprep.subr.mxu0 0.0
      %2783 = vmatpush2.msra.mxu0 0.0
      %2784 = vmatprep.subr.mxu0 0.0
      %2785 = vmatpush2.msra.mxu0 0.0
      %2786 = vmatprep.subr.mxu0 0.0
      %2787 = vmatpush2.msra.mxu0 0.0
      %2788 = vmatprep.subr.mxu0 0.0
      %2789 = vmatpush2.msra.mxu0 0.0
      %2790 = vmatprep.subr.mxu0 0.0
      %2791 = vmatpush2.msra.mxu0 0.0
      %2792 = vmatprep.subr.mxu0 0.0
      %2793 = vmatpush2.msra.mxu0 0.0
      %2794 = vmatprep.subr.mxu0 0.0
      %2795 = vmatpush2.msra.mxu0 0.0
      %2796 = vmatprep.mubr.f32.mxu0 0.0
      %2797 = vmatmul.mubr.f32.gmra.mxu0 %v2659
      %v2798 = vpop.f32.mrf.mxu0
      %v2799 = vadd.f32 0.0, %v2798
      %v2800 = vpop.f32.mrf.mxu0
      %v2801 = vadd.f32 0.0, %v2800
      %2802 = vdwg.mxu0
      %v2807 = vrot.slane %v2728, 5
      %v2808 = vrot.slane %v2730, 5
      %v2809 = vrot.slane %v2799, 5
      %v2810 = vrot.slane %v2801, 5
      %v2815 = vadd.f32 %v2037, %v2807
      %v2816 = vadd.f32 %v2039, %v2808
      %v2817 = vadd.f32 %v2108, %v2809
      %v2818 = vadd.f32 %v2110, %v2810
      %v2819 = vxor.u32 %v2815, 2147483648
      %v2820 = vmul.f32 %v2819, 1.442695
      %v2821 = vpow.pop %v2820
      %v2822 = vadd.f32 %v2821, 1.0
      %v2823 = vrcp.pop %v2822
      %v2824 = vmul.f32 1.0, %v2823
      %v2825 = vxor.u32 %v2816, 2147483648
      %v2826 = vmul.f32 %v2825, 1.442695
      %v2827 = vpow.pop %v2826
      %v2828 = vadd.f32 %v2827, 1.0
      %v2829 = vrcp.pop %v2828
      %v2830 = vmul.f32 1.0, %v2829
      %v2831 = vtanh.pop %v2817
      %v2832 = vxor.u32 %v2818, 2147483648
      %v2833 = vmul.f32 %v2832, 1.442695
      %v2834 = vpow.pop %v2833
      %v2835 = vadd.f32 %v2834, 1.0
      %v2836 = vrcp.pop %v2835
      %v2837 = vmul.f32 1.0, %v2836
      %v2839 = vrot.slane %v2654, 7
      %v2841 = vmul.f32 %v2830, %v2839
      %v2842 = vmul.f32 %v2824, %v2831
      %v2843 = vadd.f32 %v2841, %v2842
      %v2844 = vtanh.pop %v2843
      %v2845 = vmul.f32 %v2837, %v2844
      %2846 = vst [vmem:[#allocation2] sm:$0x8] %v2845
      %v2848 = vrot.slane %v2845, 3
      %2850 = vmatprep.subr.mxu0 %v1945
      %2851 = vmatpush1.msra.mxu0 %v1944
      %2852 = vmatprep.subr.mxu0 %v1941
      %2853 = vmatpush1.msra.mxu0 %v1940
      %2854 = vmatprep.subr.mxu0 %v1937
      %2855 = vmatpush1.msra.mxu0 %v1936
      %2856 = vmatprep.subr.mxu0 %v1933
      %2857 = vmatpush1.msra.mxu0 %v1932
      %2858 = vmatprep.subr.mxu0 %v1929
      %2859 = vmatpush1.msra.mxu0 %v1928
      %2860 = vmatprep.subr.mxu0 %v1925
      %2861 = vmatpush1.msra.mxu0 %v1924
      %2862 = vmatprep.subr.mxu0 %v1921
      %2863 = vmatpush1.msra.mxu0 %v1920
      %2864 = vmatprep.subr.mxu0 %v1917
      %2865 = vmatpush1.msra.mxu0 %v1916
      %2866 = vmatprep.subr.mxu0 %v1913
      %2867 = vmatpush1.msra.mxu0 %v1912
      %2868 = vmatprep.subr.mxu0 %v1909
      %2869 = vmatpush1.msra.mxu0 %v1908
      %2870 = vmatprep.subr.mxu0 %v1905
      %2871 = vmatpush1.msra.mxu0 %v1904
      %2872 = vmatprep.subr.mxu0 %v1901
      %2873 = vmatpush1.msra.mxu0 %v1900
      %2874 = vmatprep.subr.mxu0 %v1897
      %2875 = vmatpush1.msra.mxu0 %v1896
      %2876 = vmatprep.subr.mxu0 %v1893
      %2877 = vmatpush1.msra.mxu0 %v1892
      %2878 = vmatprep.subr.mxu0 %v1889
      %2879 = vmatpush1.msra.mxu0 %v1888
      %2880 = vmatprep.subr.mxu0 %v1885
      %2881 = vmatpush1.msra.mxu0 %v1884
      %2882 = vmatprep.subr.mxu0 0.0
      %2883 = vmatpush2.msra.mxu0 0.0
      %2884 = vmatprep.subr.mxu0 0.0
      %2885 = vmatpush2.msra.mxu0 0.0
      %2886 = vmatprep.subr.mxu0 0.0
      %2887 = vmatpush2.msra.mxu0 0.0
      %2888 = vmatprep.subr.mxu0 0.0
      %2889 = vmatpush2.msra.mxu0 0.0
      %2890 = vmatprep.subr.mxu0 0.0
      %2891 = vmatpush2.msra.mxu0 0.0
      %2892 = vmatprep.subr.mxu0 0.0
      %2893 = vmatpush2.msra.mxu0 0.0
      %2894 = vmatprep.subr.mxu0 0.0
      %2895 = vmatpush2.msra.mxu0 0.0
      %2896 = vmatprep.subr.mxu0 0.0
      %2897 = vmatpush2.msra.mxu0 0.0
      %2898 = vmatprep.subr.mxu0 0.0
      %2899 = vmatpush2.msra.mxu0 0.0
      %2900 = vmatprep.subr.mxu0 0.0
      %2901 = vmatpush2.msra.mxu0 0.0
      %2902 = vmatprep.subr.mxu0 0.0
      %2903 = vmatpush2.msra.mxu0 0.0
      %2904 = vmatprep.subr.mxu0 0.0
      %2905 = vmatpush2.msra.mxu0 0.0
      %2906 = vmatprep.subr.mxu0 0.0
      %2907 = vmatpush2.msra.mxu0 0.0
      %2908 = vmatprep.subr.mxu0 0.0
      %2909 = vmatpush2.msra.mxu0 0.0
      %2910 = vmatprep.subr.mxu0 0.0
      %2911 = vmatpush2.msra.mxu0 0.0
      %2912 = vmatprep.subr.mxu0 0.0
      %2913 = vmatpush2.msra.mxu0 0.0
      %2914 = vmatprep.mubr.f32.mxu0 0.0
      %2915 = vmatmul.mubr.f32.gmra.mxu0 %v2848
      %v2916 = vpop.f32.mrf.mxu0
      %v2917 = vadd.f32 0.0, %v2916
      %v2918 = vpop.f32.mrf.mxu0
      %v2919 = vadd.f32 0.0, %v2918
      %2920 = vdwg.mxu0
      %2921 = vmatprep.subr.mxu0 %v1947
      %2922 = vmatpush1.msra.mxu0 %v1946
      %2923 = vmatprep.subr.mxu0 %v1943
      %2924 = vmatpush1.msra.mxu0 %v1942
      %2925 = vmatprep.subr.mxu0 %v1939
      %2926 = vmatpush1.msra.mxu0 %v1938
      %2927 = vmatprep.subr.mxu0 %v1935
      %2928 = vmatpush1.msra.mxu0 %v1934
      %2929 = vmatprep.subr.mxu0 %v1931
      %2930 = vmatpush1.msra.mxu0 %v1930
      %2931 = vmatprep.subr.mxu0 %v1927
      %2932 = vmatpush1.msra.mxu0 %v1926
      %2933 = vmatprep.subr.mxu0 %v1923
      %2934 = vmatpush1.msra.mxu0 %v1922
      %2935 = vmatprep.subr.mxu0 %v1919
      %2936 = vmatpush1.msra.mxu0 %v1918
      %2937 = vmatprep.subr.mxu0 %v1915
      %2938 = vmatpush1.msra.mxu0 %v1914
      %2939 = vmatprep.subr.mxu0 %v1911
      %2940 = vmatpush1.msra.mxu0 %v1910
      %2941 = vmatprep.subr.mxu0 %v1907
      %2942 = vmatpush1.msra.mxu0 %v1906
      %2943 = vmatprep.subr.mxu0 %v1903
      %2944 = vmatpush1.msra.mxu0 %v1902
      %2945 = vmatprep.subr.mxu0 %v1899
      %2946 = vmatpush1.msra.mxu0 %v1898
      %2947 = vmatprep.subr.mxu0 %v1895
      %2948 = vmatpush1.msra.mxu0 %v1894
      %2949 = vmatprep.subr.mxu0 %v1891
      %2950 = vmatpush1.msra.mxu0 %v1890
      %2951 = vmatprep.subr.mxu0 %v1887
      %2952 = vmatpush1.msra.mxu0 %v1886
      %2953 = vmatprep.subr.mxu0 0.0
      %2954 = vmatpush2.msra.mxu0 0.0
      %2955 = vmatprep.subr.mxu0 0.0
      %2956 = vmatpush2.msra.mxu0 0.0
      %2957 = vmatprep.subr.mxu0 0.0
      %2958 = vmatpush2.msra.mxu0 0.0
      %2959 = vmatprep.subr.mxu0 0.0
      %2960 = vmatpush2.msra.mxu0 0.0
      %2961 = vmatprep.subr.mxu0 0.0
      %2962 = vmatpush2.msra.mxu0 0.0
      %2963 = vmatprep.subr.mxu0 0.0
      %2964 = vmatpush2.msra.mxu0 0.0
      %2965 = vmatprep.subr.mxu0 0.0
      %2966 = vmatpush2.msra.mxu0 0.0
      %2967 = vmatprep.subr.mxu0 0.0
      %2968 = vmatpush2.msra.mxu0 0.0
      %2969 = vmatprep.subr.mxu0 0.0
      %2970 = vmatpush2.msra.mxu0 0.0
      %2971 = vmatprep.subr.mxu0 0.0
      %2972 = vmatpush2.msra.mxu0 0.0
      %2973 = vmatprep.subr.mxu0 0.0
      %2974 = vmatpush2.msra.mxu0 0.0
      %2975 = vmatprep.subr.mxu0 0.0
      %2976 = vmatpush2.msra.mxu0 0.0
      %2977 = vmatprep.subr.mxu0 0.0
      %2978 = vmatpush2.msra.mxu0 0.0
      %2979 = vmatprep.subr.mxu0 0.0
      %2980 = vmatpush2.msra.mxu0 0.0
      %2981 = vmatprep.subr.mxu0 0.0
      %2982 = vmatpush2.msra.mxu0 0.0
      %2983 = vmatprep.subr.mxu0 0.0
      %2984 = vmatpush2.msra.mxu0 0.0
      %2985 = vmatprep.mubr.f32.mxu0 0.0
      %2986 = vmatmul.mubr.f32.gmra.mxu0 %v2848
      %v2987 = vpop.f32.mrf.mxu0
      %v2988 = vadd.f32 0.0, %v2987
      %v2989 = vpop.f32.mrf.mxu0
      %v2990 = vadd.f32 0.0, %v2989
      %2991 = vdwg.mxu0
      %v2996 = vrot.slane %v2917, 4
      %v2997 = vrot.slane %v2919, 4
      %v2998 = vrot.slane %v2988, 4
      %v2999 = vrot.slane %v2990, 4
      %v3004 = vadd.f32 %v2037, %v2996
      %v3005 = vadd.f32 %v2039, %v2997
      %v3006 = vadd.f32 %v2108, %v2998
      %v3007 = vadd.f32 %v2110, %v2999
      %v3008 = vxor.u32 %v3004, 2147483648
      %v3009 = vmul.f32 %v3008, 1.442695
      %v3010 = vpow.pop %v3009
      %v3011 = vadd.f32 %v3010, 1.0
      %v3012 = vrcp.pop %v3011
      %v3013 = vmul.f32 1.0, %v3012
      %v3014 = vxor.u32 %v3005, 2147483648
      %v3015 = vmul.f32 %v3014, 1.442695
      %v3016 = vpow.pop %v3015
      %v3017 = vadd.f32 %v3016, 1.0
      %v3018 = vrcp.pop %v3017
      %v3019 = vmul.f32 1.0, %v3018
      %v3020 = vtanh.pop %v3006
      %v3021 = vxor.u32 %v3007, 2147483648
      %v3022 = vmul.f32 %v3021, 1.442695
      %v3023 = vpow.pop %v3022
      %v3024 = vadd.f32 %v3023, 1.0
      %v3025 = vrcp.pop %v3024
      %v3026 = vmul.f32 1.0, %v3025
      %v3028 = vrot.slane %v2843, 7
      %v3030 = vmul.f32 %v3019, %v3028
      %v3031 = vmul.f32 %v3013, %v3020
      %v3032 = vadd.f32 %v3030, %v3031
      %v3033 = vtanh.pop %v3032
      %v3034 = vmul.f32 %v3026, %v3033
      %3035 = vst [vmem:[#allocation2] sm:$0x10] %v3034
      %v3037 = vrot.slane %v3034, 4
      %3039 = vmatprep.subr.mxu0 %v1945
      %3040 = vmatpush1.msra.mxu0 %v1944
      %3041 = vmatprep.subr.mxu0 %v1941
      %3042 = vmatpush1.msra.mxu0 %v1940
      %3043 = vmatprep.subr.mxu0 %v1937
      %3044 = vmatpush1.msra.mxu0 %v1936
      %3045 = vmatprep.subr.mxu0 %v1933
      %3046 = vmatpush1.msra.mxu0 %v1932
      %3047 = vmatprep.subr.mxu0 %v1929
      %3048 = vmatpush1.msra.mxu0 %v1928
      %3049 = vmatprep.subr.mxu0 %v1925
      %3050 = vmatpush1.msra.mxu0 %v1924
      %3051 = vmatprep.subr.mxu0 %v1921
      %3052 = vmatpush1.msra.mxu0 %v1920
      %3053 = vmatprep.subr.mxu0 %v1917
      %3054 = vmatpush1.msra.mxu0 %v1916
      %3055 = vmatprep.subr.mxu0 %v1913
      %3056 = vmatpush1.msra.mxu0 %v1912
      %3057 = vmatprep.subr.mxu0 %v1909
      %3058 = vmatpush1.msra.mxu0 %v1908
      %3059 = vmatprep.subr.mxu0 %v1905
      %3060 = vmatpush1.msra.mxu0 %v1904
      %3061 = vmatprep.subr.mxu0 %v1901
      %3062 = vmatpush1.msra.mxu0 %v1900
      %3063 = vmatprep.subr.mxu0 %v1897
      %3064 = vmatpush1.msra.mxu0 %v1896
      %3065 = vmatprep.subr.mxu0 %v1893
      %3066 = vmatpush1.msra.mxu0 %v1892
      %3067 = vmatprep.subr.mxu0 %v1889
      %3068 = vmatpush1.msra.mxu0 %v1888
      %3069 = vmatprep.subr.mxu0 %v1885
      %3070 = vmatpush1.msra.mxu0 %v1884
      %3071 = vmatprep.subr.mxu0 0.0
      %3072 = vmatpush2.msra.mxu0 0.0
      %3073 = vmatprep.subr.mxu0 0.0
      %3074 = vmatpush2.msra.mxu0 0.0
      %3075 = vmatprep.subr.mxu0 0.0
      %3076 = vmatpush2.msra.mxu0 0.0
      %3077 = vmatprep.subr.mxu0 0.0
      %3078 = vmatpush2.msra.mxu0 0.0
      %3079 = vmatprep.subr.mxu0 0.0
      %3080 = vmatpush2.msra.mxu0 0.0
      %3081 = vmatprep.subr.mxu0 0.0
      %3082 = vmatpush2.msra.mxu0 0.0
      %3083 = vmatprep.subr.mxu0 0.0
      %3084 = vmatpush2.msra.mxu0 0.0
      %3085 = vmatprep.subr.mxu0 0.0
      %3086 = vmatpush2.msra.mxu0 0.0
      %3087 = vmatprep.subr.mxu0 0.0
      %3088 = vmatpush2.msra.mxu0 0.0
      %3089 = vmatprep.subr.mxu0 0.0
      %3090 = vmatpush2.msra.mxu0 0.0
      %3091 = vmatprep.subr.mxu0 0.0
      %3092 = vmatpush2.msra.mxu0 0.0
      %3093 = vmatprep.subr.mxu0 0.0
      %3094 = vmatpush2.msra.mxu0 0.0
      %3095 = vmatprep.subr.mxu0 0.0
      %3096 = vmatpush2.msra.mxu0 0.0
      %3097 = vmatprep.subr.mxu0 0.0
      %3098 = vmatpush2.msra.mxu0 0.0
      %3099 = vmatprep.subr.mxu0 0.0
      %3100 = vmatpush2.msra.mxu0 0.0
      %3101 = vmatprep.subr.mxu0 0.0
      %3102 = vmatpush2.msra.mxu0 0.0
      %3103 = vmatprep.mubr.f32.mxu0 0.0
      %3104 = vmatmul.mubr.f32.gmra.mxu0 %v3037
      %v3105 = vpop.f32.mrf.mxu0
      %v3106 = vadd.f32 0.0, %v3105
      %v3107 = vpop.f32.mrf.mxu0
      %v3108 = vadd.f32 0.0, %v3107
      %3109 = vdwg.mxu0
      %3110 = vmatprep.subr.mxu0 %v1947
      %3111 = vmatpush1.msra.mxu0 %v1946
      %3112 = vmatprep.subr.mxu0 %v1943
      %3113 = vmatpush1.msra.mxu0 %v1942
      %3114 = vmatprep.subr.mxu0 %v1939
      %3115 = vmatpush1.msra.mxu0 %v1938
      %3116 = vmatprep.subr.mxu0 %v1935
      %3117 = vmatpush1.msra.mxu0 %v1934
      %3118 = vmatprep.subr.mxu0 %v1931
      %3119 = vmatpush1.msra.mxu0 %v1930
      %3120 = vmatprep.subr.mxu0 %v1927
      %3121 = vmatpush1.msra.mxu0 %v1926
      %3122 = vmatprep.subr.mxu0 %v1923
      %3123 = vmatpush1.msra.mxu0 %v1922
      %3124 = vmatprep.subr.mxu0 %v1919
      %3125 = vmatpush1.msra.mxu0 %v1918
      %3126 = vmatprep.subr.mxu0 %v1915
      %3127 = vmatpush1.msra.mxu0 %v1914
      %3128 = vmatprep.subr.mxu0 %v1911
      %3129 = vmatpush1.msra.mxu0 %v1910
      %3130 = vmatprep.subr.mxu0 %v1907
      %3131 = vmatpush1.msra.mxu0 %v1906
      %3132 = vmatprep.subr.mxu0 %v1903
      %3133 = vmatpush1.msra.mxu0 %v1902
      %3134 = vmatprep.subr.mxu0 %v1899
      %3135 = vmatpush1.msra.mxu0 %v1898
      %3136 = vmatprep.subr.mxu0 %v1895
      %3137 = vmatpush1.msra.mxu0 %v1894
      %3138 = vmatprep.subr.mxu0 %v1891
      %3139 = vmatpush1.msra.mxu0 %v1890
      %3140 = vmatprep.subr.mxu0 %v1887
      %3141 = vmatpush1.msra.mxu0 %v1886
      %3142 = vmatprep.subr.mxu0 0.0
      %3143 = vmatpush2.msra.mxu0 0.0
      %3144 = vmatprep.subr.mxu0 0.0
      %3145 = vmatpush2.msra.mxu0 0.0
      %3146 = vmatprep.subr.mxu0 0.0
      %3147 = vmatpush2.msra.mxu0 0.0
      %3148 = vmatprep.subr.mxu0 0.0
      %3149 = vmatpush2.msra.mxu0 0.0
      %3150 = vmatprep.subr.mxu0 0.0
      %3151 = vmatpush2.msra.mxu0 0.0
      %3152 = vmatprep.subr.mxu0 0.0
      %3153 = vmatpush2.msra.mxu0 0.0
      %3154 = vmatprep.subr.mxu0 0.0
      %3155 = vmatpush2.msra.mxu0 0.0
      %3156 = vmatprep.subr.mxu0 0.0
      %3157 = vmatpush2.msra.mxu0 0.0
      %3158 = vmatprep.subr.mxu0 0.0
      %3159 = vmatpush2.msra.mxu0 0.0
      %3160 = vmatprep.subr.mxu0 0.0
      %3161 = vmatpush2.msra.mxu0 0.0
      %3162 = vmatprep.subr.mxu0 0.0
      %3163 = vmatpush2.msra.mxu0 0.0
      %3164 = vmatprep.subr.mxu0 0.0
      %3165 = vmatpush2.msra.mxu0 0.0
      %3166 = vmatprep.subr.mxu0 0.0
      %3167 = vmatpush2.msra.mxu0 0.0
      %3168 = vmatprep.subr.mxu0 0.0
      %3169 = vmatpush2.msra.mxu0 0.0
      %3170 = vmatprep.subr.mxu0 0.0
      %3171 = vmatpush2.msra.mxu0 0.0
      %3172 = vmatprep.subr.mxu0 0.0
      %3173 = vmatpush2.msra.mxu0 0.0
      %3174 = vmatprep.mubr.f32.mxu0 0.0
      %3175 = vmatmul.mubr.f32.gmra.mxu0 %v3037
      %v3176 = vpop.f32.mrf.mxu0
      %v3177 = vadd.f32 0.0, %v3176
      %v3178 = vpop.f32.mrf.mxu0
      %v3179 = vadd.f32 0.0, %v3178
      %3180 = vdwg.mxu0
      %v3185 = vrot.slane %v3106, 3
      %v3186 = vrot.slane %v3108, 3
      %v3187 = vrot.slane %v3177, 3
      %v3188 = vrot.slane %v3179, 3
      %v3193 = vadd.f32 %v2037, %v3185
      %v3194 = vadd.f32 %v2039, %v3186
      %v3195 = vadd.f32 %v2108, %v3187
      %v3196 = vadd.f32 %v2110, %v3188
      %v3197 = vxor.u32 %v3193, 2147483648
      %v3198 = vmul.f32 %v3197, 1.442695
      %v3199 = vpow.pop %v3198
      %v3200 = vadd.f32 %v3199, 1.0
      %v3201 = vrcp.pop %v3200
      %v3202 = vmul.f32 1.0, %v3201
      %v3203 = vxor.u32 %v3194, 2147483648
      %v3204 = vmul.f32 %v3203, 1.442695
      %v3205 = vpow.pop %v3204
      %v3206 = vadd.f32 %v3205, 1.0
      %v3207 = vrcp.pop %v3206
      %v3208 = vmul.f32 1.0, %v3207
      %v3209 = vtanh.pop %v3195
      %v3210 = vxor.u32 %v3196, 2147483648
      %v3211 = vmul.f32 %v3210, 1.442695
      %v3212 = vpow.pop %v3211
      %v3213 = vadd.f32 %v3212, 1.0
      %v3214 = vrcp.pop %v3213
      %v3215 = vmul.f32 1.0, %v3214
      %v3217 = vrot.slane %v3032, 7
      %v3219 = vmul.f32 %v3208, %v3217
      %v3220 = vmul.f32 %v3202, %v3209
      %v3221 = vadd.f32 %v3219, %v3220
      %v3222 = vtanh.pop %v3221
      %v3223 = vmul.f32 %v3215, %v3222
      %3224 = vst [vmem:[#allocation2] sm:$0x20] %v3223
      %v3226 = vrot.slane %v3223, 5
      %3228 = vmatprep.subr.mxu0 %v1945
      %3229 = vmatpush1.msra.mxu0 %v1944
      %3230 = vmatprep.subr.mxu0 %v1941
      %3231 = vmatpush1.msra.mxu0 %v1940
      %3232 = vmatprep.subr.mxu0 %v1937
      %3233 = vmatpush1.msra.mxu0 %v1936
      %3234 = vmatprep.subr.mxu0 %v1933
      %3235 = vmatpush1.msra.mxu0 %v1932
      %3236 = vmatprep.subr.mxu0 %v1929
      %3237 = vmatpush1.msra.mxu0 %v1928
      %3238 = vmatprep.subr.mxu0 %v1925
      %3239 = vmatpush1.msra.mxu0 %v1924
      %3240 = vmatprep.subr.mxu0 %v1921
      %3241 = vmatpush1.msra.mxu0 %v1920
      %3242 = vmatprep.subr.mxu0 %v1917
      %3243 = vmatpush1.msra.mxu0 %v1916
      %3244 = vmatprep.subr.mxu0 %v1913
      %3245 = vmatpush1.msra.mxu0 %v1912
      %3246 = vmatprep.subr.mxu0 %v1909
      %3247 = vmatpush1.msra.mxu0 %v1908
      %3248 = vmatprep.subr.mxu0 %v1905
      %3249 = vmatpush1.msra.mxu0 %v1904
      %3250 = vmatprep.subr.mxu0 %v1901
      %3251 = vmatpush1.msra.mxu0 %v1900
      %3252 = vmatprep.subr.mxu0 %v1897
      %3253 = vmatpush1.msra.mxu0 %v1896
      %3254 = vmatprep.subr.mxu0 %v1893
      %3255 = vmatpush1.msra.mxu0 %v1892
      %3256 = vmatprep.subr.mxu0 %v1889
      %3257 = vmatpush1.msra.mxu0 %v1888
      %3258 = vmatprep.subr.mxu0 %v1885
      %3259 = vmatpush1.msra.mxu0 %v1884
      %3260 = vmatprep.subr.mxu0 0.0
      %3261 = vmatpush2.msra.mxu0 0.0
      %3262 = vmatprep.subr.mxu0 0.0
      %3263 = vmatpush2.msra.mxu0 0.0
      %3264 = vmatprep.subr.mxu0 0.0
      %3265 = vmatpush2.msra.mxu0 0.0
      %3266 = vmatprep.subr.mxu0 0.0
      %3267 = vmatpush2.msra.mxu0 0.0
      %3268 = vmatprep.subr.mxu0 0.0
      %3269 = vmatpush2.msra.mxu0 0.0
      %3270 = vmatprep.subr.mxu0 0.0
      %3271 = vmatpush2.msra.mxu0 0.0
      %3272 = vmatprep.subr.mxu0 0.0
      %3273 = vmatpush2.msra.mxu0 0.0
      %3274 = vmatprep.subr.mxu0 0.0
      %3275 = vmatpush2.msra.mxu0 0.0
      %3276 = vmatprep.subr.mxu0 0.0
      %3277 = vmatpush2.msra.mxu0 0.0
      %3278 = vmatprep.subr.mxu0 0.0
      %3279 = vmatpush2.msra.mxu0 0.0
      %3280 = vmatprep.subr.mxu0 0.0
      %3281 = vmatpush2.msra.mxu0 0.0
      %3282 = vmatprep.subr.mxu0 0.0
      %3283 = vmatpush2.msra.mxu0 0.0
      %3284 = vmatprep.subr.mxu0 0.0
      %3285 = vmatpush2.msra.mxu0 0.0
      %3286 = vmatprep.subr.mxu0 0.0
      %3287 = vmatpush2.msra.mxu0 0.0
      %3288 = vmatprep.subr.mxu0 0.0
      %3289 = vmatpush2.msra.mxu0 0.0
      %3290 = vmatprep.subr.mxu0 0.0
      %3291 = vmatpush2.msra.mxu0 0.0
      %3292 = vmatprep.mubr.f32.mxu0 0.0
      %3293 = vmatmul.mubr.f32.gmra.mxu0 %v3226
      %v3294 = vpop.f32.mrf.mxu0
      %v3295 = vadd.f32 0.0, %v3294
      %v3296 = vpop.f32.mrf.mxu0
      %v3297 = vadd.f32 0.0, %v3296
      %3298 = vdwg.mxu0
      %3299 = vmatprep.subr.mxu0 %v1947
      %3300 = vmatpush1.msra.mxu0 %v1946
      %3301 = vmatprep.subr.mxu0 %v1943
      %3302 = vmatpush1.msra.mxu0 %v1942
      %3303 = vmatprep.subr.mxu0 %v1939
      %3304 = vmatpush1.msra.mxu0 %v1938
      %3305 = vmatprep.subr.mxu0 %v1935
      %3306 = vmatpush1.msra.mxu0 %v1934
      %3307 = vmatprep.subr.mxu0 %v1931
      %3308 = vmatpush1.msra.mxu0 %v1930
      %3309 = vmatprep.subr.mxu0 %v1927
      %3310 = vmatpush1.msra.mxu0 %v1926
      %3311 = vmatprep.subr.mxu0 %v1923
      %3312 = vmatpush1.msra.mxu0 %v1922
      %3313 = vmatprep.subr.mxu0 %v1919
      %3314 = vmatpush1.msra.mxu0 %v1918
      %3315 = vmatprep.subr.mxu0 %v1915
      %3316 = vmatpush1.msra.mxu0 %v1914
      %3317 = vmatprep.subr.mxu0 %v1911
      %3318 = vmatpush1.msra.mxu0 %v1910
      %3319 = vmatprep.subr.mxu0 %v1907
      %3320 = vmatpush1.msra.mxu0 %v1906
      %3321 = vmatprep.subr.mxu0 %v1903
      %3322 = vmatpush1.msra.mxu0 %v1902
      %3323 = vmatprep.subr.mxu0 %v1899
      %3324 = vmatpush1.msra.mxu0 %v1898
      %3325 = vmatprep.subr.mxu0 %v1895
      %3326 = vmatpush1.msra.mxu0 %v1894
      %3327 = vmatprep.subr.mxu0 %v1891
      %3328 = vmatpush1.msra.mxu0 %v1890
      %3329 = vmatprep.subr.mxu0 %v1887
      %3330 = vmatpush1.msra.mxu0 %v1886
      %3331 = vmatprep.subr.mxu0 0.0
      %3332 = vmatpush2.msra.mxu0 0.0
      %3333 = vmatprep.subr.mxu0 0.0
      %3334 = vmatpush2.msra.mxu0 0.0
      %3335 = vmatprep.subr.mxu0 0.0
      %3336 = vmatpush2.msra.mxu0 0.0
      %3337 = vmatprep.subr.mxu0 0.0
      %3338 = vmatpush2.msra.mxu0 0.0
      %3339 = vmatprep.subr.mxu0 0.0
      %3340 = vmatpush2.msra.mxu0 0.0
      %3341 = vmatprep.subr.mxu0 0.0
      %3342 = vmatpush2.msra.mxu0 0.0
      %3343 = vmatprep.subr.mxu0 0.0
      %3344 = vmatpush2.msra.mxu0 0.0
      %3345 = vmatprep.subr.mxu0 0.0
      %3346 = vmatpush2.msra.mxu0 0.0
      %3347 = vmatprep.subr.mxu0 0.0
      %3348 = vmatpush2.msra.mxu0 0.0
      %3349 = vmatprep.subr.mxu0 0.0
      %3350 = vmatpush2.msra.mxu0 0.0
      %3351 = vmatprep.subr.mxu0 0.0
      %3352 = vmatpush2.msra.mxu0 0.0
      %3353 = vmatprep.subr.mxu0 0.0
      %3354 = vmatpush2.msra.mxu0 0.0
      %3355 = vmatprep.subr.mxu0 0.0
      %3356 = vmatpush2.msra.mxu0 0.0
      %3357 = vmatprep.subr.mxu0 0.0
      %3358 = vmatpush2.msra.mxu0 0.0
      %3359 = vmatprep.subr.mxu0 0.0
      %3360 = vmatpush2.msra.mxu0 0.0
      %3361 = vmatprep.subr.mxu0 0.0
      %3362 = vmatpush2.msra.mxu0 0.0
      %3363 = vmatprep.mubr.f32.mxu0 0.0
      %3364 = vmatmul.mubr.f32.gmra.mxu0 %v3226
      %v3365 = vpop.f32.mrf.mxu0
      %v3366 = vadd.f32 0.0, %v3365
      %v3367 = vpop.f32.mrf.mxu0
      %v3368 = vadd.f32 0.0, %v3367
      %3369 = vdwg.mxu0
      %v3374 = vrot.slane %v3295, 2
      %v3375 = vrot.slane %v3297, 2
      %v3376 = vrot.slane %v3366, 2
      %v3377 = vrot.slane %v3368, 2
      %v3382 = vadd.f32 %v2037, %v3374
      %v3383 = vadd.f32 %v2039, %v3375
      %v3384 = vadd.f32 %v2108, %v3376
      %v3385 = vadd.f32 %v2110, %v3377
      %v3386 = vxor.u32 %v3382, 2147483648
      %v3387 = vmul.f32 %v3386, 1.442695
      %v3388 = vpow.pop %v3387
      %v3389 = vadd.f32 %v3388, 1.0
      %v3390 = vrcp.pop %v3389
      %v3391 = vmul.f32 1.0, %v3390
      %v3392 = vxor.u32 %v3383, 2147483648
      %v3393 = vmul.f32 %v3392, 1.442695
      %v3394 = vpow.pop %v3393
      %v3395 = vadd.f32 %v3394, 1.0
      %v3396 = vrcp.pop %v3395
      %v3397 = vmul.f32 1.0, %v3396
      %v3398 = vtanh.pop %v3384
      %v3399 = vxor.u32 %v3385, 2147483648
      %v3400 = vmul.f32 %v3399, 1.442695
      %v3401 = vpow.pop %v3400
      %v3402 = vadd.f32 %v3401, 1.0
      %v3403 = vrcp.pop %v3402
      %v3404 = vmul.f32 1.0, %v3403
      %v3406 = vrot.slane %v3221, 7
      %v3408 = vmul.f32 %v3397, %v3406
      %v3409 = vmul.f32 %v3391, %v3398
      %v3410 = vadd.f32 %v3408, %v3409
      %v3411 = vtanh.pop %v3410
      %v3412 = vmul.f32 %v3404, %v3411
      %3413 = vst [vmem:[#allocation2] sm:$0x40] %v3412
      %v3415 = vrot.slane %v3412, 6
      %3417 = vmatprep.subr.mxu0 %v1945
      %3418 = vmatpush1.msra.mxu0 %v1944
      %3419 = vmatprep.subr.mxu0 %v1941
      %3420 = vmatpush1.msra.mxu0 %v1940
      %3421 = vmatprep.subr.mxu0 %v1937
      %3422 = vmatpush1.msra.mxu0 %v1936
      %3423 = vmatprep.subr.mxu0 %v1933
      %3424 = vmatpush1.msra.mxu0 %v1932
      %3425 = vmatprep.subr.mxu0 %v1929
      %3426 = vmatpush1.msra.mxu0 %v1928
      %3427 = vmatprep.subr.mxu0 %v1925
      %3428 = vmatpush1.msra.mxu0 %v1924
      %3429 = vmatprep.subr.mxu0 %v1921
      %3430 = vmatpush1.msra.mxu0 %v1920
      %3431 = vmatprep.subr.mxu0 %v1917
      %3432 = vmatpush1.msra.mxu0 %v1916
      %3433 = vmatprep.subr.mxu0 %v1913
      %3434 = vmatpush1.msra.mxu0 %v1912
      %3435 = vmatprep.subr.mxu0 %v1909
      %3436 = vmatpush1.msra.mxu0 %v1908
      %3437 = vmatprep.subr.mxu0 %v1905
      %3438 = vmatpush1.msra.mxu0 %v1904
      %3439 = vmatprep.subr.mxu0 %v1901
      %3440 = vmatpush1.msra.mxu0 %v1900
      %3441 = vmatprep.subr.mxu0 %v1897
      %3442 = vmatpush1.msra.mxu0 %v1896
      %3443 = vmatprep.subr.mxu0 %v1893
      %3444 = vmatpush1.msra.mxu0 %v1892
      %3445 = vmatprep.subr.mxu0 %v1889
      %3446 = vmatpush1.msra.mxu0 %v1888
      %3447 = vmatprep.subr.mxu0 %v1885
      %3448 = vmatpush1.msra.mxu0 %v1884
      %3449 = vmatprep.subr.mxu0 0.0
      %3450 = vmatpush2.msra.mxu0 0.0
      %3451 = vmatprep.subr.mxu0 0.0
      %3452 = vmatpush2.msra.mxu0 0.0
      %3453 = vmatprep.subr.mxu0 0.0
      %3454 = vmatpush2.msra.mxu0 0.0
      %3455 = vmatprep.subr.mxu0 0.0
      %3456 = vmatpush2.msra.mxu0 0.0
      %3457 = vmatprep.subr.mxu0 0.0
      %3458 = vmatpush2.msra.mxu0 0.0
      %3459 = vmatprep.subr.mxu0 0.0
      %3460 = vmatpush2.msra.mxu0 0.0
      %3461 = vmatprep.subr.mxu0 0.0
      %3462 = vmatpush2.msra.mxu0 0.0
      %3463 = vmatprep.subr.mxu0 0.0
      %3464 = vmatpush2.msra.mxu0 0.0
      %3465 = vmatprep.subr.mxu0 0.0
      %3466 = vmatpush2.msra.mxu0 0.0
      %3467 = vmatprep.subr.mxu0 0.0
      %3468 = vmatpush2.msra.mxu0 0.0
      %3469 = vmatprep.subr.mxu0 0.0
      %3470 = vmatpush2.msra.mxu0 0.0
      %3471 = vmatprep.subr.mxu0 0.0
      %3472 = vmatpush2.msra.mxu0 0.0
      %3473 = vmatprep.subr.mxu0 0.0
      %3474 = vmatpush2.msra.mxu0 0.0
      %3475 = vmatprep.subr.mxu0 0.0
      %3476 = vmatpush2.msra.mxu0 0.0
      %3477 = vmatprep.subr.mxu0 0.0
      %3478 = vmatpush2.msra.mxu0 0.0
      %3479 = vmatprep.subr.mxu0 0.0
      %3480 = vmatpush2.msra.mxu0 0.0
      %3481 = vmatprep.mubr.f32.mxu0 0.0
      %3482 = vmatmul.mubr.f32.gmra.mxu0 %v3415
      %v3483 = vpop.f32.mrf.mxu0
      %v3484 = vadd.f32 0.0, %v3483
      %v3485 = vpop.f32.mrf.mxu0
      %v3486 = vadd.f32 0.0, %v3485
      %3487 = vdwg.mxu0
      %3488 = vmatprep.subr.mxu0 %v1947
      %3489 = vmatpush1.msra.mxu0 %v1946
      %3490 = vmatprep.subr.mxu0 %v1943
      %3491 = vmatpush1.msra.mxu0 %v1942
      %3492 = vmatprep.subr.mxu0 %v1939
      %3493 = vmatpush1.msra.mxu0 %v1938
      %3494 = vmatprep.subr.mxu0 %v1935
      %3495 = vmatpush1.msra.mxu0 %v1934
      %3496 = vmatprep.subr.mxu0 %v1931
      %3497 = vmatpush1.msra.mxu0 %v1930
      %3498 = vmatprep.subr.mxu0 %v1927
      %3499 = vmatpush1.msra.mxu0 %v1926
      %3500 = vmatprep.subr.mxu0 %v1923
      %3501 = vmatpush1.msra.mxu0 %v1922
      %3502 = vmatprep.subr.mxu0 %v1919
      %3503 = vmatpush1.msra.mxu0 %v1918
      %3504 = vmatprep.subr.mxu0 %v1915
      %3505 = vmatpush1.msra.mxu0 %v1914
      %3506 = vmatprep.subr.mxu0 %v1911
      %3507 = vmatpush1.msra.mxu0 %v1910
      %3508 = vmatprep.subr.mxu0 %v1907
      %3509 = vmatpush1.msra.mxu0 %v1906
      %3510 = vmatprep.subr.mxu0 %v1903
      %3511 = vmatpush1.msra.mxu0 %v1902
      %3512 = vmatprep.subr.mxu0 %v1899
      %3513 = vmatpush1.msra.mxu0 %v1898
      %3514 = vmatprep.subr.mxu0 %v1895
      %3515 = vmatpush1.msra.mxu0 %v1894
      %3516 = vmatprep.subr.mxu0 %v1891
      %3517 = vmatpush1.msra.mxu0 %v1890
      %3518 = vmatprep.subr.mxu0 %v1887
      %3519 = vmatpush1.msra.mxu0 %v1886
      %3520 = vmatprep.subr.mxu0 0.0
      %3521 = vmatpush2.msra.mxu0 0.0
      %3522 = vmatprep.subr.mxu0 0.0
      %3523 = vmatpush2.msra.mxu0 0.0
      %3524 = vmatprep.subr.mxu0 0.0
      %3525 = vmatpush2.msra.mxu0 0.0
      %3526 = vmatprep.subr.mxu0 0.0
      %3527 = vmatpush2.msra.mxu0 0.0
      %3528 = vmatprep.subr.mxu0 0.0
      %3529 = vmatpush2.msra.mxu0 0.0
      %3530 = vmatprep.subr.mxu0 0.0
      %3531 = vmatpush2.msra.mxu0 0.0
      %3532 = vmatprep.subr.mxu0 0.0
      %3533 = vmatpush2.msra.mxu0 0.0
      %3534 = vmatprep.subr.mxu0 0.0
      %3535 = vmatpush2.msra.mxu0 0.0
      %3536 = vmatprep.subr.mxu0 0.0
      %3537 = vmatpush2.msra.mxu0 0.0
      %3538 = vmatprep.subr.mxu0 0.0
      %3539 = vmatpush2.msra.mxu0 0.0
      %3540 = vmatprep.subr.mxu0 0.0
      %3541 = vmatpush2.msra.mxu0 0.0
      %3542 = vmatprep.subr.mxu0 0.0
      %3543 = vmatpush2.msra.mxu0 0.0
      %3544 = vmatprep.subr.mxu0 0.0
      %3545 = vmatpush2.msra.mxu0 0.0
      %3546 = vmatprep.subr.mxu0 0.0
      %3547 = vmatpush2.msra.mxu0 0.0
      %3548 = vmatprep.subr.mxu0 0.0
      %3549 = vmatpush2.msra.mxu0 0.0
      %3550 = vmatprep.subr.mxu0 0.0
      %3551 = vmatpush2.msra.mxu0 0.0
      %3552 = vmatprep.mubr.f32.mxu0 0.0
      %3553 = vmatmul.mubr.f32.gmra.mxu0 %v3415
      %v3554 = vpop.f32.mrf.mxu0
      %v3555 = vadd.f32 0.0, %v3554
      %v3556 = vpop.f32.mrf.mxu0
      %v3557 = vadd.f32 0.0, %v3556
      %3558 = vdwg.mxu0
      %v3563 = vrot.slane %v3484, 1
      %v3564 = vrot.slane %v3486, 1
      %v3565 = vrot.slane %v3555, 1
      %v3566 = vrot.slane %v3557, 1
      %v3571 = vadd.f32 %v2037, %v3563
      %v3572 = vadd.f32 %v2039, %v3564
      %v3573 = vadd.f32 %v2108, %v3565
      %v3574 = vadd.f32 %v2110, %v3566
      %v3575 = vxor.u32 %v3571, 2147483648
      %v3576 = vmul.f32 %v3575, 1.442695
      %v3577 = vpow.pop %v3576
      %v3578 = vadd.f32 %v3577, 1.0
      %v3579 = vrcp.pop %v3578
      %v3580 = vmul.f32 1.0, %v3579
      %v3581 = vxor.u32 %v3572, 2147483648
      %v3582 = vmul.f32 %v3581, 1.442695
      %v3583 = vpow.pop %v3582
      %v3584 = vadd.f32 %v3583, 1.0
      %v3585 = vrcp.pop %v3584
      %v3586 = vmul.f32 1.0, %v3585
      %v3587 = vtanh.pop %v3573
      %v3588 = vxor.u32 %v3574, 2147483648
      %v3589 = vmul.f32 %v3588, 1.442695
      %v3590 = vpow.pop %v3589
      %v3591 = vadd.f32 %v3590, 1.0
      %v3592 = vrcp.pop %v3591
      %v3593 = vmul.f32 1.0, %v3592
      %v3595 = vrot.slane %v3410, 7
      %v3597 = vmul.f32 %v3586, %v3595
      %v3598 = vmul.f32 %v3580, %v3587
      %v3599 = vadd.f32 %v3597, %v3598
      %v3600 = vtanh.pop %v3599
      %v3601 = vmul.f32 %v3593, %v3600
      %3602 = vst [vmem:[#allocation2] sm:$0x80] %v3601
    $region53: #{decoder_rnn_forward.1} parent=1 // pred_fallthru
      _
    %v3603 = vld [vmem:[#allocation2] sm:$0xff]
    %v3604 = vpack.c.bf16 %v3603, %v3603
    %v3605 = vld [vmem:[%s7] sm:$0xf]
    %v3606 = vld [vmem:[%s7 + $0x4] sm:$0xf]
    %v3607 = vld [vmem:[%s7 + $0x8] sm:$0xf]
    %v3608 = vld [vmem:[%s7 + $0xc] sm:$0xf]
    %v3609 = vld [vmem:[%s7 + $0x10] sm:$0xf]
    %v3610 = vld [vmem:[%s7 + $0x14] sm:$0xf]
    %v3611 = vld [vmem:[%s7 + $0x18] sm:$0xf]
    %v3612 = vld [vmem:[%s7 + $0x1c] sm:$0xf]
    %v3613 = vld [vmem:[%s7 + $0x20] sm:$0xf]
    %v3614 = vld [vmem:[%s7 + $0x24] sm:$0xf]
    %v3615 = vld [vmem:[%s7 + $0x28] sm:$0xf]
    %v3616 = vld [vmem:[%s7 + $0x2c] sm:$0xf]
    %v3617 = vld [vmem:[%s7 + $0x30] sm:$0xf]
    %v3618 = vld [vmem:[%s7 + $0x34] sm:$0xf]
    %v3619 = vld [vmem:[%s7 + $0x38] sm:$0xf]
    %v3620 = vld [vmem:[%s7 + $0x3c] sm:$0xf]
    %v3621 = vld [vmem:[%s8] sm:$0x1]
    %v3623 = vlaneseq
    %v3624 = vshrl.u32 %v3623, 7
    %v3625 = vsub.s32 0, %v3624
    %v3626 = vrot.slane %v3621, %v3625
    %v3644 = vunpack.c.l.b16 %v3605
    %v3645 = vunpack.c.l.b16 %v3606
    %v3646 = vunpack.c.l.b16 %v3607
    %v3647 = vunpack.c.l.b16 %v3608
    %v3648 = vunpack.c.l.b16 %v3609
    %v3649 = vunpack.c.l.b16 %v3610
    %v3650 = vunpack.c.l.b16 %v3611
    %v3651 = vunpack.c.l.b16 %v3612
    %v3652 = vunpack.c.l.b16 %v3613
    %v3653 = vunpack.c.l.b16 %v3614
    %v3654 = vunpack.c.l.b16 %v3615
    %v3655 = vunpack.c.l.b16 %v3616
    %v3656 = vunpack.c.l.b16 %v3617
    %v3657 = vunpack.c.l.b16 %v3618
    %v3658 = vunpack.c.l.b16 %v3619
    %v3659 = vunpack.c.l.b16 %v3620
    %v3660 = vpack.c.b16 %v3645, %v3644
    %v3661 = vpack.c.b16 %v3647, %v3646
    %v3662 = vpack.c.b16 %v3649, %v3648
    %v3663 = vpack.c.b16 %v3651, %v3650
    %v3664 = vpack.c.b16 %v3653, %v3652
    %v3665 = vpack.c.b16 %v3655, %v3654
    %v3666 = vpack.c.b16 %v3657, %v3656
    %v3667 = vpack.c.b16 %v3659, %v3658
    %3676 = vmatprep.subr.bf16.mxu0 0
    %3677 = vmatpush1.bf16.msra.mxu0 %v3667
    %3678 = vmatprep.subr.bf16.mxu0 0
    %3679 = vmatpush1.bf16.msra.mxu0 %v3666
    %3680 = vmatprep.subr.bf16.mxu0 0
    %3681 = vmatpush1.bf16.msra.mxu0 %v3665
    %3682 = vmatprep.subr.bf16.mxu0 0
    %3683 = vmatpush1.bf16.msra.mxu0 %v3664
    %3684 = vmatprep.subr.bf16.mxu0 0
    %3685 = vmatpush1.bf16.msra.mxu0 %v3663
    %3686 = vmatprep.subr.bf16.mxu0 0
    %3687 = vmatpush1.bf16.msra.mxu0 %v3662
    %3688 = vmatprep.subr.bf16.mxu0 0
    %3689 = vmatpush1.bf16.msra.mxu0 %v3661
    %3690 = vmatprep.subr.bf16.mxu0 0
    %3691 = vmatpush1.bf16.msra.mxu0 %v3660
    %3692 = vmatprep.subr.bf16.mxu0 0
    %3693 = vmatpush2.bf16.msra.mxu0 0
    %3694 = vmatprep.subr.bf16.mxu0 0
    %3695 = vmatpush2.bf16.msra.mxu0 0
    %3696 = vmatprep.subr.bf16.mxu0 0
    %3697 = vmatpush2.bf16.msra.mxu0 0
    %3698 = vmatprep.subr.bf16.mxu0 0
    %3699 = vmatpush2.bf16.msra.mxu0 0
    %3700 = vmatprep.subr.bf16.mxu0 0
    %3701 = vmatpush2.bf16.msra.mxu0 0
    %3702 = vmatprep.subr.bf16.mxu0 0
    %3703 = vmatpush2.bf16.msra.mxu0 0
    %3704 = vmatprep.subr.bf16.mxu0 0
    %3705 = vmatpush2.bf16.msra.mxu0 0
    %3706 = vmatprep.subr.bf16.mxu0 0
    %3707 = vmatpush2.bf16.msra.mxu0 0
    %3708 = vmatprep.mubr.bf16.mxu0 0
    %3709 = vmatmul.mubr.bf16.gmra.mxu0 %v3604
    %v3710 = vpop.f32.mrf.mxu0
    %v3711 = vadd.f32 %v3626, %v3710
    %v3712 = vpop.f32.mrf.mxu0
    %v3713 = vpop.f32.mrf.mxu0
    %v3714 = vpop.f32.mrf.mxu0
    %3715 = vdwg.mxu0
    %3716 = vst [vmem:[#allocation9] sm:$0xff] %v3711
    // Predicated region
    $region54: #{decoder_rnn_forward.1} parent=1 // pred_check
      _
    $region55: #{decoder_rnn_forward.1} parent=1 // pred_check_branch
      %3718 = sbr.rel (0) target = $region57
    $region56: #{decoder_rnn_forward.1} parent=1 // pred_region
      %s3720 = ssub.s32 128, 128
      %3721 = vsyncadd [#allocation5], %s3720
      %s3723 = sshll.u32 [#allocation9], 4
      %s3724 = int_to_ptr.vmem [resolvable:$true] %s3723
      %3726 = dma.vmem_to_hbm [thread:$0]  %s3724, 128, %s9, [#allocation5]
    $region57: #{decoder_rnn_forward.1} parent=1 // pred_fallthru
      _
    // Predicated region
    $region58: #{decoder_rnn_forward.1} parent=1 // pred_check
      _
    $region59: #{decoder_rnn_forward.1} parent=1 // pred_check_branch
      %3728 = sbr.rel (0) target = $region61
    $region60: #{decoder_rnn_forward.1} parent=1 // pred_region
      %3729 = dma.done [#allocation5], 128
    $region61: #{decoder_rnn_forward.1} parent=1 // pred_fallthru
      _
    %3730 = vsyncpa [#allocation4], 1
    %3731 = vsyncpa [#allocation7], 1
    %3732 = vsyncpa [#allocation5], 1

</llo_original>
